<compile_context>
chip_gen: v7x
topology: tpu7x:2x2x1
jax: 0.10.0
libtpu: 0.0.40
codegen_flags: <defaults>
</compile_context>

<pallas_src>
import functools
import math

import jax
import jax.numpy as jnp
import numpy as np
from jax.experimental import pallas as pl
from jax.experimental.pallas import tpu as pltpu

LANE = 128  # TPU lane width; output channels are zero-padded to this in-kernel.


def _vmem_limit_bytes():
    # v5e/v6e have 128 MiB VMEM per core, v7x has 64 MiB; budget ~half of the
    # running chip's capacity (this kernel only needs ~2 MiB anyway).
    try:
        cap = int(pltpu.get_tpu_info().vmem_capacity_bytes)
    except Exception:  # query unavailable -> assume the smallest (v7x) budget
        cap = 64 * 1024 * 1024
    return max(16 * 1024 * 1024, min(cap // 2, 64 * 1024 * 1024))


def _pad1_hw(a):
    """Zero-pad 1 pixel on each side of the spatial dims: (H,W,C) -> (H+2,W+2,C).

    Built with concatenates so the caller can issue a single full-buffer store
    (instead of 8 masked border-strip stores)."""
    H, W, C = a.shape
    zcol = jnp.zeros((H, 1, C), a.dtype)
    zrow = jnp.zeros((1, W + 2, C), a.dtype)
    mid = jnp.concatenate([zcol, a, zcol], axis=1)
    return jnp.concatenate([zrow, mid, zrow], axis=0)


def _im2col_3x3(pad_ref, H, W, C):
    """(H+2, W+2, C) padded-activation scratch -> (H*W, 9*C) im2col patch.

    3 dx-shifted (sublane-unaligned) loads concatenated on lanes, then 3 free
    leading-dim dy row slices concatenated on lanes, so the whole 3x3 conv is
    a single K = 9*C MXU matmul.  K index = dy*3*C + dx*C + c."""
    cols = jnp.concatenate([pad_ref[:, dx:dx + W, :] for dx in range(3)],
                           axis=-1)                       # (H+2, W, 3*C)
    patch = jnp.concatenate([cols[dy:dy + H] for dy in range(3)],
                            axis=-1)                      # (H, W, 9*C)
    return patch.reshape(H * W, 9 * C)


# ---------------------------------------------------------------------------
# Pallas kernel: one batch element per grid step.
# ---------------------------------------------------------------------------
def _preact_block_kernel(x_ref, s1_ref, b1_ref, w1_ref, s2_ref, b2_ref, w2_ref,
                         *rest, H, W, Cin, Cout, has_shortcut):
    if has_shortcut:
        wsc_ref, out_ref, pad1_ref, pad2_ref = rest
    else:
        out_ref, pad1_ref, pad2_ref = rest

    f32 = jnp.float32
    bf16 = jnp.bfloat16

    x = x_ref[0]                                              # (H, W, Cin) f32

    # --- BN1 (eval-mode affine) + ReLU in f32; one full padded bf16 store ----
    a1 = jnp.maximum(x * s1_ref[...].reshape(1, 1, Cin)
                     + b1_ref[...].reshape(1, 1, Cin), 0.0)
    pad1_ref[...] = _pad1_hw(a1.astype(bf16))

    # --- conv1: 3x3, stride 1, pad 1 -> ONE im2col matmul, K = 9*Cin ---------
    c1 = jnp.dot(_im2col_3x3(pad1_ref, H, W, Cin), w1_ref[...],
                 preferred_element_type=f32)                  # (H*W, Cout) f32

    # --- BN2 + ReLU in f32; one full padded bf16 store ------------------------
    a2 = jnp.maximum(c1 * s2_ref[...] + b2_ref[...], 0.0)     # (H*W, Cout)
    pad2_ref[...] = _pad1_hw(a2.reshape(H, W, Cout).astype(bf16))

    # --- conv2: 3x3, stride 1, pad 1 -> ONE im2col matmul, K = 9*Cout --------
    out = jnp.dot(_im2col_3x3(pad2_ref, H, W, Cout), w2_ref[...],
                  preferred_element_type=f32)                 # (H*W, Cout) f32

    # --- shortcut: 1x1 conv (f32, tiny K) or identity, added in vregs --------
    if has_shortcut:
        out = out + jnp.dot(x.reshape(H * W, Cin), wsc_ref[...],
                            preferred_element_type=f32)
    else:
        out = out + x.reshape(H * W, Cin)                     # Cin == Cout here

    # --- lane-dense output: zero-pad channels to 128 lanes -> unmasked stores
    #     and a contiguous writeback DMA; the wrapper slices the pad back off.
    out_ref[0] = jnp.concatenate(
        [out, jnp.zeros((H * W, LANE - Cout), f32)], axis=-1).astype(out_ref.dtype)


# ---------------------------------------------------------------------------
# Wrapper: NCHW in / NCHW out, parameter prep in plain JAX (glue).
# ---------------------------------------------------------------------------
def preact_block_forward(x_nchw, params, *, stride=1, eps=1e-5):
    assert stride == 1, "TODO(synk): stride != 1 not implemented in kernel"
    N, Cin, H, W = x_nchw.shape
    Cout = params["conv1_w"].shape[0]
    has_shortcut = ("shortcut_w" in params)
    if not has_shortcut:
        assert Cin == Cout, "identity shortcut requires in_planes == planes"
    assert Cout <= LANE

    x = jnp.transpose(x_nchw, (0, 2, 3, 1)).astype(jnp.float32)   # NHWC

    # BN folded to affine: y = x * scale + bias (kept in f32).
    s1 = (params["bn1_gamma"] / jnp.sqrt(params["bn1_var"] + eps)).reshape(1, Cin)
    b1 = (params["bn1_beta"] - params["bn1_mean"] * s1[0]).reshape(1, Cin)
    s2 = (params["bn2_gamma"] / jnp.sqrt(params["bn2_var"] + eps)).reshape(1, Cout)
    b2 = (params["bn2_beta"] - params["bn2_mean"] * s2[0]).reshape(1, Cout)

    # PyTorch OIHW -> (ky, kx, cin, cout) -> (9*Cin, Cout) bf16, so each conv is
    # one K=9*C matmul whose K index is ky*3*Cin + kx*Cin + cin (matches the
    # in-kernel im2col ordering).
    w1 = jnp.transpose(params["conv1_w"], (2, 3, 1, 0)) \
            .reshape(9 * Cin, Cout).astype(jnp.bfloat16)
    w2 = jnp.transpose(params["conv2_w"], (2, 3, 1, 0)) \
            .reshape(9 * Cout, Cout).astype(jnp.bfloat16)

    in_specs = [
        pl.BlockSpec((1, H, W, Cin), lambda n: (n, 0, 0, 0)),
        pl.BlockSpec((1, Cin), lambda n: (0, 0)),
        pl.BlockSpec((1, Cin), lambda n: (0, 0)),
        pl.BlockSpec((9 * Cin, Cout), lambda n: (0, 0)),
        pl.BlockSpec((1, Cout), lambda n: (0, 0)),
        pl.BlockSpec((1, Cout), lambda n: (0, 0)),
        pl.BlockSpec((9 * Cout, Cout), lambda n: (0, 0)),
    ]
    args = [x, s1, b1, w1, s2, b2, w2]
    if has_shortcut:
        wsc = jnp.transpose(params["shortcut_w"][:, :, 0, 0], (1, 0)) \
                 .astype(jnp.float32)                              # (Cin, Cout) f32
        in_specs.append(pl.BlockSpec((Cin, Cout), lambda n: (0, 0)))
        args.append(wsc)

    kernel = functools.partial(_preact_block_kernel, H=H, W=W, Cin=Cin, Cout=Cout,
                               has_shortcut=has_shortcut)

    out_flat = pl.pallas_call(
        kernel,
        out_shape=jax.ShapeDtypeStruct((N, H * W, LANE), jnp.float32),
        grid=(N,),
        in_specs=in_specs,
        out_specs=pl.BlockSpec((1, H * W, LANE), lambda n: (n, 0, 0)),
        scratch_shapes=[
            pltpu.VMEM((H + 2, W + 2, Cin), jnp.bfloat16),    # padded relu(bn1(x))
            pltpu.VMEM((H + 2, W + 2, Cout), jnp.bfloat16),   # padded relu(bn2(.))
        ],
        compiler_params=pltpu.CompilerParams(
            dimension_semantics=("parallel",),
            vmem_limit_bytes=_vmem_limit_bytes()),
    )(*args)

    out_nhwc = out_flat[:, :, :Cout].reshape(N, H, W, Cout)
    return jnp.transpose(out_nhwc, (0, 3, 1, 2))              # back to NCHW


# ---------------------------------------------------------------------------
# Pure-JAX reference (mirrors the PyTorch forward, eval-mode BN) for checking.
# ---------------------------------------------------------------------------
def _ref_forward(x, params, eps=1e-5):
    def bn(v, g, b, m, var):
        return (v - m[None, :, None, None]) / jnp.sqrt(var[None, :, None, None] + eps) \
               * g[None, :, None, None] + b[None, :, None, None]

    def conv(v, w, pad):
        return jax.lax.conv_general_dilated(
            v, w, window_strides=(1, 1), padding=((pad, pad), (pad, pad)),
            dimension_numbers=("NCHW", "OIHW", "NCHW"))

    out = jax.nn.relu(bn(x, params["bn1_gamma"], params["bn1_beta"],
                         params["bn1_mean"], params["bn1_var"]))
    shortcut = conv(x, params["shortcut_w"], 0) if "shortcut_w" in params else x
    out = conv(out, params["conv1_w"], 1)
    out = conv(jax.nn.relu(bn(out, params["bn2_gamma"], params["bn2_beta"],
                              params["bn2_mean"], params["bn2_var"])), params["conv2_w"], 1)
    return out + shortcut


def _init_params(key, in_planes, planes, stride=1):
    ks = jax.random.split(key, 12)
    p = {
        "bn1_gamma": 1.0 + 0.1 * jax.random.normal(ks[0], (in_planes,), jnp.float32),
        "bn1_beta": 0.1 * jax.random.normal(ks[1], (in_planes,), jnp.float32),
        "bn1_mean": 0.1 * jax.random.normal(ks[2], (in_planes,), jnp.float32),
        "bn1_var": jax.random.uniform(ks[3], (in_planes,), jnp.float32, 0.5, 1.5),
        "conv1_w": jax.random.normal(ks[4], (planes, in_planes, 3, 3), jnp.float32)
                   / math.sqrt(in_planes * 9),
        "bn2_gamma": 1.0 + 0.1 * jax.random.normal(ks[5], (planes,), jnp.float32),
        "bn2_beta": 0.1 * jax.random.normal(ks[6], (planes,), jnp.float32),
        "bn2_mean": 0.1 * jax.random.normal(ks[7], (planes,), jnp.float32),
        "bn2_var": jax.random.uniform(ks[8], (planes,), jnp.float32, 0.5, 1.5),
        "conv2_w": jax.random.normal(ks[9], (planes, planes, 3, 3), jnp.float32)
                   / math.sqrt(planes * 9),
    }
    if stride != 1 or in_planes != planes:
        p["shortcut_w"] = jax.random.normal(ks[10], (planes, in_planes, 1, 1), jnp.float32) \
                          / math.sqrt(in_planes)
    return p


if __name__ == "__main__":
    key = jax.random.PRNGKey(0)
    kx, kp1, kp2 = jax.random.split(key, 3)

    # bf16 MXU operands / bf16 activation scratches (f32 accumulate) -> relaxed
    # tolerance vs. the f32 reference.
    RTOL = ATOL = 3e-2

    # Case 1: in_planes != planes -> 1x1-conv shortcut path exercised.
    x = jax.random.normal(kx, (2, 4, 16, 16), jnp.float32)  # NCHW like PyTorch
    params = _init_params(kp1, in_planes=4, planes=8, stride=1)
    out = preact_block_forward(x, params)
    jax.block_until_ready(out)
    ref = _ref_forward(x, params)
    np.testing.assert_allclose(np.asarray(out), np.asarray(ref), rtol=RTOL, atol=ATOL)

    # Case 2: in_planes == planes, stride=1 -> identity shortcut path.
    params_id = _init_params(kp2, in_planes=4, planes=4, stride=1)
    out_id = preact_block_forward(x, params_id)
    jax.block_until_ready(out_id)
    ref_id = _ref_forward(x, params_id)
    np.testing.assert_allclose(np.asarray(out_id), np.asarray(ref_id), rtol=RTOL, atol=ATOL)

    print("KERNEL_OK")
</pallas_src>

<mosaic_0001>
module attributes {stable_mosaic.version = 11 : i64} {
  func.func @_preact_block_kernel(%arg0: i32, %arg1: memref<1x16x16x4xf32, #tpu.memory_space<vmem>>, %arg2: memref<1x4xf32, #tpu.memory_space<vmem>>, %arg3: memref<1x4xf32, #tpu.memory_space<vmem>>, %arg4: memref<36x8xbf16, #tpu.memory_space<vmem>>, %arg5: memref<1x8xf32, #tpu.memory_space<vmem>>, %arg6: memref<1x8xf32, #tpu.memory_space<vmem>>, %arg7: memref<72x8xbf16, #tpu.memory_space<vmem>>, %arg8: memref<4x8xf32, #tpu.memory_space<vmem>>, %arg9: memref<1x256x128xf32, #tpu.memory_space<vmem>>, %arg10: memref<18x18x4xbf16, #tpu.memory_space<vmem>>, %arg11: memref<18x18x8xbf16, #tpu.memory_space<vmem>>) attributes {dimension_semantics = [#tpu.dimension_semantics<parallel>], iteration_bounds = array<i64: 2>, scalar_prefetch = 0 : i64, scratch_operands = 2 : i64, tpu.core_type = #tpu.core_type<tc>, window_params = [{transform_indices = @transform_0, window_bounds = array<i64: 1, 16, 16, 4>}, {pipeline_mode = #tpu.pipeline_mode<synchronous>, transform_indices = @transform_1, window_bounds = array<i64: 1, 4>}, {pipeline_mode = #tpu.pipeline_mode<synchronous>, transform_indices = @transform_2, window_bounds = array<i64: 1, 4>}, {pipeline_mode = #tpu.pipeline_mode<synchronous>, transform_indices = @transform_3, window_bounds = array<i64: 36, 8>}, {pipeline_mode = #tpu.pipeline_mode<synchronous>, transform_indices = @transform_4, window_bounds = array<i64: 1, 8>}, {pipeline_mode = #tpu.pipeline_mode<synchronous>, transform_indices = @transform_5, window_bounds = array<i64: 1, 8>}, {pipeline_mode = #tpu.pipeline_mode<synchronous>, transform_indices = @transform_6, window_bounds = array<i64: 72, 8>}, {pipeline_mode = #tpu.pipeline_mode<synchronous>, transform_indices = @transform_7, window_bounds = array<i64: 4, 8>}, {transform_indices = @transform_8, window_bounds = array<i64: 1, 256, 128>}]} {
    %c0 = arith.constant 0 : index
    %c0_0 = arith.constant 0 : index
    %c0_1 = arith.constant 0 : index
    %c0_2 = arith.constant 0 : index
    %0 = vector.load %arg1[%c0, %c0_0, %c0_1, %c0_2] : memref<1x16x16x4xf32, #tpu.memory_space<vmem>>, vector<1x16x16x4xf32>
    %1 = vector.shape_cast %0 : vector<1x16x16x4xf32> to vector<16x16x4xf32>
    %c0_3 = arith.constant 0 : index
    %c0_4 = arith.constant 0 : index
    %2 = vector.load %arg2[%c0_3, %c0_4] : memref<1x4xf32, #tpu.memory_space<vmem>>, vector<1x4xf32>
    %3 = vector.shape_cast %2 : vector<1x4xf32> to vector<1x1x4xf32>
    %4 = vector.broadcast %3 : vector<1x1x4xf32> to vector<16x16x4xf32>
    %5 = arith.mulf %1, %4 : vector<16x16x4xf32>
    %c0_5 = arith.constant 0 : index
    %c0_6 = arith.constant 0 : index
    %6 = vector.load %arg3[%c0_5, %c0_6] : memref<1x4xf32, #tpu.memory_space<vmem>>, vector<1x4xf32>
    %7 = vector.shape_cast %6 : vector<1x4xf32> to vector<1x1x4xf32>
    %8 = vector.broadcast %7 : vector<1x1x4xf32> to vector<16x16x4xf32>
    %9 = arith.addf %5, %8 : vector<16x16x4xf32>
    %cst = arith.constant 0.000000e+00 : f32
    %10 = vector.broadcast %cst : f32 to vector<16x16x4xf32>
    %11 = arith.maximumf %9, %10 : vector<16x16x4xf32>
    %12 = arith.truncf %11 : vector<16x16x4xf32> to vector<16x16x4xbf16>
    %cst_7 = arith.constant 0.000000e+00 : bf16
    %13 = vector.broadcast %cst_7 : bf16 to vector<16x1x4xbf16>
    %cst_8 = arith.constant 0.000000e+00 : bf16
    %14 = vector.broadcast %cst_8 : bf16 to vector<1x18x4xbf16>
    %15 = tpu.concatenate %13, %12, %13 in 1 : vector<16x1x4xbf16>, vector<16x16x4xbf16>, vector<16x1x4xbf16> -> vector<16x18x4xbf16>
    %16 = tpu.concatenate %14, %15, %14 in 0 : vector<1x18x4xbf16>, vector<16x18x4xbf16>, vector<1x18x4xbf16> -> vector<18x18x4xbf16>
    %c0_9 = arith.constant 0 : index
    %c0_10 = arith.constant 0 : index
    %c0_11 = arith.constant 0 : index
    %17 = vector.load %arg10[%c0_9, %c0_10, %c0_11] : memref<18x18x4xbf16, #tpu.memory_space<vmem>>, vector<18x18x4xbf16>
    tpu.vector_store %arg10[%c0_9, %c0_10, %c0_11], %16 {strides = array<i32>} : memref<18x18x4xbf16, #tpu.memory_space<vmem>>, vector<18x18x4xbf16>,
    %c0_12 = arith.constant 0 : index
    %c0_13 = arith.constant 0 : index
    %c0_14 = arith.constant 0 : index
    %18 = vector.load %arg10[%c0_12, %c0_13, %c0_14] : memref<18x18x4xbf16, #tpu.memory_space<vmem>>, vector<18x16x4xbf16>
    %c0_15 = arith.constant 0 : index
    %c1 = arith.constant 1 : index
    %c0_16 = arith.constant 0 : index
    %19 = vector.load %arg10[%c0_15, %c1, %c0_16] : memref<18x18x4xbf16, #tpu.memory_space<vmem>>, vector<18x16x4xbf16>
    %c0_17 = arith.constant 0 : index
    %c2 = arith.constant 2 : index
    %c0_18 = arith.constant 0 : index
    %20 = vector.load %arg10[%c0_17, %c2, %c0_18] : memref<18x18x4xbf16, #tpu.memory_space<vmem>>, vector<18x16x4xbf16>
    %21 = tpu.concatenate %18, %19, %20 in 2 : vector<18x16x4xbf16>, vector<18x16x4xbf16>, vector<18x16x4xbf16> -> vector<18x16x12xbf16>
    %22 = vector.extract_strided_slice %21 {offsets = [0, 0, 0], sizes = [16, 16, 12], strides = [1, 1, 1]} : vector<18x16x12xbf16> to vector<16x16x12xbf16>
    %23 = vector.extract_strided_slice %21 {offsets = [1, 0, 0], sizes = [16, 16, 12], strides = [1, 1, 1]} : vector<18x16x12xbf16> to vector<16x16x12xbf16>
    %24 = vector.extract_strided_slice %21 {offsets = [2, 0, 0], sizes = [16, 16, 12], strides = [1, 1, 1]} : vector<18x16x12xbf16> to vector<16x16x12xbf16>
    %25 = tpu.concatenate %22, %23, %24 in 2 : vector<16x16x12xbf16>, vector<16x16x12xbf16>, vector<16x16x12xbf16> -> vector<16x16x36xbf16>
    %26 = vector.shape_cast %25 : vector<16x16x36xbf16> to vector<256x36xbf16>
    %c0_19 = arith.constant 0 : index
    %c0_20 = arith.constant 0 : index
    %27 = vector.load %arg4[%c0_19, %c0_20] : memref<36x8xbf16, #tpu.memory_space<vmem>>, vector<36x8xbf16>
    %cst_21 = arith.constant dense<0.000000e+00> : vector<256x8xf32>
    %28 = tpu.matmul %26, %27, %cst_21 {dimension_numbers = #tpu.dot_dimension_numbers<[1], [0], [0], [1], [0, 0, 1, 1], [], []>} : vector<256x36xbf16>, vector<36x8xbf16>, vector<256x8xf32> -> vector<256x8xf32>
    %c0_22 = arith.constant 0 : index
    %c0_23 = arith.constant 0 : index
    %29 = vector.load %arg5[%c0_22, %c0_23] : memref<1x8xf32, #tpu.memory_space<vmem>>, vector<1x8xf32>
    %30 = vector.broadcast %29 : vector<1x8xf32> to vector<256x8xf32>
    %31 = arith.mulf %28, %30 : vector<256x8xf32>
    %c0_24 = arith.constant 0 : index
    %c0_25 = arith.constant 0 : index
    %32 = vector.load %arg6[%c0_24, %c0_25] : memref<1x8xf32, #tpu.memory_space<vmem>>, vector<1x8xf32>
    %33 = vector.broadcast %32 : vector<1x8xf32> to vector<256x8xf32>
    %34 = arith.addf %31, %33 : vector<256x8xf32>
    %cst_26 = arith.constant 0.000000e+00 : f32
    %35 = vector.broadcast %cst_26 : f32 to vector<256x8xf32>
    %36 = arith.maximumf %34, %35 : vector<256x8xf32>
    %37 = vector.shape_cast %36 : vector<256x8xf32> to vector<16x16x8xf32>
    %38 = arith.truncf %37 : vector<16x16x8xf32> to vector<16x16x8xbf16>
    %cst_27 = arith.constant 0.000000e+00 : bf16
    %39 = vector.broadcast %cst_27 : bf16 to vector<16x1x8xbf16>
    %cst_28 = arith.constant 0.000000e+00 : bf16
    %40 = vector.broadcast %cst_28 : bf16 to vector<1x18x8xbf16>
    %41 = tpu.concatenate %39, %38, %39 in 1 : vector<16x1x8xbf16>, vector<16x16x8xbf16>, vector<16x1x8xbf16> -> vector<16x18x8xbf16>
    %42 = tpu.concatenate %40, %41, %40 in 0 : vector<1x18x8xbf16>, vector<16x18x8xbf16>, vector<1x18x8xbf16> -> vector<18x18x8xbf16>
    %c0_29 = arith.constant 0 : index
    %c0_30 = arith.constant 0 : index
    %c0_31 = arith.constant 0 : index
    %43 = vector.load %arg11[%c0_29, %c0_30, %c0_31] : memref<18x18x8xbf16, #tpu.memory_space<vmem>>, vector<18x18x8xbf16>
    tpu.vector_store %arg11[%c0_29, %c0_30, %c0_31], %42 {strides = array<i32>} : memref<18x18x8xbf16, #tpu.memory_space<vmem>>, vector<18x18x8xbf16>,
    %c0_32 = arith.constant 0 : index
    %c0_33 = arith.constant 0 : index
    %c0_34 = arith.constant 0 : index
    %44 = vector.load %arg11[%c0_32, %c0_33, %c0_34] : memref<18x18x8xbf16, #tpu.memory_space<vmem>>, vector<18x16x8xbf16>
    %c0_35 = arith.constant 0 : index
    %c1_36 = arith.constant 1 : index
    %c0_37 = arith.constant 0 : index
    %45 = vector.load %arg11[%c0_35, %c1_36, %c0_37] : memref<18x18x8xbf16, #tpu.memory_space<vmem>>, vector<18x16x8xbf16>
    %c0_38 = arith.constant 0 : index
    %c2_39 = arith.constant 2 : index
    %c0_40 = arith.constant 0 : index
    %46 = vector.load %arg11[%c0_38, %c2_39, %c0_40] : memref<18x18x8xbf16, #tpu.memory_space<vmem>>, vector<18x16x8xbf16>
    %47 = tpu.concatenate %44, %45, %46 in 2 : vector<18x16x8xbf16>, vector<18x16x8xbf16>, vector<18x16x8xbf16> -> vector<18x16x24xbf16>
    %48 = vector.extract_strided_slice %47 {offsets = [0, 0, 0], sizes = [16, 16, 24], strides = [1, 1, 1]} : vector<18x16x24xbf16> to vector<16x16x24xbf16>
    %49 = vector.extract_strided_slice %47 {offsets = [1, 0, 0], sizes = [16, 16, 24], strides = [1, 1, 1]} : vector<18x16x24xbf16> to vector<16x16x24xbf16>
    %50 = vector.extract_strided_slice %47 {offsets = [2, 0, 0], sizes = [16, 16, 24], strides = [1, 1, 1]} : vector<18x16x24xbf16> to vector<16x16x24xbf16>
    %51 = tpu.concatenate %48, %49, %50 in 2 : vector<16x16x24xbf16>, vector<16x16x24xbf16>, vector<16x16x24xbf16> -> vector<16x16x72xbf16>
    %52 = vector.shape_cast %51 : vector<16x16x72xbf16> to vector<256x72xbf16>
    %c0_41 = arith.constant 0 : index
    %c0_42 = arith.constant 0 : index
    %53 = vector.load %arg7[%c0_41, %c0_42] : memref<72x8xbf16, #tpu.memory_space<vmem>>, vector<72x8xbf16>
    %cst_43 = arith.constant dense<0.000000e+00> : vector<256x8xf32>
    %54 = tpu.matmul %52, %53, %cst_43 {dimension_numbers = #tpu.dot_dimension_numbers<[1], [0], [0], [1], [0, 0, 1, 1], [], []>} : vector<256x72xbf16>, vector<72x8xbf16>, vector<256x8xf32> -> vector<256x8xf32>
    %55 = vector.shape_cast %1 : vector<16x16x4xf32> to vector<256x4xf32>
    %c0_44 = arith.constant 0 : index
    %c0_45 = arith.constant 0 : index
    %56 = vector.load %arg8[%c0_44, %c0_45] : memref<4x8xf32, #tpu.memory_space<vmem>>, vector<4x8xf32>
    %cst_46 = arith.constant dense<0.000000e+00> : vector<256x8xf32>
    %57 = tpu.matmul %55, %56, %cst_46 {dimension_numbers = #tpu.dot_dimension_numbers<[1], [0], [0], [1], [0, 0, 1, 1], [], []>} : vector<256x4xf32>, vector<4x8xf32>, vector<256x8xf32> -> vector<256x8xf32>
    %58 = arith.addf %54, %57 : vector<256x8xf32>
    %cst_47 = arith.constant 0.000000e+00 : f32
    %59 = vector.broadcast %cst_47 : f32 to vector<256x120xf32>
    %60 = tpu.concatenate %58, %59 in 1 : vector<256x8xf32>, vector<256x120xf32> -> vector<256x128xf32>
    %c0_48 = arith.constant 0 : index
    %c0_49 = arith.constant 0 : index
    %c0_50 = arith.constant 0 : index
    %61 = vector.load %arg9[%c0_48, %c0_49, %c0_50] : memref<1x256x128xf32, #tpu.memory_space<vmem>>, vector<1x256x128xf32>
    %62 = vector.shape_cast %61 : vector<1x256x128xf32> to vector<256x128xf32>
    %63 = vector.shape_cast %60 : vector<256x128xf32> to vector<1x256x128xf32>
    tpu.vector_store %arg9[%c0_48, %c0_49, %c0_50], %63 {strides = array<i32>} : memref<1x256x128xf32, #tpu.memory_space<vmem>>, vector<1x256x128xf32>,
    return
  }
  func.func @transform_0(%arg0: i32) -> (i32, i32, i32, i32) {
    %c0_i32 = arith.constant 0 : i32
    %c0_i32_0 = arith.constant 0 : i32
    %c0_i32_1 = arith.constant 0 : i32
    %c0_i32_2 = arith.constant 0 : i32
    return %arg0, %c0_i32, %c0_i32_0, %c0_i32_1 : i32, i32, i32, i32
  }
  func.func @transform_1(%arg0: i32) -> (i32, i32) {
    %c0_i32 = arith.constant 0 : i32
    %c0_i32_0 = arith.constant 0 : i32
    %c0_i32_1 = arith.constant 0 : i32
    return %c0_i32, %c0_i32_0 : i32, i32
  }
  func.func @transform_2(%arg0: i32) -> (i32, i32) {
    %c0_i32 = arith.constant 0 : i32
    %c0_i32_0 = arith.constant 0 : i32
    %c0_i32_1 = arith.constant 0 : i32
    return %c0_i32, %c0_i32_0 : i32, i32
  }
  func.func @transform_3(%arg0: i32) -> (i32, i32) {
    %c0_i32 = arith.constant 0 : i32
    %c0_i32_0 = arith.constant 0 : i32
    %c0_i32_1 = arith.constant 0 : i32
    return %c0_i32, %c0_i32_0 : i32, i32
  }
  func.func @transform_4(%arg0: i32) -> (i32, i32) {
    %c0_i32 = arith.constant 0 : i32
    %c0_i32_0 = arith.constant 0 : i32
    %c0_i32_1 = arith.constant 0 : i32
    return %c0_i32, %c0_i32_0 : i32, i32
  }
  func.func @transform_5(%arg0: i32) -> (i32, i32) {
    %c0_i32 = arith.constant 0 : i32
    %c0_i32_0 = arith.constant 0 : i32
    %c0_i32_1 = arith.constant 0 : i32
    return %c0_i32, %c0_i32_0 : i32, i32
  }
  func.func @transform_6(%arg0: i32) -> (i32, i32) {
    %c0_i32 = arith.constant 0 : i32
    %c0_i32_0 = arith.constant 0 : i32
    %c0_i32_1 = arith.constant 0 : i32
    return %c0_i32, %c0_i32_0 : i32, i32
  }
  func.func @transform_7(%arg0: i32) -> (i32, i32) {
    %c0_i32 = arith.constant 0 : i32
    %c0_i32_0 = arith.constant 0 : i32
    %c0_i32_1 = arith.constant 0 : i32
    return %c0_i32, %c0_i32_0 : i32, i32
  }
  func.func @transform_8(%arg0: i32) -> (i32, i32, i32) {
    %c0_i32 = arith.constant 0 : i32
    %c0_i32_0 = arith.constant 0 : i32
    %c0_i32_1 = arith.constant 0 : i32
    return %arg0, %c0_i32, %c0_i32_0 : i32, i32, i32
  }
}

</mosaic_0001>

<llo_original>
// kernel: tpu_custom_call.1
$region0: #{tpu_custom_call.1}
  #allocation0 [shape = 'u32[]', space=smem, size = 0x4, offset = 0x4, fixed_abs, tag = 'smem constant byte address 0x4 - core index']
  #allocation1 [shape = 'u32[144,128]{1,0:T(1,128)}', space=vmem, size = 0x12000, scoped, tag = 'internal scratch']
  #allocation2 [shape = 'bf16[18,18,4]{2,1,0:T(8,128)(2,1)}', space=vmem, size = 0x1b000, scoped, tag = 'scratch operand']
  #allocation3 [shape = 'bf16[18,18,8]{2,1,0:T(8,128)(2,1)}', space=vmem, size = 0x1b000, scoped, tag = 'scratch operand']
  %s0 = inlined_call_operand.vmem [shape: f32[2,16,16,4], index: 0, kind: input, shape index: {}]
  %s1 = inlined_call_operand.vmem [shape: f32[1,4], index: 1, kind: input, shape index: {}]
  %s2 = inlined_call_operand.vmem [shape: f32[1,4], index: 2, kind: input, shape index: {}]
  %s3 = inlined_call_operand.vmem [shape: bf16[36,8], index: 3, kind: input, shape index: {}]
  %s4 = inlined_call_operand.vmem [shape: f32[1,8], index: 4, kind: input, shape index: {}]
  %s5 = inlined_call_operand.vmem [shape: f32[1,8], index: 5, kind: input, shape index: {}]
  %s6 = inlined_call_operand.vmem [shape: bf16[72,8], index: 6, kind: input, shape index: {}]
  %s7 = inlined_call_operand.vmem [shape: f32[4,8], index: 7, kind: input, shape index: {}]
  %s8 = inlined_call_operand.hbm [shape: f32[2,256,128], index: 8, kind: output, shape index: {}]
  %s9 = sld [smem:[#allocation0]]
  $region65: #{tpu_custom_call.1} parent=0
    _
  %s11 = ssub.s32 1, %s9
  %s12 = scalar_select 0, %s11, %s9
  $region1: #{tpu_custom_call.1} parent=0
    #allocation4 [shape = 'u8[262144]{0}', space=vmem, size = 0x40000, scoped, tag = 'output window, operand 0']
    #allocation5 [shape = 's32[2]{0}', space=sflag, size = 0x8, scoped, tag = 'scoped memory for tpu_custom_call.1']
    %13 = vsyncpa [#allocation5], 0
    %s14 = scalar_lea.sflag [#allocation5], 1
    %15 = vsyncpa %s14, 0
    loop: start=0, step=1, limit=4
    $region2: #{tpu_custom_call.1} parent=1 // loop_pre_header
      _
    $region3: #{tpu_custom_call.1} parent=1 // loop_header
      %s17 = sphi 0, %s21
      %p18 = scmp.ge.s32.totalorder %s17, 4
      %s27 = sphi 0, %s29
      %s30 = sphi 0, %s27
      %s31 = sphi 0, %s30
      %s47 = sphi 0, %s31
      %s51 = sphi 0, %s51
      %s53 = sphi 0, %s51
      %s54 = sphi 0, %s53
      %s68 = sphi 0, %s54
      %s72 = sphi 0, %s72
      %s74 = sphi 0, %s72
      %s75 = sphi 0, %s74
      %s89 = sphi 0, %s75
      %s93 = sphi 0, %s93
      %s95 = sphi 0, %s93
      %s96 = sphi 0, %s95
      %s110 = sphi 0, %s96
      %s114 = sphi 0, %s114
      %s116 = sphi 0, %s114
      %s117 = sphi 0, %s116
      %s131 = sphi 0, %s117
      %s135 = sphi 0, %s135
      %s137 = sphi 0, %s135
      %s138 = sphi 0, %s137
      %s152 = sphi 0, %s138
      %s156 = sphi 0, %s156
      %s158 = sphi 0, %s156
      %s159 = sphi 0, %s158
      %s173 = sphi 0, %s159
      %s177 = sphi 0, %s177
      %s179 = sphi 0, %s177
      %s180 = sphi 0, %s179
      %s194 = sphi 0, %s180
      %s200 = sphi 0, %s202
      %s203 = sphi 0, %s200
      %s204 = sphi 0, %s203
      %s220 = sphi 0, %s204
    $region4: #{tpu_custom_call.1} parent=1 // loop_header_branch
      %20 = sbr.rel (%p18) target = $region8
    $region5: #{tpu_custom_call.1} parent=1 // loop_body
      %s22 = ssub.s32 %s17, 1
      %s23 = ssub.s32 %s17, 2
      %s24 = sadd.s32 %s17, 1
      %s25 = ssub.s32 %s17, %s24
      %p26 = scmp.eq.s32.totalorder %s25, 0
      %s28 = sadd.s32 %s27, 1
      %s29 = scalar_select %p26, %s27, %s28
      %p32 = pneg %p26
      %p33 = scmp.eq.s32.totalorder %s17, 1
      %p34 = por %p32, %p33
      %p35 = scmp.ne.s32.totalorder %s27, %s30
      %p36 = scmp.eq.s32.totalorder %s17, 0
      %p37 = por %p35, %p36
      %p38 = scmp.ne.s32.totalorder %s27, %s30
      %p39 = scmp.eq.s32.totalorder %s22, 1
      %p40 = por %p38, %p39
      %p41 = scmp.ne.s32.totalorder %s30, %s31
      %p42 = scmp.eq.s32.totalorder %s22, 0
      %p43 = por %p41, %p42
      %p44 = scmp.ne.s32.totalorder %s30, %s31
      %p45 = scmp.eq.s32.totalorder %s23, 1
      %p46 = por %p44, %p45
      %p48 = scmp.ne.s32.totalorder %s31, %s47
      %p49 = scmp.eq.s32.totalorder %s23, 0
      %p50 = por %p48, %p49
      %s52 = sadd.s32 %s51, 1
      %p55 = scmp.eq.s32.totalorder %s17, 1
      %p56 = scmp.ne.s32.totalorder %s51, %s53
      %p57 = scmp.eq.s32.totalorder %s17, 0
      %p58 = por %p56, %p57
      %p59 = scmp.ne.s32.totalorder %s51, %s53
      %p60 = scmp.eq.s32.totalorder %s22, 1
      %p61 = por %p59, %p60
      %p62 = scmp.ne.s32.totalorder %s53, %s54
      %p63 = scmp.eq.s32.totalorder %s22, 0
      %p64 = por %p62, %p63
      %p65 = scmp.ne.s32.totalorder %s53, %s54
      %p66 = scmp.eq.s32.totalorder %s23, 1
      %p67 = por %p65, %p66
      %p69 = scmp.ne.s32.totalorder %s54, %s68
      %p70 = scmp.eq.s32.totalorder %s23, 0
      %p71 = por %p69, %p70
      %s73 = sadd.s32 %s72, 1
      %p76 = scmp.eq.s32.totalorder %s17, 1
      %p77 = scmp.ne.s32.totalorder %s72, %s74
      %p78 = scmp.eq.s32.totalorder %s17, 0
      %p79 = por %p77, %p78
      %p80 = scmp.ne.s32.totalorder %s72, %s74
      %p81 = scmp.eq.s32.totalorder %s22, 1
      %p82 = por %p80, %p81
      %p83 = scmp.ne.s32.totalorder %s74, %s75
      %p84 = scmp.eq.s32.totalorder %s22, 0
      %p85 = por %p83, %p84
      %p86 = scmp.ne.s32.totalorder %s74, %s75
      %p87 = scmp.eq.s32.totalorder %s23, 1
      %p88 = por %p86, %p87
      %p90 = scmp.ne.s32.totalorder %s75, %s89
      %p91 = scmp.eq.s32.totalorder %s23, 0
      %p92 = por %p90, %p91
      %s94 = sadd.s32 %s93, 1
      %p97 = scmp.eq.s32.totalorder %s17, 1
      %p98 = scmp.ne.s32.totalorder %s93, %s95
      %p99 = scmp.eq.s32.totalorder %s17, 0
      %p100 = por %p98, %p99
      %p101 = scmp.ne.s32.totalorder %s93, %s95
      %p102 = scmp.eq.s32.totalorder %s22, 1
      %p103 = por %p101, %p102
      %p104 = scmp.ne.s32.totalorder %s95, %s96
      %p105 = scmp.eq.s32.totalorder %s22, 0
      %p106 = por %p104, %p105
      %p107 = scmp.ne.s32.totalorder %s95, %s96
      %p108 = scmp.eq.s32.totalorder %s23, 1
      %p109 = por %p107, %p108
      %p111 = scmp.ne.s32.totalorder %s96, %s110
      %p112 = scmp.eq.s32.totalorder %s23, 0
      %p113 = por %p111, %p112
      %s115 = sadd.s32 %s114, 1
      %p118 = scmp.eq.s32.totalorder %s17, 1
      %p119 = scmp.ne.s32.totalorder %s114, %s116
      %p120 = scmp.eq.s32.totalorder %s17, 0
      %p121 = por %p119, %p120
      %p122 = scmp.ne.s32.totalorder %s114, %s116
      %p123 = scmp.eq.s32.totalorder %s22, 1
      %p124 = por %p122, %p123
      %p125 = scmp.ne.s32.totalorder %s116, %s117
      %p126 = scmp.eq.s32.totalorder %s22, 0
      %p127 = por %p125, %p126
      %p128 = scmp.ne.s32.totalorder %s116, %s117
      %p129 = scmp.eq.s32.totalorder %s23, 1
      %p130 = por %p128, %p129
      %p132 = scmp.ne.s32.totalorder %s117, %s131
      %p133 = scmp.eq.s32.totalorder %s23, 0
      %p134 = por %p132, %p133
      %s136 = sadd.s32 %s135, 1
      %p139 = scmp.eq.s32.totalorder %s17, 1
      %p140 = scmp.ne.s32.totalorder %s135, %s137
      %p141 = scmp.eq.s32.totalorder %s17, 0
      %p142 = por %p140, %p141
      %p143 = scmp.ne.s32.totalorder %s135, %s137
      %p144 = scmp.eq.s32.totalorder %s22, 1
      %p145 = por %p143, %p144
      %p146 = scmp.ne.s32.totalorder %s137, %s138
      %p147 = scmp.eq.s32.totalorder %s22, 0
      %p148 = por %p146, %p147
      %p149 = scmp.ne.s32.totalorder %s137, %s138
      %p150 = scmp.eq.s32.totalorder %s23, 1
      %p151 = por %p149, %p150
      %p153 = scmp.ne.s32.totalorder %s138, %s152
      %p154 = scmp.eq.s32.totalorder %s23, 0
      %p155 = por %p153, %p154
      %s157 = sadd.s32 %s156, 1
      %p160 = scmp.eq.s32.totalorder %s17, 1
      %p161 = scmp.ne.s32.totalorder %s156, %s158
      %p162 = scmp.eq.s32.totalorder %s17, 0
      %p163 = por %p161, %p162
      %p164 = scmp.ne.s32.totalorder %s156, %s158
      %p165 = scmp.eq.s32.totalorder %s22, 1
      %p166 = por %p164, %p165
      %p167 = scmp.ne.s32.totalorder %s158, %s159
      %p168 = scmp.eq.s32.totalorder %s22, 0
      %p169 = por %p167, %p168
      %p170 = scmp.ne.s32.totalorder %s158, %s159
      %p171 = scmp.eq.s32.totalorder %s23, 1
      %p172 = por %p170, %p171
      %p174 = scmp.ne.s32.totalorder %s159, %s173
      %p175 = scmp.eq.s32.totalorder %s23, 0
      %p176 = por %p174, %p175
      %s178 = sadd.s32 %s177, 1
      %p181 = scmp.eq.s32.totalorder %s17, 1
      %p182 = scmp.ne.s32.totalorder %s177, %s179
      %p183 = scmp.eq.s32.totalorder %s17, 0
      %p184 = por %p182, %p183
      %p185 = scmp.ne.s32.totalorder %s177, %s179
      %p186 = scmp.eq.s32.totalorder %s22, 1
      %p187 = por %p185, %p186
      %p188 = scmp.ne.s32.totalorder %s179, %s180
      %p189 = scmp.eq.s32.totalorder %s22, 0
      %p190 = por %p188, %p189
      %p191 = scmp.ne.s32.totalorder %s179, %s180
      %p192 = scmp.eq.s32.totalorder %s23, 1
      %p193 = por %p191, %p192
      %p195 = scmp.ne.s32.totalorder %s180, %s194
      %p196 = scmp.eq.s32.totalorder %s23, 0
      %p197 = por %p195, %p196
      %s198 = ssub.s32 %s17, %s24
      %p199 = scmp.eq.s32.totalorder %s198, 0
      %s201 = sadd.s32 %s200, 1
      %s202 = scalar_select %p199, %s200, %s201
      %p205 = pneg %p199
      %p206 = scmp.eq.s32.totalorder %s17, 1
      %p207 = por %p205, %p206
      %p208 = scmp.ne.s32.totalorder %s200, %s203
      %p209 = scmp.eq.s32.totalorder %s17, 0
      %p210 = por %p208, %p209
      %p211 = scmp.ne.s32.totalorder %s200, %s203
      %p212 = scmp.eq.s32.totalorder %s22, 1
      %p213 = por %p211, %p212
      %p214 = scmp.ne.s32.totalorder %s203, %s204
      %p215 = scmp.eq.s32.totalorder %s22, 0
      %p216 = por %p214, %p215
      %p217 = scmp.ne.s32.totalorder %s203, %s204
      %p218 = scmp.eq.s32.totalorder %s23, 1
      %p219 = por %p217, %p218
      %p221 = scmp.ne.s32.totalorder %s204, %s220
      %p222 = scmp.eq.s32.totalorder %s23, 0
      %p223 = por %p221, %p222
      %p224 = scmp.le.s32.totalorder 1, %s17
      %p225 = scmp.lt.s32.totalorder %s17, 3
      %p226 = pnand %p224, %p225
      %p227 = pneg %p226
      // Predicated region
      $region9: #{tpu_custom_call.1} parent=5 // pred_check
        _
      $region10: #{tpu_custom_call.1} parent=5 // pred_check_branch
        %229 = sbr.rel (%p226) target = $region12
      $region11: #{tpu_custom_call.1} parent=5 // pred_region
        %s230 = ssub.s32 %s17, 1
        // Predicated region
        $region13: #{tpu_custom_call.1} parent=11 // pred_check
          %p231 = pneg %p64
        $region14: #{tpu_custom_call.1} parent=11 // pred_check_branch
          %233 = sbr.rel (%p231) target = $region16
        $region15: #{tpu_custom_call.1} parent=11 // pred_region
          _
        $region16: #{tpu_custom_call.1} parent=11 // pred_fallthru
          _
        // Predicated region
        $region17: #{tpu_custom_call.1} parent=11 // pred_check
          %p234 = pneg %p85
        $region18: #{tpu_custom_call.1} parent=11 // pred_check_branch
          %236 = sbr.rel (%p234) target = $region20
        $region19: #{tpu_custom_call.1} parent=11 // pred_region
          _
        $region20: #{tpu_custom_call.1} parent=11 // pred_fallthru
          _
        // Predicated region
        $region21: #{tpu_custom_call.1} parent=11 // pred_check
          %p237 = pneg %p106
        $region22: #{tpu_custom_call.1} parent=11 // pred_check_branch
          %239 = sbr.rel (%p237) target = $region24
        $region23: #{tpu_custom_call.1} parent=11 // pred_region
          _
        $region24: #{tpu_custom_call.1} parent=11 // pred_fallthru
          _
        // Predicated region
        $region25: #{tpu_custom_call.1} parent=11 // pred_check
          %p240 = pneg %p127
        $region26: #{tpu_custom_call.1} parent=11 // pred_check_branch
          %242 = sbr.rel (%p240) target = $region28
        $region27: #{tpu_custom_call.1} parent=11 // pred_region
          _
        $region28: #{tpu_custom_call.1} parent=11 // pred_fallthru
          _
        // Predicated region
        $region29: #{tpu_custom_call.1} parent=11 // pred_check
          %p243 = pneg %p148
        $region30: #{tpu_custom_call.1} parent=11 // pred_check_branch
          %245 = sbr.rel (%p243) target = $region32
        $region31: #{tpu_custom_call.1} parent=11 // pred_region
          _
        $region32: #{tpu_custom_call.1} parent=11 // pred_fallthru
          _
        // Predicated region
        $region33: #{tpu_custom_call.1} parent=11 // pred_check
          %p246 = pneg %p169
        $region34: #{tpu_custom_call.1} parent=11 // pred_check_branch
          %248 = sbr.rel (%p246) target = $region36
        $region35: #{tpu_custom_call.1} parent=11 // pred_region
          _
        $region36: #{tpu_custom_call.1} parent=11 // pred_fallthru
          _
        // Predicated region
        $region37: #{tpu_custom_call.1} parent=11 // pred_check
          %p249 = pneg %p190
        $region38: #{tpu_custom_call.1} parent=11 // pred_check_branch
          %251 = sbr.rel (%p249) target = $region40
        $region39: #{tpu_custom_call.1} parent=11 // pred_region
          _
        $region40: #{tpu_custom_call.1} parent=11 // pred_fallthru
          _
      $region12: #{tpu_custom_call.1} parent=5 // pred_fallthru
        _
      %p252 = scmp.lt.s32.totalorder %s17, 2
      // Predicated region
      $region41: #{tpu_custom_call.1} parent=5 // pred_check
        %p253 = pneg %p252
      $region42: #{tpu_custom_call.1} parent=5 // pred_check_branch
        %255 = sbr.rel (%p253) target = $region44
      $region43: #{tpu_custom_call.1} parent=5 // pred_region
        // Predicated region
        $region45: #{tpu_custom_call.1} parent=43 // pred_check
          %p256 = pneg %p37
        $region46: #{tpu_custom_call.1} parent=43 // pred_check_branch
          %258 = sbr.rel (%p256) target = $region48
        $region47: #{tpu_custom_call.1} parent=43 // pred_region
          %p259 = scmp.lt.s32.totalorder %s17, 1
          %s260 = scalar_select %p259, %s17, 1
          %s261 = smul.addr %s260, 32
          %s262 = smul.addr %s261, 8
          %s263 = scalar_lea.vmem %s0, %s262
        $region48: #{tpu_custom_call.1} parent=43 // pred_fallthru
          _
      $region44: #{tpu_custom_call.1} parent=5 // pred_fallthru
        _
      %p264 = scmp.le.s32.totalorder 1, %s17
      %p265 = scmp.lt.s32.totalorder %s17, 3
      %p266 = pnand %p264, %p265
      %p267 = pneg %p266
      // Predicated region
      $region49: #{tpu_custom_call.1} parent=5 // pred_check
        _
      $region50: #{tpu_custom_call.1} parent=5 // pred_check_branch
        %269 = sbr.rel (%p266) target = $region52
      $region51: #{tpu_custom_call.1} parent=5 // pred_region
        %s270 = ssub.s32 %s17, 1
        %p271 = scmp.lt.s32.totalorder %s22, 1
        %s272 = scalar_select %p271, %s22, 1
        %s273 = smul.addr %s272, 32
        %s274 = smul.addr %s273, 8
        %s275 = scalar_lea.vmem %s0, %s274
        %p276 = pneg %p43
        %p277 = pneg %p40
        %p278 = pneg %p64
        %p279 = pneg %p61
        %p280 = pneg %p85
        %p281 = pneg %p82
        %p282 = pneg %p106
        %p283 = pneg %p103
        %p284 = pneg %p127
        %p285 = pneg %p124
        %p286 = pneg %p148
        %p287 = pneg %p145
        %p288 = pneg %p169
        %p289 = pneg %p166
        %p290 = pneg %p190
        %p291 = pneg %p187
        %p292 = pneg %p216
        %p293 = pneg %p213
        %s294 = sand.u32 %s203, 1
        %s295 = scalar_lea.sflag [#allocation5], %s294
        %s296 = sand.u32 %s203, 1
        %s297 = smul.addr %s296, 256
        %s298 = scalar_lea.vmem [#allocation4], %s297
        %p299 = scmp.lt.s32.totalorder %s22, 1
        %s300 = scalar_select %p299, %s22, 1
        %s301 = smul.addr %s300, 32
        %s302 = smul.addr %s301, 8
        %s303 = scalar_lea.vmem %s0, %s302
        %v305 = vld [vmem:[%s303] sm:$0xff]
        %v306 = vld [vmem:[%s303 + $0x8] sm:$0xff]
        %v307 = vld [vmem:[%s303 + $0x10] sm:$0xff]
        %v308 = vld [vmem:[%s303 + $0x18] sm:$0xff]
        %v309 = vld [vmem:[%s303 + $0x20] sm:$0xff]
        %v310 = vld [vmem:[%s303 + $0x28] sm:$0xff]
        %v311 = vld [vmem:[%s303 + $0x30] sm:$0xff]
        %v312 = vld [vmem:[%s303 + $0x38] sm:$0xff]
        %v313 = vld [vmem:[%s303 + $0x40] sm:$0xff]
        %v314 = vld [vmem:[%s303 + $0x48] sm:$0xff]
        %v315 = vld [vmem:[%s303 + $0x50] sm:$0xff]
        %v316 = vld [vmem:[%s303 + $0x58] sm:$0xff]
        %v317 = vld [vmem:[%s303 + $0x60] sm:$0xff]
        %v318 = vld [vmem:[%s303 + $0x68] sm:$0xff]
        %v319 = vld [vmem:[%s303 + $0x70] sm:$0xff]
        %v320 = vld [vmem:[%s303 + $0x78] sm:$0xff]
        %v321 = vld [vmem:[%s303 + $0x80] sm:$0xff]
        %v322 = vld [vmem:[%s303 + $0x88] sm:$0xff]
        %v323 = vld [vmem:[%s303 + $0x90] sm:$0xff]
        %v324 = vld [vmem:[%s303 + $0x98] sm:$0xff]
        %v325 = vld [vmem:[%s303 + $0xa0] sm:$0xff]
        %v326 = vld [vmem:[%s303 + $0xa8] sm:$0xff]
        %v327 = vld [vmem:[%s303 + $0xb0] sm:$0xff]
        %v328 = vld [vmem:[%s303 + $0xb8] sm:$0xff]
        %v329 = vld [vmem:[%s303 + $0xc0] sm:$0xff]
        %v330 = vld [vmem:[%s303 + $0xc8] sm:$0xff]
        %v331 = vld [vmem:[%s303 + $0xd0] sm:$0xff]
        %v332 = vld [vmem:[%s303 + $0xd8] sm:$0xff]
        %v333 = vld [vmem:[%s303 + $0xe0] sm:$0xff]
        %v334 = vld [vmem:[%s303 + $0xe8] sm:$0xff]
        %v335 = vld [vmem:[%s303 + $0xf0] sm:$0xff]
        %v336 = vld [vmem:[%s303 + $0xf8] sm:$0xff]
        %v337 = vld [vmem:[%s1] sm:$0x1]
        %v339 = vlaneseq
        %v340 = vshrl.u32 %v339, 7
        %v341 = vsub.s32 0, %v340
        %v342 = vrot.slane %v337, %v341
        %v344 = vmul.f32 %v305, %v342
        %v345 = vmul.f32 %v306, %v342
        %v346 = vmul.f32 %v307, %v342
        %v347 = vmul.f32 %v308, %v342
        %v348 = vmul.f32 %v309, %v342
        %v349 = vmul.f32 %v310, %v342
        %v350 = vmul.f32 %v311, %v342
        %v351 = vmul.f32 %v312, %v342
        %v352 = vmul.f32 %v313, %v342
        %v353 = vmul.f32 %v314, %v342
        %v354 = vmul.f32 %v315, %v342
        %v355 = vmul.f32 %v316, %v342
        %v356 = vmul.f32 %v317, %v342
        %v357 = vmul.f32 %v318, %v342
        %v358 = vmul.f32 %v319, %v342
        %v359 = vmul.f32 %v320, %v342
        %v360 = vmul.f32 %v321, %v342
        %v361 = vmul.f32 %v322, %v342
        %v362 = vmul.f32 %v323, %v342
        %v363 = vmul.f32 %v324, %v342
        %v364 = vmul.f32 %v325, %v342
        %v365 = vmul.f32 %v326, %v342
        %v366 = vmul.f32 %v327, %v342
        %v367 = vmul.f32 %v328, %v342
        %v368 = vmul.f32 %v329, %v342
        %v369 = vmul.f32 %v330, %v342
        %v370 = vmul.f32 %v331, %v342
        %v371 = vmul.f32 %v332, %v342
        %v372 = vmul.f32 %v333, %v342
        %v373 = vmul.f32 %v334, %v342
        %v374 = vmul.f32 %v335, %v342
        %v375 = vmul.f32 %v336, %v342
        %v376 = vld [vmem:[%s2] sm:$0x1]
        %v378 = vlaneseq
        %v379 = vshrl.u32 %v378, 7
        %v380 = vsub.s32 0, %v379
        %v381 = vrot.slane %v376, %v380
        %v383 = vadd.f32 %v344, %v381
        %v384 = vadd.f32 %v345, %v381
        %v385 = vadd.f32 %v346, %v381
        %v386 = vadd.f32 %v347, %v381
        %v387 = vadd.f32 %v348, %v381
        %v388 = vadd.f32 %v349, %v381
        %v389 = vadd.f32 %v350, %v381
        %v390 = vadd.f32 %v351, %v381
        %v391 = vadd.f32 %v352, %v381
        %v392 = vadd.f32 %v353, %v381
        %v393 = vadd.f32 %v354, %v381
        %v394 = vadd.f32 %v355, %v381
        %v395 = vadd.f32 %v356, %v381
        %v396 = vadd.f32 %v357, %v381
        %v397 = vadd.f32 %v358, %v381
        %v398 = vadd.f32 %v359, %v381
        %v399 = vadd.f32 %v360, %v381
        %v400 = vadd.f32 %v361, %v381
        %v401 = vadd.f32 %v362, %v381
        %v402 = vadd.f32 %v363, %v381
        %v403 = vadd.f32 %v364, %v381
        %v404 = vadd.f32 %v365, %v381
        %v405 = vadd.f32 %v366, %v381
        %v406 = vadd.f32 %v367, %v381
        %v407 = vadd.f32 %v368, %v381
        %v408 = vadd.f32 %v369, %v381
        %v409 = vadd.f32 %v370, %v381
        %v410 = vadd.f32 %v371, %v381
        %v411 = vadd.f32 %v372, %v381
        %v412 = vadd.f32 %v373, %v381
        %v413 = vadd.f32 %v374, %v381
        %v414 = vadd.f32 %v375, %v381
        %v415 = vmax.f32 %v383, 0.0
        %v416 = vmax.f32 %v384, 0.0
        %v417 = vmax.f32 %v385, 0.0
        %v418 = vmax.f32 %v386, 0.0
        %v419 = vmax.f32 %v387, 0.0
        %v420 = vmax.f32 %v388, 0.0
        %v421 = vmax.f32 %v389, 0.0
        %v422 = vmax.f32 %v390, 0.0
        %v423 = vmax.f32 %v391, 0.0
        %v424 = vmax.f32 %v392, 0.0
        %v425 = vmax.f32 %v393, 0.0
        %v426 = vmax.f32 %v394, 0.0
        %v427 = vmax.f32 %v395, 0.0
        %v428 = vmax.f32 %v396, 0.0
        %v429 = vmax.f32 %v397, 0.0
        %v430 = vmax.f32 %v398, 0.0
        %v431 = vmax.f32 %v399, 0.0
        %v432 = vmax.f32 %v400, 0.0
        %v433 = vmax.f32 %v401, 0.0
        %v434 = vmax.f32 %v402, 0.0
        %v435 = vmax.f32 %v403, 0.0
        %v436 = vmax.f32 %v404, 0.0
        %v437 = vmax.f32 %v405, 0.0
        %v438 = vmax.f32 %v406, 0.0
        %v439 = vmax.f32 %v407, 0.0
        %v440 = vmax.f32 %v408, 0.0
        %v441 = vmax.f32 %v409, 0.0
        %v442 = vmax.f32 %v410, 0.0
        %v443 = vmax.f32 %v411, 0.0
        %v444 = vmax.f32 %v412, 0.0
        %v445 = vmax.f32 %v413, 0.0
        %v446 = vmax.f32 %v414, 0.0
        %v447 = vpack.c.bf16 %v416, %v415
        %v448 = vpack.c.bf16 %v418, %v417
        %v449 = vpack.c.bf16 %v420, %v419
        %v450 = vpack.c.bf16 %v422, %v421
        %v451 = vpack.c.bf16 %v424, %v423
        %v452 = vpack.c.bf16 %v426, %v425
        %v453 = vpack.c.bf16 %v428, %v427
        %v454 = vpack.c.bf16 %v430, %v429
        %v455 = vpack.c.bf16 %v432, %v431
        %v456 = vpack.c.bf16 %v434, %v433
        %v457 = vpack.c.bf16 %v436, %v435
        %v458 = vpack.c.bf16 %v438, %v437
        %v459 = vpack.c.bf16 %v440, %v439
        %v460 = vpack.c.bf16 %v442, %v441
        %v461 = vpack.c.bf16 %v444, %v443
        %v462 = vpack.c.bf16 %v446, %v445
        %v464 = vshrl.u32 %v447, 16
        %v466 = vrot.slane %v464, 7
        %v467 = vshll.u32 %v447, 16
        %v469 = vor.u32 %v466, %v467
        %v471 = vshrl.u32 %v448, 16
        %v473 = vrot.slane %v471, 7
        %v474 = vshll.u32 %v448, 16
        %v476 = vor.u32 %v473, %v474
        %v478 = vshrl.u32 %v449, 16
        %v480 = vrot.slane %v478, 7
        %v481 = vshll.u32 %v449, 16
        %v483 = vor.u32 %v480, %v481
        %v485 = vshrl.u32 %v450, 16
        %v487 = vrot.slane %v485, 7
        %v488 = vshll.u32 %v450, 16
        %v490 = vor.u32 %v487, %v488
        %v492 = vshrl.u32 %v451, 16
        %v494 = vrot.slane %v492, 7
        %v495 = vshll.u32 %v451, 16
        %v497 = vor.u32 %v494, %v495
        %v499 = vshrl.u32 %v452, 16
        %v501 = vrot.slane %v499, 7
        %v502 = vshll.u32 %v452, 16
        %v504 = vor.u32 %v501, %v502
        %v506 = vshrl.u32 %v453, 16
        %v508 = vrot.slane %v506, 7
        %v509 = vshll.u32 %v453, 16
        %v511 = vor.u32 %v508, %v509
        %v513 = vshrl.u32 %v454, 16
        %v515 = vrot.slane %v513, 7
        %v516 = vshll.u32 %v454, 16
        %v518 = vor.u32 %v515, %v516
        %v520 = vshrl.u32 %v455, 16
        %v522 = vrot.slane %v520, 7
        %v523 = vshll.u32 %v455, 16
        %v525 = vor.u32 %v522, %v523
        %v527 = vshrl.u32 %v456, 16
        %v529 = vrot.slane %v527, 7
        %v530 = vshll.u32 %v456, 16
        %v532 = vor.u32 %v529, %v530
        %v534 = vshrl.u32 %v457, 16
        %v536 = vrot.slane %v534, 7
        %v537 = vshll.u32 %v457, 16
        %v539 = vor.u32 %v536, %v537
        %v541 = vshrl.u32 %v458, 16
        %v543 = vrot.slane %v541, 7
        %v544 = vshll.u32 %v458, 16
        %v546 = vor.u32 %v543, %v544
        %v548 = vshrl.u32 %v459, 16
        %v550 = vrot.slane %v548, 7
        %v551 = vshll.u32 %v459, 16
        %v553 = vor.u32 %v550, %v551
        %v555 = vshrl.u32 %v460, 16
        %v557 = vrot.slane %v555, 7
        %v558 = vshll.u32 %v460, 16
        %v560 = vor.u32 %v557, %v558
        %v562 = vshrl.u32 %v461, 16
        %v564 = vrot.slane %v562, 7
        %v565 = vshll.u32 %v461, 16
        %v567 = vor.u32 %v564, %v565
        %v569 = vshrl.u32 %v462, 16
        %v571 = vrot.slane %v569, 7
        %v572 = vshll.u32 %v462, 16
        %v574 = vor.u32 %v571, %v572
        %vm607 = vcmask 1040384
        %vm608 = vsmask.f32 256
        %vm609 = vmand %vm607, %vm608
        %v610 = vsel %vm609, 0, %v469
        %v611 = vsel %vm609, 0, %v476
        %v612 = vsel %vm609, 0, %v483
        %v613 = vsel %vm609, 0, %v490
        %v614 = vsel %vm609, 0, %v497
        %v615 = vsel %vm609, 0, %v504
        %v616 = vsel %vm609, 0, %v511
        %v617 = vsel %vm609, 0, %v518
        %v618 = vsel %vm609, 0, %v525
        %v619 = vsel %vm609, 0, %v532
        %v620 = vsel %vm609, 0, %v539
        %v621 = vsel %vm609, 0, %v546
        %v622 = vsel %vm609, 0, %v553
        %v623 = vsel %vm609, 0, %v560
        %v624 = vsel %vm609, 0, %v567
        %v625 = vsel %vm609, 0, %v574
        %v626 = vsel %vm609, %v466, 0
        %v627 = vsel %vm609, %v473, 0
        %v628 = vsel %vm609, %v480, 0
        %v629 = vsel %vm609, %v487, 0
        %v630 = vsel %vm609, %v494, 0
        %v631 = vsel %vm609, %v501, 0
        %v632 = vsel %vm609, %v508, 0
        %v633 = vsel %vm609, %v515, 0
        %v634 = vsel %vm609, %v522, 0
        %v635 = vsel %vm609, %v529, 0
        %v636 = vsel %vm609, %v536, 0
        %v637 = vsel %vm609, %v543, 0
        %v638 = vsel %vm609, %v550, 0
        %v639 = vsel %vm609, %v557, 0
        %v640 = vsel %vm609, %v564, 0
        %v641 = vsel %vm609, %v571, 0
        %v675 = vunpack.c.l.b16 0
        %v676 = vunpack.c.h.b16 0
        %v677 = vunpack.c.l.b16 %v610
        %v678 = vunpack.c.h.b16 %v610
        %v679 = vunpack.c.l.b16 %v626
        %v680 = vunpack.c.l.b16 %v611
        %v681 = vunpack.c.h.b16 %v611
        %v682 = vunpack.c.l.b16 %v627
        %v683 = vunpack.c.l.b16 %v612
        %v684 = vunpack.c.h.b16 %v612
        %v685 = vunpack.c.l.b16 %v628
        %v686 = vunpack.c.l.b16 %v613
        %v687 = vunpack.c.h.b16 %v613
        %v688 = vunpack.c.l.b16 %v629
        %v689 = vunpack.c.l.b16 %v614
        %v690 = vunpack.c.h.b16 %v614
        %v691 = vunpack.c.l.b16 %v630
        %v692 = vunpack.c.l.b16 %v615
        %v693 = vunpack.c.h.b16 %v615
        %v694 = vunpack.c.l.b16 %v631
        %v695 = vunpack.c.l.b16 %v616
        %v696 = vunpack.c.h.b16 %v616
        %v697 = vunpack.c.l.b16 %v632
        %v698 = vunpack.c.l.b16 %v617
        %v699 = vunpack.c.h.b16 %v617
        %v700 = vunpack.c.l.b16 %v633
        %v701 = vunpack.c.l.b16 %v618
        %v702 = vunpack.c.h.b16 %v618
        %v703 = vunpack.c.l.b16 %v634
        %v704 = vunpack.c.l.b16 %v619
        %v705 = vunpack.c.h.b16 %v619
        %v706 = vunpack.c.l.b16 %v635
        %v707 = vunpack.c.l.b16 %v620
        %v708 = vunpack.c.h.b16 %v620
        %v709 = vunpack.c.l.b16 %v636
        %v710 = vunpack.c.l.b16 %v621
        %v711 = vunpack.c.h.b16 %v621
        %v712 = vunpack.c.l.b16 %v637
        %v713 = vunpack.c.l.b16 %v622
        %v714 = vunpack.c.h.b16 %v622
        %v715 = vunpack.c.l.b16 %v638
        %v716 = vunpack.c.l.b16 %v623
        %v717 = vunpack.c.h.b16 %v623
        %v718 = vunpack.c.l.b16 %v639
        %v719 = vunpack.c.l.b16 %v624
        %v720 = vunpack.c.h.b16 %v624
        %v721 = vunpack.c.l.b16 %v640
        %v722 = vunpack.c.l.b16 %v625
        %v723 = vunpack.c.h.b16 %v625
        %v724 = vunpack.c.l.b16 %v641
        %v725 = vpack.c.b16 %v675, %v675
        %v726 = vpack.c.b16 %v676, %v676
        %v727 = vpack.c.b16 %v677, %v677
        %v728 = vpack.c.b16 %v678, %v678
        %v729 = vpack.c.b16 %v679, %v679
        %v730 = vpack.c.b16 %v680, %v680
        %v731 = vpack.c.b16 %v681, %v681
        %v732 = vpack.c.b16 %v682, %v682
        %v733 = vpack.c.b16 %v683, %v683
        %v734 = vpack.c.b16 %v684, %v684
        %v735 = vpack.c.b16 %v685, %v685
        %v736 = vpack.c.b16 %v686, %v686
        %v737 = vpack.c.b16 %v687, %v687
        %v738 = vpack.c.b16 %v688, %v688
        %v739 = vpack.c.b16 %v689, %v689
        %v740 = vpack.c.b16 %v690, %v690
        %v741 = vpack.c.b16 %v691, %v691
        %v742 = vpack.c.b16 %v692, %v692
        %v743 = vpack.c.b16 %v693, %v693
        %v744 = vpack.c.b16 %v694, %v694
        %v745 = vpack.c.b16 %v695, %v695
        %v746 = vpack.c.b16 %v696, %v696
        %v747 = vpack.c.b16 %v697, %v697
        %v748 = vpack.c.b16 %v698, %v698
        %v749 = vpack.c.b16 %v699, %v699
        %v750 = vpack.c.b16 %v700, %v700
        %v751 = vpack.c.b16 %v701, %v701
        %v752 = vpack.c.b16 %v702, %v702
        %v753 = vpack.c.b16 %v703, %v703
        %v754 = vpack.c.b16 %v704, %v704
        %v755 = vpack.c.b16 %v705, %v705
        %v756 = vpack.c.b16 %v706, %v706
        %v757 = vpack.c.b16 %v707, %v707
        %v758 = vpack.c.b16 %v708, %v708
        %v759 = vpack.c.b16 %v709, %v709
        %v760 = vpack.c.b16 %v710, %v710
        %v761 = vpack.c.b16 %v711, %v711
        %v762 = vpack.c.b16 %v712, %v712
        %v763 = vpack.c.b16 %v713, %v713
        %v764 = vpack.c.b16 %v714, %v714
        %v765 = vpack.c.b16 %v715, %v715
        %v766 = vpack.c.b16 %v716, %v716
        %v767 = vpack.c.b16 %v717, %v717
        %v768 = vpack.c.b16 %v718, %v718
        %v769 = vpack.c.b16 %v719, %v719
        %v770 = vpack.c.b16 %v720, %v720
        %v771 = vpack.c.b16 %v721, %v721
        %v772 = vpack.c.b16 %v722, %v722
        %v773 = vpack.c.b16 %v723, %v723
        %v774 = vpack.c.b16 %v724, %v724
        %vm825 = vcmask 27648
        %826 = vst.msk [vmem:[#allocation2] sm:$0xf] %vm825, %v725
        %827 = vst.msk [vmem:[#allocation2 + $0x4] sm:$0xf] %vm825, %v726
        %vm828 = vcmask 24576
        %829 = vst.msk [vmem:[#allocation2 + $0x8] sm:$0x1] %vm828, %v725
        %830 = vst.msk [vmem:[#allocation2 + $0xc] sm:$0xf] %vm825, %v727
        %831 = vst.msk [vmem:[#allocation2 + $0x10] sm:$0xf] %vm825, %v728
        %832 = vst.msk [vmem:[#allocation2 + $0x14] sm:$0x1] %vm828, %v729
        %833 = vst.msk [vmem:[#allocation2 + $0x18] sm:$0xf] %vm825, %v730
        %834 = vst.msk [vmem:[#allocation2 + $0x1c] sm:$0xf] %vm825, %v731
        %835 = vst.msk [vmem:[#allocation2 + $0x20] sm:$0x1] %vm828, %v732
        %836 = vst.msk [vmem:[#allocation2 + $0x24] sm:$0xf] %vm825, %v733
        %837 = vst.msk [vmem:[#allocation2 + $0x28] sm:$0xf] %vm825, %v734
        %838 = vst.msk [vmem:[#allocation2 + $0x2c] sm:$0x1] %vm828, %v735
        %839 = vst.msk [vmem:[#allocation2 + $0x30] sm:$0xf] %vm825, %v736
        %840 = vst.msk [vmem:[#allocation2 + $0x34] sm:$0xf] %vm825, %v737
        %841 = vst.msk [vmem:[#allocation2 + $0x38] sm:$0x1] %vm828, %v738
        %842 = vst.msk [vmem:[#allocation2 + $0x3c] sm:$0xf] %vm825, %v739
        %843 = vst.msk [vmem:[#allocation2 + $0x40] sm:$0xf] %vm825, %v740
        %844 = vst.msk [vmem:[#allocation2 + $0x44] sm:$0x1] %vm828, %v741
        %845 = vst.msk [vmem:[#allocation2 + $0x48] sm:$0xf] %vm825, %v742
        %846 = vst.msk [vmem:[#allocation2 + $0x4c] sm:$0xf] %vm825, %v743
        %847 = vst.msk [vmem:[#allocation2 + $0x50] sm:$0x1] %vm828, %v744
        %848 = vst.msk [vmem:[#allocation2 + $0x54] sm:$0xf] %vm825, %v745
        %849 = vst.msk [vmem:[#allocation2 + $0x58] sm:$0xf] %vm825, %v746
        %850 = vst.msk [vmem:[#allocation2 + $0x5c] sm:$0x1] %vm828, %v747
        %851 = vst.msk [vmem:[#allocation2 + $0x60] sm:$0xf] %vm825, %v748
        %852 = vst.msk [vmem:[#allocation2 + $0x64] sm:$0xf] %vm825, %v749
        %853 = vst.msk [vmem:[#allocation2 + $0x68] sm:$0x1] %vm828, %v750
        %854 = vst.msk [vmem:[#allocation2 + $0x6c] sm:$0xf] %vm825, %v751
        %855 = vst.msk [vmem:[#allocation2 + $0x70] sm:$0xf] %vm825, %v752
        %856 = vst.msk [vmem:[#allocation2 + $0x74] sm:$0x1] %vm828, %v753
        %857 = vst.msk [vmem:[#allocation2 + $0x78] sm:$0xf] %vm825, %v754
        %858 = vst.msk [vmem:[#allocation2 + $0x7c] sm:$0xf] %vm825, %v755
        %859 = vst.msk [vmem:[#allocation2 + $0x80] sm:$0x1] %vm828, %v756
        %860 = vst.msk [vmem:[#allocation2 + $0x84] sm:$0xf] %vm825, %v757
        %861 = vst.msk [vmem:[#allocation2 + $0x88] sm:$0xf] %vm825, %v758
        %862 = vst.msk [vmem:[#allocation2 + $0x8c] sm:$0x1] %vm828, %v759
        %863 = vst.msk [vmem:[#allocation2 + $0x90] sm:$0xf] %vm825, %v760
        %864 = vst.msk [vmem:[#allocation2 + $0x94] sm:$0xf] %vm825, %v761
        %865 = vst.msk [vmem:[#allocation2 + $0x98] sm:$0x1] %vm828, %v762
        %866 = vst.msk [vmem:[#allocation2 + $0x9c] sm:$0xf] %vm825, %v763
        %867 = vst.msk [vmem:[#allocation2 + $0xa0] sm:$0xf] %vm825, %v764
        %868 = vst.msk [vmem:[#allocation2 + $0xa4] sm:$0x1] %vm828, %v765
        %869 = vst.msk [vmem:[#allocation2 + $0xa8] sm:$0xf] %vm825, %v766
        %870 = vst.msk [vmem:[#allocation2 + $0xac] sm:$0xf] %vm825, %v767
        %871 = vst.msk [vmem:[#allocation2 + $0xb0] sm:$0x1] %vm828, %v768
        %872 = vst.msk [vmem:[#allocation2 + $0xb4] sm:$0xf] %vm825, %v769
        %873 = vst.msk [vmem:[#allocation2 + $0xb8] sm:$0xf] %vm825, %v770
        %874 = vst.msk [vmem:[#allocation2 + $0xbc] sm:$0x1] %vm828, %v771
        %875 = vst.msk [vmem:[#allocation2 + $0xc0] sm:$0xf] %vm825, %v772
        %876 = vst.msk [vmem:[#allocation2 + $0xc4] sm:$0xf] %vm825, %v773
        %877 = vst.msk [vmem:[#allocation2 + $0xc8] sm:$0x1] %vm828, %v774
        %878 = vst.msk [vmem:[#allocation2 + $0xcc] sm:$0xf] %vm825, %v725
        %879 = vst.msk [vmem:[#allocation2 + $0xd0] sm:$0xf] %vm825, %v726
        %880 = vst.msk [vmem:[#allocation2 + $0xd4] sm:$0x1] %vm828, %v725
        %v881 = vld [vmem:[#allocation2] sm:$0xf]
        %v882 = vld [vmem:[#allocation2 + $0x4] sm:$0xf]
        %v883 = vld [vmem:[#allocation2 + $0xc] sm:$0xf]
        %v884 = vld [vmem:[#allocation2 + $0x10] sm:$0xf]
        %v885 = vld [vmem:[#allocation2 + $0x18] sm:$0xf]
        %v886 = vld [vmem:[#allocation2 + $0x1c] sm:$0xf]
        %v887 = vld [vmem:[#allocation2 + $0x24] sm:$0xf]
        %v888 = vld [vmem:[#allocation2 + $0x28] sm:$0xf]
        %v889 = vld [vmem:[#allocation2 + $0x30] sm:$0xf]
        %v890 = vld [vmem:[#allocation2 + $0x34] sm:$0xf]
        %v891 = vld [vmem:[#allocation2 + $0x3c] sm:$0xf]
        %v892 = vld [vmem:[#allocation2 + $0x40] sm:$0xf]
        %v893 = vld [vmem:[#allocation2 + $0x48] sm:$0xf]
        %v894 = vld [vmem:[#allocation2 + $0x4c] sm:$0xf]
        %v895 = vld [vmem:[#allocation2 + $0x54] sm:$0xf]
        %v896 = vld [vmem:[#allocation2 + $0x58] sm:$0xf]
        %v897 = vld [vmem:[#allocation2 + $0x60] sm:$0xf]
        %v898 = vld [vmem:[#allocation2 + $0x64] sm:$0xf]
        %v899 = vld [vmem:[#allocation2 + $0x6c] sm:$0xf]
        %v900 = vld [vmem:[#allocation2 + $0x70] sm:$0xf]
        %v901 = vld [vmem:[#allocation2 + $0x78] sm:$0xf]
        %v902 = vld [vmem:[#allocation2 + $0x7c] sm:$0xf]
        %v903 = vld [vmem:[#allocation2 + $0x84] sm:$0xf]
        %v904 = vld [vmem:[#allocation2 + $0x88] sm:$0xf]
        %v905 = vld [vmem:[#allocation2 + $0x90] sm:$0xf]
        %v906 = vld [vmem:[#allocation2 + $0x94] sm:$0xf]
        %v907 = vld [vmem:[#allocation2 + $0x9c] sm:$0xf]
        %v908 = vld [vmem:[#allocation2 + $0xa0] sm:$0xf]
        %v909 = vld [vmem:[#allocation2 + $0xa8] sm:$0xf]
        %v910 = vld [vmem:[#allocation2 + $0xac] sm:$0xf]
        %v911 = vld [vmem:[#allocation2 + $0xb4] sm:$0xf]
        %v912 = vld [vmem:[#allocation2 + $0xb8] sm:$0xf]
        %v913 = vld [vmem:[#allocation2 + $0xc0] sm:$0xf]
        %v914 = vld [vmem:[#allocation2 + $0xc4] sm:$0xf]
        %v915 = vld [vmem:[#allocation2 + $0xcc] sm:$0xf]
        %v916 = vld [vmem:[#allocation2 + $0xd0] sm:$0xf]
        %v917 = vld [vmem:[#allocation2 + $0x8] sm:$0x1]
        %v918 = vld [vmem:[#allocation2 + $0x14] sm:$0x1]
        %v919 = vld [vmem:[#allocation2 + $0x20] sm:$0x1]
        %v920 = vld [vmem:[#allocation2 + $0x2c] sm:$0x1]
        %v921 = vld [vmem:[#allocation2 + $0x38] sm:$0x1]
        %v922 = vld [vmem:[#allocation2 + $0x44] sm:$0x1]
        %v923 = vld [vmem:[#allocation2 + $0x50] sm:$0x1]
        %v924 = vld [vmem:[#allocation2 + $0x5c] sm:$0x1]
        %v925 = vld [vmem:[#allocation2 + $0x68] sm:$0x1]
        %v926 = vld [vmem:[#allocation2 + $0x74] sm:$0x1]
        %v927 = vld [vmem:[#allocation2 + $0x80] sm:$0x1]
        %v928 = vld [vmem:[#allocation2 + $0x8c] sm:$0x1]
        %v929 = vld [vmem:[#allocation2 + $0x98] sm:$0x1]
        %v930 = vld [vmem:[#allocation2 + $0xa4] sm:$0x1]
        %v931 = vld [vmem:[#allocation2 + $0xb0] sm:$0x1]
        %v932 = vld [vmem:[#allocation2 + $0xbc] sm:$0x1]
        %v933 = vld [vmem:[#allocation2 + $0xc8] sm:$0x1]
        %v934 = vld [vmem:[#allocation2 + $0xd4] sm:$0x1]
        %v935 = vld [vmem:[#allocation2] sm:$0xe]
        %v936 = vld [vmem:[#allocation2 + $0xc] sm:$0xe]
        %v937 = vld [vmem:[#allocation2 + $0x18] sm:$0xe]
        %v938 = vld [vmem:[#allocation2 + $0x24] sm:$0xe]
        %v939 = vld [vmem:[#allocation2 + $0x30] sm:$0xe]
        %v940 = vld [vmem:[#allocation2 + $0x3c] sm:$0xe]
        %v941 = vld [vmem:[#allocation2 + $0x48] sm:$0xe]
        %v942 = vld [vmem:[#allocation2 + $0x54] sm:$0xe]
        %v943 = vld [vmem:[#allocation2 + $0x60] sm:$0xe]
        %v944 = vld [vmem:[#allocation2 + $0x6c] sm:$0xe]
        %v945 = vld [vmem:[#allocation2 + $0x78] sm:$0xe]
        %v946 = vld [vmem:[#allocation2 + $0x84] sm:$0xe]
        %v947 = vld [vmem:[#allocation2 + $0x90] sm:$0xe]
        %v948 = vld [vmem:[#allocation2 + $0x9c] sm:$0xe]
        %v949 = vld [vmem:[#allocation2 + $0xa8] sm:$0xe]
        %v950 = vld [vmem:[#allocation2 + $0xb4] sm:$0xe]
        %v951 = vld [vmem:[#allocation2 + $0xc0] sm:$0xe]
        %v952 = vld [vmem:[#allocation2 + $0xcc] sm:$0xe]
        %v989 = vunpack.c.l.b16 %v881
        %v990 = vunpack.c.l.b16 %v882
        %v991 = vunpack.c.l.b16 %v883
        %v992 = vunpack.c.l.b16 %v884
        %v993 = vunpack.c.l.b16 %v885
        %v994 = vunpack.c.l.b16 %v886
        %v995 = vunpack.c.l.b16 %v887
        %v996 = vunpack.c.l.b16 %v888
        %v997 = vunpack.c.l.b16 %v889
        %v998 = vunpack.c.l.b16 %v890
        %v999 = vunpack.c.l.b16 %v891
        %v1000 = vunpack.c.l.b16 %v892
        %v1001 = vunpack.c.l.b16 %v893
        %v1002 = vunpack.c.l.b16 %v894
        %v1003 = vunpack.c.l.b16 %v895
        %v1004 = vunpack.c.l.b16 %v896
        %v1005 = vunpack.c.l.b16 %v897
        %v1006 = vunpack.c.l.b16 %v898
        %v1007 = vunpack.c.l.b16 %v899
        %v1008 = vunpack.c.l.b16 %v900
        %v1009 = vunpack.c.l.b16 %v901
        %v1010 = vunpack.c.l.b16 %v902
        %v1011 = vunpack.c.l.b16 %v903
        %v1012 = vunpack.c.l.b16 %v904
        %v1013 = vunpack.c.l.b16 %v905
        %v1014 = vunpack.c.l.b16 %v906
        %v1015 = vunpack.c.l.b16 %v907
        %v1016 = vunpack.c.l.b16 %v908
        %v1017 = vunpack.c.l.b16 %v909
        %v1018 = vunpack.c.l.b16 %v910
        %v1019 = vunpack.c.l.b16 %v911
        %v1020 = vunpack.c.l.b16 %v912
        %v1021 = vunpack.c.l.b16 %v913
        %v1022 = vunpack.c.l.b16 %v914
        %v1023 = vunpack.c.l.b16 %v915
        %v1024 = vunpack.c.l.b16 %v916
        %v1025 = vpack.c.b16 %v990, %v989
        %v1026 = vpack.c.b16 %v992, %v991
        %v1027 = vpack.c.b16 %v994, %v993
        %v1028 = vpack.c.b16 %v996, %v995
        %v1029 = vpack.c.b16 %v998, %v997
        %v1030 = vpack.c.b16 %v1000, %v999
        %v1031 = vpack.c.b16 %v1002, %v1001
        %v1032 = vpack.c.b16 %v1004, %v1003
        %v1033 = vpack.c.b16 %v1006, %v1005
        %v1034 = vpack.c.b16 %v1008, %v1007
        %v1035 = vpack.c.b16 %v1010, %v1009
        %v1036 = vpack.c.b16 %v1012, %v1011
        %v1037 = vpack.c.b16 %v1014, %v1013
        %v1038 = vpack.c.b16 %v1016, %v1015
        %v1039 = vpack.c.b16 %v1018, %v1017
        %v1040 = vpack.c.b16 %v1020, %v1019
        %v1041 = vpack.c.b16 %v1022, %v1021
        %v1042 = vpack.c.b16 %v1024, %v1023
        %v1061 = vunpack.c.l.b16 %v917
        %v1062 = vunpack.c.l.b16 %v918
        %v1063 = vunpack.c.l.b16 %v919
        %v1064 = vunpack.c.l.b16 %v920
        %v1065 = vunpack.c.l.b16 %v921
        %v1066 = vunpack.c.l.b16 %v922
        %v1067 = vunpack.c.l.b16 %v923
        %v1068 = vunpack.c.l.b16 %v924
        %v1069 = vunpack.c.l.b16 %v925
        %v1070 = vunpack.c.l.b16 %v926
        %v1071 = vunpack.c.l.b16 %v927
        %v1072 = vunpack.c.l.b16 %v928
        %v1073 = vunpack.c.l.b16 %v929
        %v1074 = vunpack.c.l.b16 %v930
        %v1075 = vunpack.c.l.b16 %v931
        %v1076 = vunpack.c.l.b16 %v932
        %v1077 = vunpack.c.l.b16 %v933
        %v1078 = vunpack.c.l.b16 %v934
        %v1079 = vpack.c.b16 %v1061, %v1061
        %v1080 = vpack.c.b16 %v1062, %v1062
        %v1081 = vpack.c.b16 %v1063, %v1063
        %v1082 = vpack.c.b16 %v1064, %v1064
        %v1083 = vpack.c.b16 %v1065, %v1065
        %v1084 = vpack.c.b16 %v1066, %v1066
        %v1085 = vpack.c.b16 %v1067, %v1067
        %v1086 = vpack.c.b16 %v1068, %v1068
        %v1087 = vpack.c.b16 %v1069, %v1069
        %v1088 = vpack.c.b16 %v1070, %v1070
        %v1089 = vpack.c.b16 %v1071, %v1071
        %v1090 = vpack.c.b16 %v1072, %v1072
        %v1091 = vpack.c.b16 %v1073, %v1073
        %v1092 = vpack.c.b16 %v1074, %v1074
        %v1093 = vpack.c.b16 %v1075, %v1075
        %v1094 = vpack.c.b16 %v1076, %v1076
        %v1095 = vpack.c.b16 %v1077, %v1077
        %v1096 = vpack.c.b16 %v1078, %v1078
        %vm1097 = vsmask.f32 7424
        %v1099 = vshrl.u32 %v1025, 16
        %v1101 = vshll.u32 %v1025, 16
        %v1103 = vrot.slane %v1101, 1
        %v1104 = vor.u32 %v1099, %v1103
        %v1106 = vshll.u32 %v1079, 16
        %v1108 = vrot.slane %v1106, 1
        %v1109 = vsel %vm1097, %v1104, %v1108
        %v1111 = vshrl.u32 %v1026, 16
        %v1113 = vshll.u32 %v1026, 16
        %v1115 = vrot.slane %v1113, 1
        %v1116 = vor.u32 %v1111, %v1115
        %v1118 = vshll.u32 %v1080, 16
        %v1120 = vrot.slane %v1118, 1
        %v1121 = vsel %vm1097, %v1116, %v1120
        %v1123 = vshrl.u32 %v1027, 16
        %v1125 = vshll.u32 %v1027, 16
        %v1127 = vrot.slane %v1125, 1
        %v1128 = vor.u32 %v1123, %v1127
        %v1130 = vshll.u32 %v1081, 16
        %v1132 = vrot.slane %v1130, 1
        %v1133 = vsel %vm1097, %v1128, %v1132
        %v1135 = vshrl.u32 %v1028, 16
        %v1137 = vshll.u32 %v1028, 16
        %v1139 = vrot.slane %v1137, 1
        %v1140 = vor.u32 %v1135, %v1139
        %v1142 = vshll.u32 %v1082, 16
        %v1144 = vrot.slane %v1142, 1
        %v1145 = vsel %vm1097, %v1140, %v1144
        %v1147 = vshrl.u32 %v1029, 16
        %v1149 = vshll.u32 %v1029, 16
        %v1151 = vrot.slane %v1149, 1
        %v1152 = vor.u32 %v1147, %v1151
        %v1154 = vshll.u32 %v1083, 16
        %v1156 = vrot.slane %v1154, 1
        %v1157 = vsel %vm1097, %v1152, %v1156
        %v1159 = vshrl.u32 %v1030, 16
        %v1161 = vshll.u32 %v1030, 16
        %v1163 = vrot.slane %v1161, 1
        %v1164 = vor.u32 %v1159, %v1163
        %v1166 = vshll.u32 %v1084, 16
        %v1168 = vrot.slane %v1166, 1
        %v1169 = vsel %vm1097, %v1164, %v1168
        %v1171 = vshrl.u32 %v1031, 16
        %v1173 = vshll.u32 %v1031, 16
        %v1175 = vrot.slane %v1173, 1
        %v1176 = vor.u32 %v1171, %v1175
        %v1178 = vshll.u32 %v1085, 16
        %v1180 = vrot.slane %v1178, 1
        %v1181 = vsel %vm1097, %v1176, %v1180
        %v1183 = vshrl.u32 %v1032, 16
        %v1185 = vshll.u32 %v1032, 16
        %v1187 = vrot.slane %v1185, 1
        %v1188 = vor.u32 %v1183, %v1187
        %v1190 = vshll.u32 %v1086, 16
        %v1192 = vrot.slane %v1190, 1
        %v1193 = vsel %vm1097, %v1188, %v1192
        %v1195 = vshrl.u32 %v1033, 16
        %v1197 = vshll.u32 %v1033, 16
        %v1199 = vrot.slane %v1197, 1
        %v1200 = vor.u32 %v1195, %v1199
        %v1202 = vshll.u32 %v1087, 16
        %v1204 = vrot.slane %v1202, 1
        %v1205 = vsel %vm1097, %v1200, %v1204
        %v1207 = vshrl.u32 %v1034, 16
        %v1209 = vshll.u32 %v1034, 16
        %v1211 = vrot.slane %v1209, 1
        %v1212 = vor.u32 %v1207, %v1211
        %v1214 = vshll.u32 %v1088, 16
        %v1216 = vrot.slane %v1214, 1
        %v1217 = vsel %vm1097, %v1212, %v1216
        %v1219 = vshrl.u32 %v1035, 16
        %v1221 = vshll.u32 %v1035, 16
        %v1223 = vrot.slane %v1221, 1
        %v1224 = vor.u32 %v1219, %v1223
        %v1226 = vshll.u32 %v1089, 16
        %v1228 = vrot.slane %v1226, 1
        %v1229 = vsel %vm1097, %v1224, %v1228
        %v1231 = vshrl.u32 %v1036, 16
        %v1233 = vshll.u32 %v1036, 16
        %v1235 = vrot.slane %v1233, 1
        %v1236 = vor.u32 %v1231, %v1235
        %v1238 = vshll.u32 %v1090, 16
        %v1240 = vrot.slane %v1238, 1
        %v1241 = vsel %vm1097, %v1236, %v1240
        %v1243 = vshrl.u32 %v1037, 16
        %v1245 = vshll.u32 %v1037, 16
        %v1247 = vrot.slane %v1245, 1
        %v1248 = vor.u32 %v1243, %v1247
        %v1250 = vshll.u32 %v1091, 16
        %v1252 = vrot.slane %v1250, 1
        %v1253 = vsel %vm1097, %v1248, %v1252
        %v1255 = vshrl.u32 %v1038, 16
        %v1257 = vshll.u32 %v1038, 16
        %v1259 = vrot.slane %v1257, 1
        %v1260 = vor.u32 %v1255, %v1259
        %v1262 = vshll.u32 %v1092, 16
        %v1264 = vrot.slane %v1262, 1
        %v1265 = vsel %vm1097, %v1260, %v1264
        %v1267 = vshrl.u32 %v1039, 16
        %v1269 = vshll.u32 %v1039, 16
        %v1271 = vrot.slane %v1269, 1
        %v1272 = vor.u32 %v1267, %v1271
        %v1274 = vshll.u32 %v1093, 16
        %v1276 = vrot.slane %v1274, 1
        %v1277 = vsel %vm1097, %v1272, %v1276
        %v1279 = vshrl.u32 %v1040, 16
        %v1281 = vshll.u32 %v1040, 16
        %v1283 = vrot.slane %v1281, 1
        %v1284 = vor.u32 %v1279, %v1283
        %v1286 = vshll.u32 %v1094, 16
        %v1288 = vrot.slane %v1286, 1
        %v1289 = vsel %vm1097, %v1284, %v1288
        %v1291 = vshrl.u32 %v1041, 16
        %v1293 = vshll.u32 %v1041, 16
        %v1295 = vrot.slane %v1293, 1
        %v1296 = vor.u32 %v1291, %v1295
        %v1298 = vshll.u32 %v1095, 16
        %v1300 = vrot.slane %v1298, 1
        %v1301 = vsel %vm1097, %v1296, %v1300
        %v1303 = vshrl.u32 %v1042, 16
        %v1305 = vshll.u32 %v1042, 16
        %v1307 = vrot.slane %v1305, 1
        %v1308 = vor.u32 %v1303, %v1307
        %v1310 = vshll.u32 %v1096, 16
        %v1312 = vrot.slane %v1310, 1
        %v1313 = vsel %vm1097, %v1308, %v1312
        %1314 = vrot.lane.b32.xlu0 %v1109, 4
        %v1315 = vpop.permute.xlu0 %1314
        %1316 = vrot.lane.b32.xlu0 %v1121, 4
        %v1317 = vpop.permute.xlu0 %1316
        %1318 = vrot.lane.b32.xlu0 %v1133, 4
        %v1319 = vpop.permute.xlu0 %1318
        %1320 = vrot.lane.b32.xlu0 %v1145, 4
        %v1321 = vpop.permute.xlu0 %1320
        %1322 = vrot.lane.b32.xlu0 %v1157, 4
        %v1323 = vpop.permute.xlu0 %1322
        %1324 = vrot.lane.b32.xlu0 %v1169, 4
        %v1325 = vpop.permute.xlu0 %1324
        %1326 = vrot.lane.b32.xlu0 %v1181, 4
        %v1327 = vpop.permute.xlu0 %1326
        %1328 = vrot.lane.b32.xlu0 %v1193, 4
        %v1329 = vpop.permute.xlu0 %1328
        %1330 = vrot.lane.b32.xlu0 %v1205, 4
        %v1331 = vpop.permute.xlu0 %1330
        %1332 = vrot.lane.b32.xlu0 %v1217, 4
        %v1333 = vpop.permute.xlu0 %1332
        %1334 = vrot.lane.b32.xlu0 %v1229, 4
        %v1335 = vpop.permute.xlu0 %1334
        %1336 = vrot.lane.b32.xlu0 %v1241, 4
        %v1337 = vpop.permute.xlu0 %1336
        %1338 = vrot.lane.b32.xlu0 %v1253, 4
        %v1339 = vpop.permute.xlu0 %1338
        %1340 = vrot.lane.b32.xlu0 %v1265, 4
        %v1341 = vpop.permute.xlu0 %1340
        %1342 = vrot.lane.b32.xlu0 %v1277, 4
        %v1343 = vpop.permute.xlu0 %1342
        %1344 = vrot.lane.b32.xlu0 %v1289, 4
        %v1345 = vpop.permute.xlu0 %1344
        %1346 = vrot.lane.b32.xlu0 %v1301, 4
        %v1347 = vpop.permute.xlu0 %1346
        %1348 = vrot.lane.b32.xlu0 %v1313, 4
        %v1349 = vpop.permute.xlu0 %1348
        %v1368 = vunpack.c.l.b16 %v935
        %v1369 = vunpack.c.l.b16 %v936
        %v1370 = vunpack.c.l.b16 %v937
        %v1371 = vunpack.c.l.b16 %v938
        %v1372 = vunpack.c.l.b16 %v939
        %v1373 = vunpack.c.l.b16 %v940
        %v1374 = vunpack.c.l.b16 %v941
        %v1375 = vunpack.c.l.b16 %v942
        %v1376 = vunpack.c.l.b16 %v943
        %v1377 = vunpack.c.l.b16 %v944
        %v1378 = vunpack.c.l.b16 %v945
        %v1379 = vunpack.c.l.b16 %v946
        %v1380 = vunpack.c.l.b16 %v947
        %v1381 = vunpack.c.l.b16 %v948
        %v1382 = vunpack.c.l.b16 %v949
        %v1383 = vunpack.c.l.b16 %v950
        %v1384 = vunpack.c.l.b16 %v951
        %v1385 = vunpack.c.l.b16 %v952
        %v1386 = vpack.c.b16 %v990, %v1368
        %v1387 = vpack.c.b16 %v992, %v1369
        %v1388 = vpack.c.b16 %v994, %v1370
        %v1389 = vpack.c.b16 %v996, %v1371
        %v1390 = vpack.c.b16 %v998, %v1372
        %v1391 = vpack.c.b16 %v1000, %v1373
        %v1392 = vpack.c.b16 %v1002, %v1374
        %v1393 = vpack.c.b16 %v1004, %v1375
        %v1394 = vpack.c.b16 %v1006, %v1376
        %v1395 = vpack.c.b16 %v1008, %v1377
        %v1396 = vpack.c.b16 %v1010, %v1378
        %v1397 = vpack.c.b16 %v1012, %v1379
        %v1398 = vpack.c.b16 %v1014, %v1380
        %v1399 = vpack.c.b16 %v1016, %v1381
        %v1400 = vpack.c.b16 %v1018, %v1382
        %v1401 = vpack.c.b16 %v1020, %v1383
        %v1402 = vpack.c.b16 %v1022, %v1384
        %v1403 = vpack.c.b16 %v1024, %v1385
        %vm1404 = vcmask 1046528
        %v1405 = vrot.slane %v1386, 1
        %v1406 = vrot.slane %v1079, 1
        %v1407 = vsel %vm1404, %v1405, %v1406
        %v1408 = vrot.slane %v1387, 1
        %v1409 = vrot.slane %v1080, 1
        %v1410 = vsel %vm1404, %v1408, %v1409
        %v1411 = vrot.slane %v1388, 1
        %v1412 = vrot.slane %v1081, 1
        %v1413 = vsel %vm1404, %v1411, %v1412
        %v1414 = vrot.slane %v1389, 1
        %v1415 = vrot.slane %v1082, 1
        %v1416 = vsel %vm1404, %v1414, %v1415
        %v1417 = vrot.slane %v1390, 1
        %v1418 = vrot.slane %v1083, 1
        %v1419 = vsel %vm1404, %v1417, %v1418
        %v1420 = vrot.slane %v1391, 1
        %v1421 = vrot.slane %v1084, 1
        %v1422 = vsel %vm1404, %v1420, %v1421
        %v1423 = vrot.slane %v1392, 1
        %v1424 = vrot.slane %v1085, 1
        %v1425 = vsel %vm1404, %v1423, %v1424
        %v1426 = vrot.slane %v1393, 1
        %v1427 = vrot.slane %v1086, 1
        %v1428 = vsel %vm1404, %v1426, %v1427
        %v1429 = vrot.slane %v1394, 1
        %v1430 = vrot.slane %v1087, 1
        %v1431 = vsel %vm1404, %v1429, %v1430
        %v1432 = vrot.slane %v1395, 1
        %v1433 = vrot.slane %v1088, 1
        %v1434 = vsel %vm1404, %v1432, %v1433
        %v1435 = vrot.slane %v1396, 1
        %v1436 = vrot.slane %v1089, 1
        %v1437 = vsel %vm1404, %v1435, %v1436
        %v1438 = vrot.slane %v1397, 1
        %v1439 = vrot.slane %v1090, 1
        %v1440 = vsel %vm1404, %v1438, %v1439
        %v1441 = vrot.slane %v1398, 1
        %v1442 = vrot.slane %v1091, 1
        %v1443 = vsel %vm1404, %v1441, %v1442
        %v1444 = vrot.slane %v1399, 1
        %v1445 = vrot.slane %v1092, 1
        %v1446 = vsel %vm1404, %v1444, %v1445
        %v1447 = vrot.slane %v1400, 1
        %v1448 = vrot.slane %v1093, 1
        %v1449 = vsel %vm1404, %v1447, %v1448
        %v1450 = vrot.slane %v1401, 1
        %v1451 = vrot.slane %v1094, 1
        %v1452 = vsel %vm1404, %v1450, %v1451
        %v1453 = vrot.slane %v1402, 1
        %v1454 = vrot.slane %v1095, 1
        %v1455 = vsel %vm1404, %v1453, %v1454
        %v1456 = vrot.slane %v1403, 1
        %v1457 = vrot.slane %v1096, 1
        %v1458 = vsel %vm1404, %v1456, %v1457
        %1459 = vrot.lane.b32.xlu0 %v1407, 8
        %v1460 = vpop.permute.xlu0 %1459
        %1461 = vrot.lane.b32.xlu0 %v1410, 8
        %v1462 = vpop.permute.xlu0 %1461
        %1463 = vrot.lane.b32.xlu0 %v1413, 8
        %v1464 = vpop.permute.xlu0 %1463
        %1465 = vrot.lane.b32.xlu0 %v1416, 8
        %v1466 = vpop.permute.xlu0 %1465
        %1467 = vrot.lane.b32.xlu0 %v1419, 8
        %v1468 = vpop.permute.xlu0 %1467
        %1469 = vrot.lane.b32.xlu0 %v1422, 8
        %v1470 = vpop.permute.xlu0 %1469
        %1471 = vrot.lane.b32.xlu0 %v1425, 8
        %v1472 = vpop.permute.xlu0 %1471
        %1473 = vrot.lane.b32.xlu0 %v1428, 8
        %v1474 = vpop.permute.xlu0 %1473
        %1475 = vrot.lane.b32.xlu0 %v1431, 8
        %v1476 = vpop.permute.xlu0 %1475
        %1477 = vrot.lane.b32.xlu0 %v1434, 8
        %v1478 = vpop.permute.xlu0 %1477
        %1479 = vrot.lane.b32.xlu0 %v1437, 8
        %v1480 = vpop.permute.xlu0 %1479
        %1481 = vrot.lane.b32.xlu0 %v1440, 8
        %v1482 = vpop.permute.xlu0 %1481
        %1483 = vrot.lane.b32.xlu0 %v1443, 8
        %v1484 = vpop.permute.xlu0 %1483
        %1485 = vrot.lane.b32.xlu0 %v1446, 8
        %v1486 = vpop.permute.xlu0 %1485
        %1487 = vrot.lane.b32.xlu0 %v1449, 8
        %v1488 = vpop.permute.xlu0 %1487
        %1489 = vrot.lane.b32.xlu0 %v1452, 8
        %v1490 = vpop.permute.xlu0 %1489
        %1491 = vrot.lane.b32.xlu0 %v1455, 8
        %v1492 = vpop.permute.xlu0 %1491
        %1493 = vrot.lane.b32.xlu0 %v1458, 8
        %v1494 = vpop.permute.xlu0 %1493
        %vm1495 = vcmask 31744
        %v1497 = vsel %vm1495, %v1025, %v1315
        %v1499 = vsel %vm1495, %v1026, %v1317
        %v1501 = vsel %vm1495, %v1027, %v1319
        %v1503 = vsel %vm1495, %v1028, %v1321
        %v1505 = vsel %vm1495, %v1029, %v1323
        %v1507 = vsel %vm1495, %v1030, %v1325
        %v1509 = vsel %vm1495, %v1031, %v1327
        %v1511 = vsel %vm1495, %v1032, %v1329
        %v1513 = vsel %vm1495, %v1033, %v1331
        %v1515 = vsel %vm1495, %v1034, %v1333
        %v1517 = vsel %vm1495, %v1035, %v1335
        %v1519 = vsel %vm1495, %v1036, %v1337
        %v1521 = vsel %vm1495, %v1037, %v1339
        %v1523 = vsel %vm1495, %v1038, %v1341
        %v1525 = vsel %vm1495, %v1039, %v1343
        %v1527 = vsel %vm1495, %v1040, %v1345
        %v1529 = vsel %vm1495, %v1041, %v1347
        %v1531 = vsel %vm1495, %v1042, %v1349
        %vm1532 = vcmask 64512
        %v1534 = vsel %vm1532, %v1497, %v1460
        %v1536 = vsel %vm1532, %v1499, %v1462
        %v1538 = vsel %vm1532, %v1501, %v1464
        %v1540 = vsel %vm1532, %v1503, %v1466
        %v1542 = vsel %vm1532, %v1505, %v1468
        %v1544 = vsel %vm1532, %v1507, %v1470
        %v1546 = vsel %vm1532, %v1509, %v1472
        %v1548 = vsel %vm1532, %v1511, %v1474
        %v1550 = vsel %vm1532, %v1513, %v1476
        %v1552 = vsel %vm1532, %v1515, %v1478
        %v1554 = vsel %vm1532, %v1517, %v1480
        %v1556 = vsel %vm1532, %v1519, %v1482
        %v1558 = vsel %vm1532, %v1521, %v1484
        %v1560 = vsel %vm1532, %v1523, %v1486
        %v1562 = vsel %vm1532, %v1525, %v1488
        %v1564 = vsel %vm1532, %v1527, %v1490
        %v1566 = vsel %vm1532, %v1529, %v1492
        %v1568 = vsel %vm1532, %v1531, %v1494
        %1585 = vrot.lane.b32.xlu0 %v1536, 12
        %v1586 = vpop.permute.xlu0 %1585
        %1587 = vrot.lane.b32.xlu0 %v1538, 12
        %v1588 = vpop.permute.xlu0 %1587
        %1589 = vrot.lane.b32.xlu0 %v1540, 12
        %v1590 = vpop.permute.xlu0 %1589
        %1591 = vrot.lane.b32.xlu0 %v1542, 12
        %v1592 = vpop.permute.xlu0 %1591
        %1593 = vrot.lane.b32.xlu0 %v1544, 12
        %v1594 = vpop.permute.xlu0 %1593
        %1595 = vrot.lane.b32.xlu0 %v1546, 12
        %v1596 = vpop.permute.xlu0 %1595
        %1597 = vrot.lane.b32.xlu0 %v1548, 12
        %v1598 = vpop.permute.xlu0 %1597
        %1599 = vrot.lane.b32.xlu0 %v1550, 12
        %v1600 = vpop.permute.xlu0 %1599
        %1601 = vrot.lane.b32.xlu0 %v1552, 12
        %v1602 = vpop.permute.xlu0 %1601
        %1603 = vrot.lane.b32.xlu0 %v1554, 12
        %v1604 = vpop.permute.xlu0 %1603
        %1605 = vrot.lane.b32.xlu0 %v1556, 12
        %v1606 = vpop.permute.xlu0 %1605
        %1607 = vrot.lane.b32.xlu0 %v1558, 12
        %v1608 = vpop.permute.xlu0 %1607
        %1609 = vrot.lane.b32.xlu0 %v1560, 12
        %v1610 = vpop.permute.xlu0 %1609
        %1611 = vrot.lane.b32.xlu0 %v1562, 12
        %v1612 = vpop.permute.xlu0 %1611
        %1613 = vrot.lane.b32.xlu0 %v1564, 12
        %v1614 = vpop.permute.xlu0 %1613
        %1615 = vrot.lane.b32.xlu0 %v1566, 12
        %v1616 = vpop.permute.xlu0 %1615
        %1618 = vrot.lane.b32.xlu0 %v1538, 24
        %v1619 = vpop.permute.xlu0 %1618
        %1620 = vrot.lane.b32.xlu0 %v1540, 24
        %v1621 = vpop.permute.xlu0 %1620
        %1622 = vrot.lane.b32.xlu0 %v1542, 24
        %v1623 = vpop.permute.xlu0 %1622
        %1624 = vrot.lane.b32.xlu0 %v1544, 24
        %v1625 = vpop.permute.xlu0 %1624
        %1626 = vrot.lane.b32.xlu0 %v1546, 24
        %v1627 = vpop.permute.xlu0 %1626
        %1628 = vrot.lane.b32.xlu0 %v1548, 24
        %v1629 = vpop.permute.xlu0 %1628
        %1630 = vrot.lane.b32.xlu0 %v1550, 24
        %v1631 = vpop.permute.xlu0 %1630
        %1632 = vrot.lane.b32.xlu0 %v1552, 24
        %v1633 = vpop.permute.xlu0 %1632
        %1634 = vrot.lane.b32.xlu0 %v1554, 24
        %v1635 = vpop.permute.xlu0 %1634
        %1636 = vrot.lane.b32.xlu0 %v1556, 24
        %v1637 = vpop.permute.xlu0 %1636
        %1638 = vrot.lane.b32.xlu0 %v1558, 24
        %v1639 = vpop.permute.xlu0 %1638
        %1640 = vrot.lane.b32.xlu0 %v1560, 24
        %v1641 = vpop.permute.xlu0 %1640
        %1642 = vrot.lane.b32.xlu0 %v1562, 24
        %v1643 = vpop.permute.xlu0 %1642
        %1644 = vrot.lane.b32.xlu0 %v1564, 24
        %v1645 = vpop.permute.xlu0 %1644
        %1646 = vrot.lane.b32.xlu0 %v1566, 24
        %v1647 = vpop.permute.xlu0 %1646
        %1648 = vrot.lane.b32.xlu0 %v1568, 24
        %v1649 = vpop.permute.xlu0 %1648
        %vm1650 = vcmask 97280
        %v1652 = vsel %vm1650, %v1534, %v1586
        %v1654 = vsel %vm1650, %v1536, %v1588
        %v1656 = vsel %vm1650, %v1538, %v1590
        %v1658 = vsel %vm1650, %v1540, %v1592
        %v1660 = vsel %vm1650, %v1542, %v1594
        %v1662 = vsel %vm1650, %v1544, %v1596
        %v1664 = vsel %vm1650, %v1546, %v1598
        %v1666 = vsel %vm1650, %v1548, %v1600
        %v1668 = vsel %vm1650, %v1550, %v1602
        %v1670 = vsel %vm1650, %v1552, %v1604
        %v1672 = vsel %vm1650, %v1554, %v1606
        %v1674 = vsel %vm1650, %v1556, %v1608
        %v1676 = vsel %vm1650, %v1558, %v1610
        %v1678 = vsel %vm1650, %v1560, %v1612
        %v1680 = vsel %vm1650, %v1562, %v1614
        %v1682 = vsel %vm1650, %v1564, %v1616
        %vm1683 = vcmask 195584
        %v1685 = vsel %vm1683, %v1652, %v1619
        %v1687 = vsel %vm1683, %v1654, %v1621
        %v1689 = vsel %vm1683, %v1656, %v1623
        %v1691 = vsel %vm1683, %v1658, %v1625
        %v1693 = vsel %vm1683, %v1660, %v1627
        %v1695 = vsel %vm1683, %v1662, %v1629
        %v1697 = vsel %vm1683, %v1664, %v1631
        %v1699 = vsel %vm1683, %v1666, %v1633
        %v1701 = vsel %vm1683, %v1668, %v1635
        %v1703 = vsel %vm1683, %v1670, %v1637
        %v1705 = vsel %vm1683, %v1672, %v1639
        %v1707 = vsel %vm1683, %v1674, %v1641
        %v1709 = vsel %vm1683, %v1676, %v1643
        %v1711 = vsel %vm1683, %v1678, %v1645
        %v1713 = vsel %vm1683, %v1680, %v1647
        %v1715 = vsel %vm1683, %v1682, %v1649
        %v1716 = vld [vmem:[%s3] sm:$0xf]
        %v1717 = vld [vmem:[%s3 + $0x4] sm:$0xf]
        %v1718 = vld [vmem:[%s3 + $0x8] sm:$0xf]
        %v1719 = vld [vmem:[%s3 + $0xc] sm:$0xf]
        %v1720 = vld [vmem:[%s3 + $0x10] sm:$0x3]
        %v1726 = vunpack.c.l.b16 %v1716
        %v1727 = vunpack.c.l.b16 %v1717
        %v1728 = vunpack.c.l.b16 %v1718
        %v1729 = vunpack.c.l.b16 %v1719
        %v1730 = vunpack.c.l.b16 %v1720
        %v1731 = vpack.c.b16 %v1727, %v1726
        %v1732 = vpack.c.b16 %v1729, %v1728
        %v1733 = vpack.c.b16 %v1730, %v1730
        %vm1736 = vcmask 293888
        %v1737 = vsel %vm1736, %v1685, 0
        %v1739 = vsel %vm1736, %v1687, 0
        %v1741 = vsel %vm1736, %v1689, 0
        %v1743 = vsel %vm1736, %v1691, 0
        %v1745 = vsel %vm1736, %v1693, 0
        %v1747 = vsel %vm1736, %v1695, 0
        %v1749 = vsel %vm1736, %v1697, 0
        %v1751 = vsel %vm1736, %v1699, 0
        %v1753 = vsel %vm1736, %v1701, 0
        %v1755 = vsel %vm1736, %v1703, 0
        %v1757 = vsel %vm1736, %v1705, 0
        %v1759 = vsel %vm1736, %v1707, 0
        %v1761 = vsel %vm1736, %v1709, 0
        %v1763 = vsel %vm1736, %v1711, 0
        %v1765 = vsel %vm1736, %v1713, 0
        %v1767 = vsel %vm1736, %v1715, 0
        %vm1769 = vcmask 1041408
        %v1771 = vsel %vm1769, %v1733, 0
        %1773 = vmatprep.subr.bf16.mxu0 0
        %1774 = vmatpush1.bf16.msra.mxu0 %v1731
        %1775 = vmatprep.subr.bf16.mxu0 0
        %1776 = vmatpush1.bf16.msra.mxu0 %v1732
        %1777 = vmatprep.subr.bf16.mxu0 0
        %1778 = vmatpush1.bf16.msra.mxu0 %v1771
        %1779 = vmatprep.subr.bf16.mxu0 0
        %1780 = vmatpush1.bf16.msra.mxu0 0
        %1781 = vmatprep.subr.bf16.mxu0 0
        %1782 = vmatpush1.bf16.msra.mxu0 0
        %1783 = vmatprep.subr.bf16.mxu0 0
        %1784 = vmatpush1.bf16.msra.mxu0 0
        %1785 = vmatprep.subr.bf16.mxu0 0
        %1786 = vmatpush1.bf16.msra.mxu0 0
        %1787 = vmatprep.subr.bf16.mxu0 0
        %1788 = vmatpush1.bf16.msra.mxu0 0
        %1789 = vmatprep.subr.bf16.mxu0 0
        %1790 = vmatpush1.bf16.msra.mxu0 0
        %1791 = vmatprep.subr.bf16.mxu0 0
        %1792 = vmatpush1.bf16.msra.mxu0 0
        %1793 = vmatprep.subr.bf16.mxu0 0
        %1794 = vmatpush1.bf16.msra.mxu0 0
        %1795 = vmatprep.subr.bf16.mxu0 0
        %1796 = vmatpush1.bf16.msra.mxu0 0
        %1797 = vmatprep.subr.bf16.mxu0 0
        %1798 = vmatpush1.bf16.msra.mxu0 0
        %1799 = vmatprep.subr.bf16.mxu0 0
        %1800 = vmatpush1.bf16.msra.mxu0 0
        %1801 = vmatprep.subr.bf16.mxu0 0
        %1802 = vmatpush1.bf16.msra.mxu0 0
        %1803 = vmatprep.subr.bf16.mxu0 0
        %1804 = vmatpush1.bf16.msra.mxu0 0
        %1805 = vmatprep.mubr.bf16.mxu0 0
        %1806 = vmatmul.mubr.bf16.gmra.mrb[0].mxu0 %v1737
        %v1807 = vpop.f32.mrb[0].mxu0
        %v1808 = vadd.f32 0.0, %v1807
        %v1809 = vpop.f32.mrb[0].mxu0
        %v1810 = vpop.f32.mrb[0].mxu0
        %v1811 = vadd.f32 0.0, %v1810
        %v1812 = vpop.f32.mrb[0].mxu0
        %1813 = vmatprep.mubr.bf16.mxu0 0
        %1814 = vmatmul.mubr.bf16.gmra.mrb[0].mxu0 %v1739
        %v1815 = vpop.f32.mrb[0].mxu0
        %v1816 = vadd.f32 0.0, %v1815
        %v1817 = vpop.f32.mrb[0].mxu0
        %v1818 = vpop.f32.mrb[0].mxu0
        %v1819 = vadd.f32 0.0, %v1818
        %v1820 = vpop.f32.mrb[0].mxu0
        %1821 = vmatprep.mubr.bf16.mxu0 0
        %1822 = vmatmul.mubr.bf16.gmra.mrb[0].mxu0 %v1741
        %v1823 = vpop.f32.mrb[0].mxu0
        %v1824 = vadd.f32 0.0, %v1823
        %v1825 = vpop.f32.mrb[0].mxu0
        %v1826 = vpop.f32.mrb[0].mxu0
        %v1827 = vadd.f32 0.0, %v1826
        %v1828 = vpop.f32.mrb[0].mxu0
        %1829 = vmatprep.mubr.bf16.mxu0 0
        %1830 = vmatmul.mubr.bf16.gmra.mrb[0].mxu0 %v1743
        %v1831 = vpop.f32.mrb[0].mxu0
        %v1832 = vadd.f32 0.0, %v1831
        %v1833 = vpop.f32.mrb[0].mxu0
        %v1834 = vpop.f32.mrb[0].mxu0
        %v1835 = vadd.f32 0.0, %v1834
        %v1836 = vpop.f32.mrb[0].mxu0
        %1837 = vmatprep.mubr.bf16.mxu0 0
        %1838 = vmatmul.mubr.bf16.gmra.mrb[0].mxu0 %v1745
        %v1839 = vpop.f32.mrb[0].mxu0
        %v1840 = vadd.f32 0.0, %v1839
        %v1841 = vpop.f32.mrb[0].mxu0
        %v1842 = vpop.f32.mrb[0].mxu0
        %v1843 = vadd.f32 0.0, %v1842
        %v1844 = vpop.f32.mrb[0].mxu0
        %1845 = vmatprep.mubr.bf16.mxu0 0
        %1846 = vmatmul.mubr.bf16.gmra.mrb[0].mxu0 %v1747
        %v1847 = vpop.f32.mrb[0].mxu0
        %v1848 = vadd.f32 0.0, %v1847
        %v1849 = vpop.f32.mrb[0].mxu0
        %v1850 = vpop.f32.mrb[0].mxu0
        %v1851 = vadd.f32 0.0, %v1850
        %v1852 = vpop.f32.mrb[0].mxu0
        %1853 = vmatprep.mubr.bf16.mxu0 0
        %1854 = vmatmul.mubr.bf16.gmra.mrb[0].mxu0 %v1749
        %v1855 = vpop.f32.mrb[0].mxu0
        %v1856 = vadd.f32 0.0, %v1855
        %v1857 = vpop.f32.mrb[0].mxu0
        %v1858 = vpop.f32.mrb[0].mxu0
        %v1859 = vadd.f32 0.0, %v1858
        %v1860 = vpop.f32.mrb[0].mxu0
        %1861 = vmatprep.mubr.bf16.mxu0 0
        %1862 = vmatmul.mubr.bf16.gmra.mrb[0].mxu0 %v1751
        %v1863 = vpop.f32.mrb[0].mxu0
        %v1864 = vadd.f32 0.0, %v1863
        %v1865 = vpop.f32.mrb[0].mxu0
        %v1866 = vpop.f32.mrb[0].mxu0
        %v1867 = vadd.f32 0.0, %v1866
        %v1868 = vpop.f32.mrb[0].mxu0
        %1869 = vmatprep.mubr.bf16.mxu0 0
        %1870 = vmatmul.mubr.bf16.gmra.mrb[0].mxu0 %v1753
        %v1871 = vpop.f32.mrb[0].mxu0
        %v1872 = vadd.f32 0.0, %v1871
        %v1873 = vpop.f32.mrb[0].mxu0
        %v1874 = vpop.f32.mrb[0].mxu0
        %v1875 = vadd.f32 0.0, %v1874
        %v1876 = vpop.f32.mrb[0].mxu0
        %1877 = vmatprep.mubr.bf16.mxu0 0
        %1878 = vmatmul.mubr.bf16.gmra.mrb[0].mxu0 %v1755
        %v1879 = vpop.f32.mrb[0].mxu0
        %v1880 = vadd.f32 0.0, %v1879
        %v1881 = vpop.f32.mrb[0].mxu0
        %v1882 = vpop.f32.mrb[0].mxu0
        %v1883 = vadd.f32 0.0, %v1882
        %v1884 = vpop.f32.mrb[0].mxu0
        %1885 = vmatprep.mubr.bf16.mxu0 0
        %1886 = vmatmul.mubr.bf16.gmra.mrb[0].mxu0 %v1757
        %v1887 = vpop.f32.mrb[0].mxu0
        %v1888 = vadd.f32 0.0, %v1887
        %v1889 = vpop.f32.mrb[0].mxu0
        %v1890 = vpop.f32.mrb[0].mxu0
        %v1891 = vadd.f32 0.0, %v1890
        %v1892 = vpop.f32.mrb[0].mxu0
        %1893 = vmatprep.mubr.bf16.mxu0 0
        %1894 = vmatmul.mubr.bf16.gmra.mrb[0].mxu0 %v1759
        %v1895 = vpop.f32.mrb[0].mxu0
        %v1896 = vadd.f32 0.0, %v1895
        %v1897 = vpop.f32.mrb[0].mxu0
        %v1898 = vpop.f32.mrb[0].mxu0
        %v1899 = vadd.f32 0.0, %v1898
        %v1900 = vpop.f32.mrb[0].mxu0
        %1901 = vmatprep.mubr.bf16.mxu0 0
        %1902 = vmatmul.mubr.bf16.gmra.mrb[0].mxu0 %v1761
        %v1903 = vpop.f32.mrb[0].mxu0
        %v1904 = vadd.f32 0.0, %v1903
        %v1905 = vpop.f32.mrb[0].mxu0
        %v1906 = vpop.f32.mrb[0].mxu0
        %v1907 = vadd.f32 0.0, %v1906
        %v1908 = vpop.f32.mrb[0].mxu0
        %1909 = vmatprep.mubr.bf16.mxu0 0
        %1910 = vmatmul.mubr.bf16.gmra.mrb[0].mxu0 %v1763
        %v1911 = vpop.f32.mrb[0].mxu0
        %v1912 = vadd.f32 0.0, %v1911
        %v1913 = vpop.f32.mrb[0].mxu0
        %v1914 = vpop.f32.mrb[0].mxu0
        %v1915 = vadd.f32 0.0, %v1914
        %v1916 = vpop.f32.mrb[0].mxu0
        %1917 = vmatprep.mubr.bf16.mxu0 0
        %1918 = vmatmul.mubr.bf16.gmra.mrb[0].mxu0 %v1765
        %v1919 = vpop.f32.mrb[0].mxu0
        %v1920 = vadd.f32 0.0, %v1919
        %v1921 = vpop.f32.mrb[0].mxu0
        %v1922 = vpop.f32.mrb[0].mxu0
        %v1923 = vadd.f32 0.0, %v1922
        %v1924 = vpop.f32.mrb[0].mxu0
        %1925 = vmatprep.mubr.bf16.mxu0 0
        %1926 = vmatmul.mubr.bf16.gmra.mrb[0].mxu0 %v1767
        %v1927 = vpop.f32.mrb[0].mxu0
        %v1928 = vadd.f32 0.0, %v1927
        %v1929 = vpop.f32.mrb[0].mxu0
        %v1930 = vpop.f32.mrb[0].mxu0
        %v1931 = vadd.f32 0.0, %v1930
        %v1932 = vpop.f32.mrb[0].mxu0
        %1933 = vdwg.mxu0
        %v1934 = vld [vmem:[%s4] sm:$0x1]
        %v1936 = vlaneseq
        %v1937 = vshrl.u32 %v1936, 7
        %v1938 = vsub.s32 0, %v1937
        %v1939 = vrot.slane %v1934, %v1938
        %v1941 = vmul.f32 %v1808, %v1939
        %v1942 = vmul.f32 %v1811, %v1939
        %v1943 = vmul.f32 %v1816, %v1939
        %v1944 = vmul.f32 %v1819, %v1939
        %v1945 = vmul.f32 %v1824, %v1939
        %v1946 = vmul.f32 %v1827, %v1939
        %v1947 = vmul.f32 %v1832, %v1939
        %v1948 = vmul.f32 %v1835, %v1939
        %v1949 = vmul.f32 %v1840, %v1939
        %v1950 = vmul.f32 %v1843, %v1939
        %v1951 = vmul.f32 %v1848, %v1939
        %v1952 = vmul.f32 %v1851, %v1939
        %v1953 = vmul.f32 %v1856, %v1939
        %v1954 = vmul.f32 %v1859, %v1939
        %v1955 = vmul.f32 %v1864, %v1939
        %v1956 = vmul.f32 %v1867, %v1939
        %v1957 = vmul.f32 %v1872, %v1939
        %v1958 = vmul.f32 %v1875, %v1939
        %v1959 = vmul.f32 %v1880, %v1939
        %v1960 = vmul.f32 %v1883, %v1939
        %v1961 = vmul.f32 %v1888, %v1939
        %v1962 = vmul.f32 %v1891, %v1939
        %v1963 = vmul.f32 %v1896, %v1939
        %v1964 = vmul.f32 %v1899, %v1939
        %v1965 = vmul.f32 %v1904, %v1939
        %v1966 = vmul.f32 %v1907, %v1939
        %v1967 = vmul.f32 %v1912, %v1939
        %v1968 = vmul.f32 %v1915, %v1939
        %v1969 = vmul.f32 %v1920, %v1939
        %v1970 = vmul.f32 %v1923, %v1939
        %v1971 = vmul.f32 %v1928, %v1939
        %v1972 = vmul.f32 %v1931, %v1939
        %v1973 = vld [vmem:[%s5] sm:$0x1]
        %v1975 = vlaneseq
        %v1976 = vshrl.u32 %v1975, 7
        %v1977 = vsub.s32 0, %v1976
        %v1978 = vrot.slane %v1973, %v1977
        %v1980 = vadd.f32 %v1941, %v1978
        %v1981 = vadd.f32 %v1942, %v1978
        %v1982 = vadd.f32 %v1943, %v1978
        %v1983 = vadd.f32 %v1944, %v1978
        %v1984 = vadd.f32 %v1945, %v1978
        %v1985 = vadd.f32 %v1946, %v1978
        %v1986 = vadd.f32 %v1947, %v1978
        %v1987 = vadd.f32 %v1948, %v1978
        %v1988 = vadd.f32 %v1949, %v1978
        %v1989 = vadd.f32 %v1950, %v1978
        %v1990 = vadd.f32 %v1951, %v1978
        %v1991 = vadd.f32 %v1952, %v1978
        %v1992 = vadd.f32 %v1953, %v1978
        %v1993 = vadd.f32 %v1954, %v1978
        %v1994 = vadd.f32 %v1955, %v1978
        %v1995 = vadd.f32 %v1956, %v1978
        %v1996 = vadd.f32 %v1957, %v1978
        %v1997 = vadd.f32 %v1958, %v1978
        %v1998 = vadd.f32 %v1959, %v1978
        %v1999 = vadd.f32 %v1960, %v1978
        %v2000 = vadd.f32 %v1961, %v1978
        %v2001 = vadd.f32 %v1962, %v1978
        %v2002 = vadd.f32 %v1963, %v1978
        %v2003 = vadd.f32 %v1964, %v1978
        %v2004 = vadd.f32 %v1965, %v1978
        %v2005 = vadd.f32 %v1966, %v1978
        %v2006 = vadd.f32 %v1967, %v1978
        %v2007 = vadd.f32 %v1968, %v1978
        %v2008 = vadd.f32 %v1969, %v1978
        %v2009 = vadd.f32 %v1970, %v1978
        %v2010 = vadd.f32 %v1971, %v1978
        %v2011 = vadd.f32 %v1972, %v1978
        %v2012 = vmax.f32 %v1980, 0.0
        %v2013 = vmax.f32 %v1981, 0.0
        %v2014 = vmax.f32 %v1982, 0.0
        %v2015 = vmax.f32 %v1983, 0.0
        %v2016 = vmax.f32 %v1984, 0.0
        %v2017 = vmax.f32 %v1985, 0.0
        %v2018 = vmax.f32 %v1986, 0.0
        %v2019 = vmax.f32 %v1987, 0.0
        %v2020 = vmax.f32 %v1988, 0.0
        %v2021 = vmax.f32 %v1989, 0.0
        %v2022 = vmax.f32 %v1990, 0.0
        %v2023 = vmax.f32 %v1991, 0.0
        %v2024 = vmax.f32 %v1992, 0.0
        %v2025 = vmax.f32 %v1993, 0.0
        %v2026 = vmax.f32 %v1994, 0.0
        %v2027 = vmax.f32 %v1995, 0.0
        %v2028 = vmax.f32 %v1996, 0.0
        %v2029 = vmax.f32 %v1997, 0.0
        %v2030 = vmax.f32 %v1998, 0.0
        %v2031 = vmax.f32 %v1999, 0.0
        %v2032 = vmax.f32 %v2000, 0.0
        %v2033 = vmax.f32 %v2001, 0.0
        %v2034 = vmax.f32 %v2002, 0.0
        %v2035 = vmax.f32 %v2003, 0.0
        %v2036 = vmax.f32 %v2004, 0.0
        %v2037 = vmax.f32 %v2005, 0.0
        %v2038 = vmax.f32 %v2006, 0.0
        %v2039 = vmax.f32 %v2007, 0.0
        %v2040 = vmax.f32 %v2008, 0.0
        %v2041 = vmax.f32 %v2009, 0.0
        %v2042 = vmax.f32 %v2010, 0.0
        %v2043 = vmax.f32 %v2011, 0.0
        %v2044 = vpack.c.bf16 %v2013, %v2012
        %v2045 = vpack.c.bf16 %v2015, %v2014
        %v2046 = vpack.c.bf16 %v2017, %v2016
        %v2047 = vpack.c.bf16 %v2019, %v2018
        %v2048 = vpack.c.bf16 %v2021, %v2020
        %v2049 = vpack.c.bf16 %v2023, %v2022
        %v2050 = vpack.c.bf16 %v2025, %v2024
        %v2051 = vpack.c.bf16 %v2027, %v2026
        %v2052 = vpack.c.bf16 %v2029, %v2028
        %v2053 = vpack.c.bf16 %v2031, %v2030
        %v2054 = vpack.c.bf16 %v2033, %v2032
        %v2055 = vpack.c.bf16 %v2035, %v2034
        %v2056 = vpack.c.bf16 %v2037, %v2036
        %v2057 = vpack.c.bf16 %v2039, %v2038
        %v2058 = vpack.c.bf16 %v2041, %v2040
        %v2059 = vpack.c.bf16 %v2043, %v2042
        %v2061 = vshrl.u32 %v2044, 16
        %v2063 = vrot.slane %v2061, 7
        %v2064 = vshll.u32 %v2044, 16
        %v2066 = vor.u32 %v2063, %v2064
        %v2068 = vshrl.u32 %v2045, 16
        %v2070 = vrot.slane %v2068, 7
        %v2071 = vshll.u32 %v2045, 16
        %v2073 = vor.u32 %v2070, %v2071
        %v2075 = vshrl.u32 %v2046, 16
        %v2077 = vrot.slane %v2075, 7
        %v2078 = vshll.u32 %v2046, 16
        %v2080 = vor.u32 %v2077, %v2078
        %v2082 = vshrl.u32 %v2047, 16
        %v2084 = vrot.slane %v2082, 7
        %v2085 = vshll.u32 %v2047, 16
        %v2087 = vor.u32 %v2084, %v2085
        %v2089 = vshrl.u32 %v2048, 16
        %v2091 = vrot.slane %v2089, 7
        %v2092 = vshll.u32 %v2048, 16
        %v2094 = vor.u32 %v2091, %v2092
        %v2096 = vshrl.u32 %v2049, 16
        %v2098 = vrot.slane %v2096, 7
        %v2099 = vshll.u32 %v2049, 16
        %v2101 = vor.u32 %v2098, %v2099
        %v2103 = vshrl.u32 %v2050, 16
        %v2105 = vrot.slane %v2103, 7
        %v2106 = vshll.u32 %v2050, 16
        %v2108 = vor.u32 %v2105, %v2106
        %v2110 = vshrl.u32 %v2051, 16
        %v2112 = vrot.slane %v2110, 7
        %v2113 = vshll.u32 %v2051, 16
        %v2115 = vor.u32 %v2112, %v2113
        %v2117 = vshrl.u32 %v2052, 16
        %v2119 = vrot.slane %v2117, 7
        %v2120 = vshll.u32 %v2052, 16
        %v2122 = vor.u32 %v2119, %v2120
        %v2124 = vshrl.u32 %v2053, 16
        %v2126 = vrot.slane %v2124, 7
        %v2127 = vshll.u32 %v2053, 16
        %v2129 = vor.u32 %v2126, %v2127
        %v2131 = vshrl.u32 %v2054, 16
        %v2133 = vrot.slane %v2131, 7
        %v2134 = vshll.u32 %v2054, 16
        %v2136 = vor.u32 %v2133, %v2134
        %v2138 = vshrl.u32 %v2055, 16
        %v2140 = vrot.slane %v2138, 7
        %v2141 = vshll.u32 %v2055, 16
        %v2143 = vor.u32 %v2140, %v2141
        %v2145 = vshrl.u32 %v2056, 16
        %v2147 = vrot.slane %v2145, 7
        %v2148 = vshll.u32 %v2056, 16
        %v2150 = vor.u32 %v2147, %v2148
        %v2152 = vshrl.u32 %v2057, 16
        %v2154 = vrot.slane %v2152, 7
        %v2155 = vshll.u32 %v2057, 16
        %v2157 = vor.u32 %v2154, %v2155
        %v2159 = vshrl.u32 %v2058, 16
        %v2161 = vrot.slane %v2159, 7
        %v2162 = vshll.u32 %v2058, 16
        %v2164 = vor.u32 %v2161, %v2162
        %v2166 = vshrl.u32 %v2059, 16
        %v2168 = vrot.slane %v2166, 7
        %v2169 = vshll.u32 %v2059, 16
        %v2171 = vor.u32 %v2168, %v2169
        %v2204 = vsel %vm609, 0, %v2066
        %v2205 = vsel %vm609, 0, %v2073
        %v2206 = vsel %vm609, 0, %v2080
        %v2207 = vsel %vm609, 0, %v2087
        %v2208 = vsel %vm609, 0, %v2094
        %v2209 = vsel %vm609, 0, %v2101
        %v2210 = vsel %vm609, 0, %v2108
        %v2211 = vsel %vm609, 0, %v2115
        %v2212 = vsel %vm609, 0, %v2122
        %v2213 = vsel %vm609, 0, %v2129
        %v2214 = vsel %vm609, 0, %v2136
        %v2215 = vsel %vm609, 0, %v2143
        %v2216 = vsel %vm609, 0, %v2150
        %v2217 = vsel %vm609, 0, %v2157
        %v2218 = vsel %vm609, 0, %v2164
        %v2219 = vsel %vm609, 0, %v2171
        %v2220 = vsel %vm609, %v2063, 0
        %v2221 = vsel %vm609, %v2070, 0
        %v2222 = vsel %vm609, %v2077, 0
        %v2223 = vsel %vm609, %v2084, 0
        %v2224 = vsel %vm609, %v2091, 0
        %v2225 = vsel %vm609, %v2098, 0
        %v2226 = vsel %vm609, %v2105, 0
        %v2227 = vsel %vm609, %v2112, 0
        %v2228 = vsel %vm609, %v2119, 0
        %v2229 = vsel %vm609, %v2126, 0
        %v2230 = vsel %vm609, %v2133, 0
        %v2231 = vsel %vm609, %v2140, 0
        %v2232 = vsel %vm609, %v2147, 0
        %v2233 = vsel %vm609, %v2154, 0
        %v2234 = vsel %vm609, %v2161, 0
        %v2235 = vsel %vm609, %v2168, 0
        %v2268 = vunpack.c.l.b16 %v2204
        %v2269 = vunpack.c.h.b16 %v2204
        %v2270 = vunpack.c.l.b16 %v2220
        %v2271 = vunpack.c.l.b16 %v2205
        %v2272 = vunpack.c.h.b16 %v2205
        %v2273 = vunpack.c.l.b16 %v2221
        %v2274 = vunpack.c.l.b16 %v2206
        %v2275 = vunpack.c.h.b16 %v2206
        %v2276 = vunpack.c.l.b16 %v2222
        %v2277 = vunpack.c.l.b16 %v2207
        %v2278 = vunpack.c.h.b16 %v2207
        %v2279 = vunpack.c.l.b16 %v2223
        %v2280 = vunpack.c.l.b16 %v2208
        %v2281 = vunpack.c.h.b16 %v2208
        %v2282 = vunpack.c.l.b16 %v2224
        %v2283 = vunpack.c.l.b16 %v2209
        %v2284 = vunpack.c.h.b16 %v2209
        %v2285 = vunpack.c.l.b16 %v2225
        %v2286 = vunpack.c.l.b16 %v2210
        %v2287 = vunpack.c.h.b16 %v2210
        %v2288 = vunpack.c.l.b16 %v2226
        %v2289 = vunpack.c.l.b16 %v2211
        %v2290 = vunpack.c.h.b16 %v2211
        %v2291 = vunpack.c.l.b16 %v2227
        %v2292 = vunpack.c.l.b16 %v2212
        %v2293 = vunpack.c.h.b16 %v2212
        %v2294 = vunpack.c.l.b16 %v2228
        %v2295 = vunpack.c.l.b16 %v2213
        %v2296 = vunpack.c.h.b16 %v2213
        %v2297 = vunpack.c.l.b16 %v2229
        %v2298 = vunpack.c.l.b16 %v2214
        %v2299 = vunpack.c.h.b16 %v2214
        %v2300 = vunpack.c.l.b16 %v2230
        %v2301 = vunpack.c.l.b16 %v2215
        %v2302 = vunpack.c.h.b16 %v2215
        %v2303 = vunpack.c.l.b16 %v2231
        %v2304 = vunpack.c.l.b16 %v2216
        %v2305 = vunpack.c.h.b16 %v2216
        %v2306 = vunpack.c.l.b16 %v2232
        %v2307 = vunpack.c.l.b16 %v2217
        %v2308 = vunpack.c.h.b16 %v2217
        %v2309 = vunpack.c.l.b16 %v2233
        %v2310 = vunpack.c.l.b16 %v2218
        %v2311 = vunpack.c.h.b16 %v2218
        %v2312 = vunpack.c.l.b16 %v2234
        %v2313 = vunpack.c.l.b16 %v2219
        %v2314 = vunpack.c.h.b16 %v2219
        %v2315 = vunpack.c.l.b16 %v2235
        %v2316 = vpack.c.b16 %v2268, %v2268
        %v2317 = vpack.c.b16 %v2269, %v2269
        %v2318 = vpack.c.b16 %v2270, %v2270
        %v2319 = vpack.c.b16 %v2271, %v2271
        %v2320 = vpack.c.b16 %v2272, %v2272
        %v2321 = vpack.c.b16 %v2273, %v2273
        %v2322 = vpack.c.b16 %v2274, %v2274
        %v2323 = vpack.c.b16 %v2275, %v2275
        %v2324 = vpack.c.b16 %v2276, %v2276
        %v2325 = vpack.c.b16 %v2277, %v2277
        %v2326 = vpack.c.b16 %v2278, %v2278
        %v2327 = vpack.c.b16 %v2279, %v2279
        %v2328 = vpack.c.b16 %v2280, %v2280
        %v2329 = vpack.c.b16 %v2281, %v2281
        %v2330 = vpack.c.b16 %v2282, %v2282
        %v2331 = vpack.c.b16 %v2283, %v2283
        %v2332 = vpack.c.b16 %v2284, %v2284
        %v2333 = vpack.c.b16 %v2285, %v2285
        %v2334 = vpack.c.b16 %v2286, %v2286
        %v2335 = vpack.c.b16 %v2287, %v2287
        %v2336 = vpack.c.b16 %v2288, %v2288
        %v2337 = vpack.c.b16 %v2289, %v2289
        %v2338 = vpack.c.b16 %v2290, %v2290
        %v2339 = vpack.c.b16 %v2291, %v2291
        %v2340 = vpack.c.b16 %v2292, %v2292
        %v2341 = vpack.c.b16 %v2293, %v2293
        %v2342 = vpack.c.b16 %v2294, %v2294
        %v2343 = vpack.c.b16 %v2295, %v2295
        %v2344 = vpack.c.b16 %v2296, %v2296
        %v2345 = vpack.c.b16 %v2297, %v2297
        %v2346 = vpack.c.b16 %v2298, %v2298
        %v2347 = vpack.c.b16 %v2299, %v2299
        %v2348 = vpack.c.b16 %v2300, %v2300
        %v2349 = vpack.c.b16 %v2301, %v2301
        %v2350 = vpack.c.b16 %v2302, %v2302
        %v2351 = vpack.c.b16 %v2303, %v2303
        %v2352 = vpack.c.b16 %v2304, %v2304
        %v2353 = vpack.c.b16 %v2305, %v2305
        %v2354 = vpack.c.b16 %v2306, %v2306
        %v2355 = vpack.c.b16 %v2307, %v2307
        %v2356 = vpack.c.b16 %v2308, %v2308
        %v2357 = vpack.c.b16 %v2309, %v2309
        %v2358 = vpack.c.b16 %v2310, %v2310
        %v2359 = vpack.c.b16 %v2311, %v2311
        %v2360 = vpack.c.b16 %v2312, %v2312
        %v2361 = vpack.c.b16 %v2313, %v2313
        %v2362 = vpack.c.b16 %v2314, %v2314
        %v2363 = vpack.c.b16 %v2315, %v2315
        %vm2412 = vcmask 60416
        %2413 = vst.msk [vmem:[#allocation3] sm:$0xf] %vm2412, %v725
        %2414 = vst.msk [vmem:[#allocation3 + $0x4] sm:$0xf] %vm2412, %v726
        %vm2415 = vcmask 57344
        %2416 = vst.msk [vmem:[#allocation3 + $0x8] sm:$0x1] %vm2415, %v725
        %2417 = vst.msk [vmem:[#allocation3 + $0xc] sm:$0xf] %vm2412, %v2316
        %2418 = vst.msk [vmem:[#allocation3 + $0x10] sm:$0xf] %vm2412, %v2317
        %2419 = vst.msk [vmem:[#allocation3 + $0x14] sm:$0x1] %vm2415, %v2318
        %2420 = vst.msk [vmem:[#allocation3 + $0x18] sm:$0xf] %vm2412, %v2319
        %2421 = vst.msk [vmem:[#allocation3 + $0x1c] sm:$0xf] %vm2412, %v2320
        %2422 = vst.msk [vmem:[#allocation3 + $0x20] sm:$0x1] %vm2415, %v2321
        %2423 = vst.msk [vmem:[#allocation3 + $0x24] sm:$0xf] %vm2412, %v2322
        %2424 = vst.msk [vmem:[#allocation3 + $0x28] sm:$0xf] %vm2412, %v2323
        %2425 = vst.msk [vmem:[#allocation3 + $0x2c] sm:$0x1] %vm2415, %v2324
        %2426 = vst.msk [vmem:[#allocation3 + $0x30] sm:$0xf] %vm2412, %v2325
        %2427 = vst.msk [vmem:[#allocation3 + $0x34] sm:$0xf] %vm2412, %v2326
        %2428 = vst.msk [vmem:[#allocation3 + $0x38] sm:$0x1] %vm2415, %v2327
        %2429 = vst.msk [vmem:[#allocation3 + $0x3c] sm:$0xf] %vm2412, %v2328
        %2430 = vst.msk [vmem:[#allocation3 + $0x40] sm:$0xf] %vm2412, %v2329
        %2431 = vst.msk [vmem:[#allocation3 + $0x44] sm:$0x1] %vm2415, %v2330
        %2432 = vst.msk [vmem:[#allocation3 + $0x48] sm:$0xf] %vm2412, %v2331
        %2433 = vst.msk [vmem:[#allocation3 + $0x4c] sm:$0xf] %vm2412, %v2332
        %2434 = vst.msk [vmem:[#allocation3 + $0x50] sm:$0x1] %vm2415, %v2333
        %2435 = vst.msk [vmem:[#allocation3 + $0x54] sm:$0xf] %vm2412, %v2334
        %2436 = vst.msk [vmem:[#allocation3 + $0x58] sm:$0xf] %vm2412, %v2335
        %2437 = vst.msk [vmem:[#allocation3 + $0x5c] sm:$0x1] %vm2415, %v2336
        %2438 = vst.msk [vmem:[#allocation3 + $0x60] sm:$0xf] %vm2412, %v2337
        %2439 = vst.msk [vmem:[#allocation3 + $0x64] sm:$0xf] %vm2412, %v2338
        %2440 = vst.msk [vmem:[#allocation3 + $0x68] sm:$0x1] %vm2415, %v2339
        %2441 = vst.msk [vmem:[#allocation3 + $0x6c] sm:$0xf] %vm2412, %v2340
        %2442 = vst.msk [vmem:[#allocation3 + $0x70] sm:$0xf] %vm2412, %v2341
        %2443 = vst.msk [vmem:[#allocation3 + $0x74] sm:$0x1] %vm2415, %v2342
        %2444 = vst.msk [vmem:[#allocation3 + $0x78] sm:$0xf] %vm2412, %v2343
        %2445 = vst.msk [vmem:[#allocation3 + $0x7c] sm:$0xf] %vm2412, %v2344
        %2446 = vst.msk [vmem:[#allocation3 + $0x80] sm:$0x1] %vm2415, %v2345
        %2447 = vst.msk [vmem:[#allocation3 + $0x84] sm:$0xf] %vm2412, %v2346
        %2448 = vst.msk [vmem:[#allocation3 + $0x88] sm:$0xf] %vm2412, %v2347
        %2449 = vst.msk [vmem:[#allocation3 + $0x8c] sm:$0x1] %vm2415, %v2348
        %2450 = vst.msk [vmem:[#allocation3 + $0x90] sm:$0xf] %vm2412, %v2349
        %2451 = vst.msk [vmem:[#allocation3 + $0x94] sm:$0xf] %vm2412, %v2350
        %2452 = vst.msk [vmem:[#allocation3 + $0x98] sm:$0x1] %vm2415, %v2351
        %2453 = vst.msk [vmem:[#allocation3 + $0x9c] sm:$0xf] %vm2412, %v2352
        %2454 = vst.msk [vmem:[#allocation3 + $0xa0] sm:$0xf] %vm2412, %v2353
        %2455 = vst.msk [vmem:[#allocation3 + $0xa4] sm:$0x1] %vm2415, %v2354
        %2456 = vst.msk [vmem:[#allocation3 + $0xa8] sm:$0xf] %vm2412, %v2355
        %2457 = vst.msk [vmem:[#allocation3 + $0xac] sm:$0xf] %vm2412, %v2356
        %2458 = vst.msk [vmem:[#allocation3 + $0xb0] sm:$0x1] %vm2415, %v2357
        %2459 = vst.msk [vmem:[#allocation3 + $0xb4] sm:$0xf] %vm2412, %v2358
        %2460 = vst.msk [vmem:[#allocation3 + $0xb8] sm:$0xf] %vm2412, %v2359
        %2461 = vst.msk [vmem:[#allocation3 + $0xbc] sm:$0x1] %vm2415, %v2360
        %2462 = vst.msk [vmem:[#allocation3 + $0xc0] sm:$0xf] %vm2412, %v2361
        %2463 = vst.msk [vmem:[#allocation3 + $0xc4] sm:$0xf] %vm2412, %v2362
        %2464 = vst.msk [vmem:[#allocation3 + $0xc8] sm:$0x1] %vm2415, %v2363
        %2465 = vst.msk [vmem:[#allocation3 + $0xcc] sm:$0xf] %vm2412, %v725
        %2466 = vst.msk [vmem:[#allocation3 + $0xd0] sm:$0xf] %vm2412, %v726
        %2467 = vst.msk [vmem:[#allocation3 + $0xd4] sm:$0x1] %vm2415, %v725
        %v2468 = vld [vmem:[#allocation3] sm:$0xf]
        %v2469 = vld [vmem:[#allocation3 + $0x4] sm:$0xf]
        %v2470 = vld [vmem:[#allocation3 + $0xc] sm:$0xf]
        %v2471 = vld [vmem:[#allocation3 + $0x10] sm:$0xf]
        %v2472 = vld [vmem:[#allocation3 + $0x18] sm:$0xf]
        %v2473 = vld [vmem:[#allocation3 + $0x1c] sm:$0xf]
        %v2474 = vld [vmem:[#allocation3 + $0x24] sm:$0xf]
        %v2475 = vld [vmem:[#allocation3 + $0x28] sm:$0xf]
        %v2476 = vld [vmem:[#allocation3 + $0x30] sm:$0xf]
        %v2477 = vld [vmem:[#allocation3 + $0x34] sm:$0xf]
        %v2478 = vld [vmem:[#allocation3 + $0x3c] sm:$0xf]
        %v2479 = vld [vmem:[#allocation3 + $0x40] sm:$0xf]
        %v2480 = vld [vmem:[#allocation3 + $0x48] sm:$0xf]
        %v2481 = vld [vmem:[#allocation3 + $0x4c] sm:$0xf]
        %v2482 = vld [vmem:[#allocation3 + $0x54] sm:$0xf]
        %v2483 = vld [vmem:[#allocation3 + $0x58] sm:$0xf]
        %v2484 = vld [vmem:[#allocation3 + $0x60] sm:$0xf]
        %v2485 = vld [vmem:[#allocation3 + $0x64] sm:$0xf]
        %v2486 = vld [vmem:[#allocation3 + $0x6c] sm:$0xf]
        %v2487 = vld [vmem:[#allocation3 + $0x70] sm:$0xf]
        %v2488 = vld [vmem:[#allocation3 + $0x78] sm:$0xf]
        %v2489 = vld [vmem:[#allocation3 + $0x7c] sm:$0xf]
        %v2490 = vld [vmem:[#allocation3 + $0x84] sm:$0xf]
        %v2491 = vld [vmem:[#allocation3 + $0x88] sm:$0xf]
        %v2492 = vld [vmem:[#allocation3 + $0x90] sm:$0xf]
        %v2493 = vld [vmem:[#allocation3 + $0x94] sm:$0xf]
        %v2494 = vld [vmem:[#allocation3 + $0x9c] sm:$0xf]
        %v2495 = vld [vmem:[#allocation3 + $0xa0] sm:$0xf]
        %v2496 = vld [vmem:[#allocation3 + $0xa8] sm:$0xf]
        %v2497 = vld [vmem:[#allocation3 + $0xac] sm:$0xf]
        %v2498 = vld [vmem:[#allocation3 + $0xb4] sm:$0xf]
        %v2499 = vld [vmem:[#allocation3 + $0xb8] sm:$0xf]
        %v2500 = vld [vmem:[#allocation3 + $0xc0] sm:$0xf]
        %v2501 = vld [vmem:[#allocation3 + $0xc4] sm:$0xf]
        %v2502 = vld [vmem:[#allocation3 + $0xcc] sm:$0xf]
        %v2503 = vld [vmem:[#allocation3 + $0xd0] sm:$0xf]
        %v2504 = vld [vmem:[#allocation3 + $0x8] sm:$0x1]
        %v2505 = vld [vmem:[#allocation3 + $0x14] sm:$0x1]
        %v2506 = vld [vmem:[#allocation3 + $0x20] sm:$0x1]
        %v2507 = vld [vmem:[#allocation3 + $0x2c] sm:$0x1]
        %v2508 = vld [vmem:[#allocation3 + $0x38] sm:$0x1]
        %v2509 = vld [vmem:[#allocation3 + $0x44] sm:$0x1]
        %v2510 = vld [vmem:[#allocation3 + $0x50] sm:$0x1]
        %v2511 = vld [vmem:[#allocation3 + $0x5c] sm:$0x1]
        %v2512 = vld [vmem:[#allocation3 + $0x68] sm:$0x1]
        %v2513 = vld [vmem:[#allocation3 + $0x74] sm:$0x1]
        %v2514 = vld [vmem:[#allocation3 + $0x80] sm:$0x1]
        %v2515 = vld [vmem:[#allocation3 + $0x8c] sm:$0x1]
        %v2516 = vld [vmem:[#allocation3 + $0x98] sm:$0x1]
        %v2517 = vld [vmem:[#allocation3 + $0xa4] sm:$0x1]
        %v2518 = vld [vmem:[#allocation3 + $0xb0] sm:$0x1]
        %v2519 = vld [vmem:[#allocation3 + $0xbc] sm:$0x1]
        %v2520 = vld [vmem:[#allocation3 + $0xc8] sm:$0x1]
        %v2521 = vld [vmem:[#allocation3 + $0xd4] sm:$0x1]
        %v2522 = vld [vmem:[#allocation3] sm:$0xe]
        %v2523 = vld [vmem:[#allocation3 + $0xc] sm:$0xe]
        %v2524 = vld [vmem:[#allocation3 + $0x18] sm:$0xe]
        %v2525 = vld [vmem:[#allocation3 + $0x24] sm:$0xe]
        %v2526 = vld [vmem:[#allocation3 + $0x30] sm:$0xe]
        %v2527 = vld [vmem:[#allocation3 + $0x3c] sm:$0xe]
        %v2528 = vld [vmem:[#allocation3 + $0x48] sm:$0xe]
        %v2529 = vld [vmem:[#allocation3 + $0x54] sm:$0xe]
        %v2530 = vld [vmem:[#allocation3 + $0x60] sm:$0xe]
        %v2531 = vld [vmem:[#allocation3 + $0x6c] sm:$0xe]
        %v2532 = vld [vmem:[#allocation3 + $0x78] sm:$0xe]
        %v2533 = vld [vmem:[#allocation3 + $0x84] sm:$0xe]
        %v2534 = vld [vmem:[#allocation3 + $0x90] sm:$0xe]
        %v2535 = vld [vmem:[#allocation3 + $0x9c] sm:$0xe]
        %v2536 = vld [vmem:[#allocation3 + $0xa8] sm:$0xe]
        %v2537 = vld [vmem:[#allocation3 + $0xb4] sm:$0xe]
        %v2538 = vld [vmem:[#allocation3 + $0xc0] sm:$0xe]
        %v2539 = vld [vmem:[#allocation3 + $0xcc] sm:$0xe]
        %v2576 = vunpack.c.l.b16 %v2468
        %v2577 = vunpack.c.l.b16 %v2469
        %v2578 = vunpack.c.l.b16 %v2470
        %v2579 = vunpack.c.l.b16 %v2471
        %v2580 = vunpack.c.l.b16 %v2472
        %v2581 = vunpack.c.l.b16 %v2473
        %v2582 = vunpack.c.l.b16 %v2474
        %v2583 = vunpack.c.l.b16 %v2475
        %v2584 = vunpack.c.l.b16 %v2476
        %v2585 = vunpack.c.l.b16 %v2477
        %v2586 = vunpack.c.l.b16 %v2478
        %v2587 = vunpack.c.l.b16 %v2479
        %v2588 = vunpack.c.l.b16 %v2480
        %v2589 = vunpack.c.l.b16 %v2481
        %v2590 = vunpack.c.l.b16 %v2482
        %v2591 = vunpack.c.l.b16 %v2483
        %v2592 = vunpack.c.l.b16 %v2484
        %v2593 = vunpack.c.l.b16 %v2485
        %v2594 = vunpack.c.l.b16 %v2486
        %v2595 = vunpack.c.l.b16 %v2487
        %v2596 = vunpack.c.l.b16 %v2488
        %v2597 = vunpack.c.l.b16 %v2489
        %v2598 = vunpack.c.l.b16 %v2490
        %v2599 = vunpack.c.l.b16 %v2491
        %v2600 = vunpack.c.l.b16 %v2492
        %v2601 = vunpack.c.l.b16 %v2493
        %v2602 = vunpack.c.l.b16 %v2494
        %v2603 = vunpack.c.l.b16 %v2495
        %v2604 = vunpack.c.l.b16 %v2496
        %v2605 = vunpack.c.l.b16 %v2497
        %v2606 = vunpack.c.l.b16 %v2498
        %v2607 = vunpack.c.l.b16 %v2499
        %v2608 = vunpack.c.l.b16 %v2500
        %v2609 = vunpack.c.l.b16 %v2501
        %v2610 = vunpack.c.l.b16 %v2502
        %v2611 = vunpack.c.l.b16 %v2503
        %v2612 = vpack.c.b16 %v2577, %v2576
        %v2613 = vpack.c.b16 %v2579, %v2578
        %v2614 = vpack.c.b16 %v2581, %v2580
        %v2615 = vpack.c.b16 %v2583, %v2582
        %v2616 = vpack.c.b16 %v2585, %v2584
        %v2617 = vpack.c.b16 %v2587, %v2586
        %v2618 = vpack.c.b16 %v2589, %v2588
        %v2619 = vpack.c.b16 %v2591, %v2590
        %v2620 = vpack.c.b16 %v2593, %v2592
        %v2621 = vpack.c.b16 %v2595, %v2594
        %v2622 = vpack.c.b16 %v2597, %v2596
        %v2623 = vpack.c.b16 %v2599, %v2598
        %v2624 = vpack.c.b16 %v2601, %v2600
        %v2625 = vpack.c.b16 %v2603, %v2602
        %v2626 = vpack.c.b16 %v2605, %v2604
        %v2627 = vpack.c.b16 %v2607, %v2606
        %v2628 = vpack.c.b16 %v2609, %v2608
        %v2629 = vpack.c.b16 %v2611, %v2610
        %v2648 = vunpack.c.l.b16 %v2504
        %v2649 = vunpack.c.l.b16 %v2505
        %v2650 = vunpack.c.l.b16 %v2506
        %v2651 = vunpack.c.l.b16 %v2507
        %v2652 = vunpack.c.l.b16 %v2508
        %v2653 = vunpack.c.l.b16 %v2509
        %v2654 = vunpack.c.l.b16 %v2510
        %v2655 = vunpack.c.l.b16 %v2511
        %v2656 = vunpack.c.l.b16 %v2512
        %v2657 = vunpack.c.l.b16 %v2513
        %v2658 = vunpack.c.l.b16 %v2514
        %v2659 = vunpack.c.l.b16 %v2515
        %v2660 = vunpack.c.l.b16 %v2516
        %v2661 = vunpack.c.l.b16 %v2517
        %v2662 = vunpack.c.l.b16 %v2518
        %v2663 = vunpack.c.l.b16 %v2519
        %v2664 = vunpack.c.l.b16 %v2520
        %v2665 = vunpack.c.l.b16 %v2521
        %v2666 = vpack.c.b16 %v2648, %v2648
        %v2667 = vpack.c.b16 %v2649, %v2649
        %v2668 = vpack.c.b16 %v2650, %v2650
        %v2669 = vpack.c.b16 %v2651, %v2651
        %v2670 = vpack.c.b16 %v2652, %v2652
        %v2671 = vpack.c.b16 %v2653, %v2653
        %v2672 = vpack.c.b16 %v2654, %v2654
        %v2673 = vpack.c.b16 %v2655, %v2655
        %v2674 = vpack.c.b16 %v2656, %v2656
        %v2675 = vpack.c.b16 %v2657, %v2657
        %v2676 = vpack.c.b16 %v2658, %v2658
        %v2677 = vpack.c.b16 %v2659, %v2659
        %v2678 = vpack.c.b16 %v2660, %v2660
        %v2679 = vpack.c.b16 %v2661, %v2661
        %v2680 = vpack.c.b16 %v2662, %v2662
        %v2681 = vpack.c.b16 %v2663, %v2663
        %v2682 = vpack.c.b16 %v2664, %v2664
        %v2683 = vpack.c.b16 %v2665, %v2665
        %v2685 = vshrl.u32 %v2612, 16
        %v2687 = vshll.u32 %v2612, 16
        %v2689 = vrot.slane %v2687, 1
        %v2690 = vor.u32 %v2685, %v2689
        %v2692 = vshll.u32 %v2666, 16
        %v2694 = vrot.slane %v2692, 1
        %v2695 = vsel %vm1097, %v2690, %v2694
        %v2697 = vshrl.u32 %v2613, 16
        %v2699 = vshll.u32 %v2613, 16
        %v2701 = vrot.slane %v2699, 1
        %v2702 = vor.u32 %v2697, %v2701
        %v2704 = vshll.u32 %v2667, 16
        %v2706 = vrot.slane %v2704, 1
        %v2707 = vsel %vm1097, %v2702, %v2706
        %v2709 = vshrl.u32 %v2614, 16
        %v2711 = vshll.u32 %v2614, 16
        %v2713 = vrot.slane %v2711, 1
        %v2714 = vor.u32 %v2709, %v2713
        %v2716 = vshll.u32 %v2668, 16
        %v2718 = vrot.slane %v2716, 1
        %v2719 = vsel %vm1097, %v2714, %v2718
        %v2721 = vshrl.u32 %v2615, 16
        %v2723 = vshll.u32 %v2615, 16
        %v2725 = vrot.slane %v2723, 1
        %v2726 = vor.u32 %v2721, %v2725
        %v2728 = vshll.u32 %v2669, 16
        %v2730 = vrot.slane %v2728, 1
        %v2731 = vsel %vm1097, %v2726, %v2730
        %v2733 = vshrl.u32 %v2616, 16
        %v2735 = vshll.u32 %v2616, 16
        %v2737 = vrot.slane %v2735, 1
        %v2738 = vor.u32 %v2733, %v2737
        %v2740 = vshll.u32 %v2670, 16
        %v2742 = vrot.slane %v2740, 1
        %v2743 = vsel %vm1097, %v2738, %v2742
        %v2745 = vshrl.u32 %v2617, 16
        %v2747 = vshll.u32 %v2617, 16
        %v2749 = vrot.slane %v2747, 1
        %v2750 = vor.u32 %v2745, %v2749
        %v2752 = vshll.u32 %v2671, 16
        %v2754 = vrot.slane %v2752, 1
        %v2755 = vsel %vm1097, %v2750, %v2754
        %v2757 = vshrl.u32 %v2618, 16
        %v2759 = vshll.u32 %v2618, 16
        %v2761 = vrot.slane %v2759, 1
        %v2762 = vor.u32 %v2757, %v2761
        %v2764 = vshll.u32 %v2672, 16
        %v2766 = vrot.slane %v2764, 1
        %v2767 = vsel %vm1097, %v2762, %v2766
        %v2769 = vshrl.u32 %v2619, 16
        %v2771 = vshll.u32 %v2619, 16
        %v2773 = vrot.slane %v2771, 1
        %v2774 = vor.u32 %v2769, %v2773
        %v2776 = vshll.u32 %v2673, 16
        %v2778 = vrot.slane %v2776, 1
        %v2779 = vsel %vm1097, %v2774, %v2778
        %v2781 = vshrl.u32 %v2620, 16
        %v2783 = vshll.u32 %v2620, 16
        %v2785 = vrot.slane %v2783, 1
        %v2786 = vor.u32 %v2781, %v2785
        %v2788 = vshll.u32 %v2674, 16
        %v2790 = vrot.slane %v2788, 1
        %v2791 = vsel %vm1097, %v2786, %v2790
        %v2793 = vshrl.u32 %v2621, 16
        %v2795 = vshll.u32 %v2621, 16
        %v2797 = vrot.slane %v2795, 1
        %v2798 = vor.u32 %v2793, %v2797
        %v2800 = vshll.u32 %v2675, 16
        %v2802 = vrot.slane %v2800, 1
        %v2803 = vsel %vm1097, %v2798, %v2802
        %v2805 = vshrl.u32 %v2622, 16
        %v2807 = vshll.u32 %v2622, 16
        %v2809 = vrot.slane %v2807, 1
        %v2810 = vor.u32 %v2805, %v2809
        %v2812 = vshll.u32 %v2676, 16
        %v2814 = vrot.slane %v2812, 1
        %v2815 = vsel %vm1097, %v2810, %v2814
        %v2817 = vshrl.u32 %v2623, 16
        %v2819 = vshll.u32 %v2623, 16
        %v2821 = vrot.slane %v2819, 1
        %v2822 = vor.u32 %v2817, %v2821
        %v2824 = vshll.u32 %v2677, 16
        %v2826 = vrot.slane %v2824, 1
        %v2827 = vsel %vm1097, %v2822, %v2826
        %v2829 = vshrl.u32 %v2624, 16
        %v2831 = vshll.u32 %v2624, 16
        %v2833 = vrot.slane %v2831, 1
        %v2834 = vor.u32 %v2829, %v2833
        %v2836 = vshll.u32 %v2678, 16
        %v2838 = vrot.slane %v2836, 1
        %v2839 = vsel %vm1097, %v2834, %v2838
        %v2841 = vshrl.u32 %v2625, 16
        %v2843 = vshll.u32 %v2625, 16
        %v2845 = vrot.slane %v2843, 1
        %v2846 = vor.u32 %v2841, %v2845
        %v2848 = vshll.u32 %v2679, 16
        %v2850 = vrot.slane %v2848, 1
        %v2851 = vsel %vm1097, %v2846, %v2850
        %v2853 = vshrl.u32 %v2626, 16
        %v2855 = vshll.u32 %v2626, 16
        %v2857 = vrot.slane %v2855, 1
        %v2858 = vor.u32 %v2853, %v2857
        %v2860 = vshll.u32 %v2680, 16
        %v2862 = vrot.slane %v2860, 1
        %v2863 = vsel %vm1097, %v2858, %v2862
        %v2865 = vshrl.u32 %v2627, 16
        %v2867 = vshll.u32 %v2627, 16
        %v2869 = vrot.slane %v2867, 1
        %v2870 = vor.u32 %v2865, %v2869
        %v2872 = vshll.u32 %v2681, 16
        %v2874 = vrot.slane %v2872, 1
        %v2875 = vsel %vm1097, %v2870, %v2874
        %v2877 = vshrl.u32 %v2628, 16
        %v2879 = vshll.u32 %v2628, 16
        %v2881 = vrot.slane %v2879, 1
        %v2882 = vor.u32 %v2877, %v2881
        %v2884 = vshll.u32 %v2682, 16
        %v2886 = vrot.slane %v2884, 1
        %v2887 = vsel %vm1097, %v2882, %v2886
        %v2889 = vshrl.u32 %v2629, 16
        %v2891 = vshll.u32 %v2629, 16
        %v2893 = vrot.slane %v2891, 1
        %v2894 = vor.u32 %v2889, %v2893
        %v2896 = vshll.u32 %v2683, 16
        %v2898 = vrot.slane %v2896, 1
        %v2899 = vsel %vm1097, %v2894, %v2898
        %2900 = vrot.lane.b32.xlu0 %v2695, 8
        %v2901 = vpop.permute.xlu0 %2900
        %2902 = vrot.lane.b32.xlu0 %v2707, 8
        %v2903 = vpop.permute.xlu0 %2902
        %2904 = vrot.lane.b32.xlu0 %v2719, 8
        %v2905 = vpop.permute.xlu0 %2904
        %2906 = vrot.lane.b32.xlu0 %v2731, 8
        %v2907 = vpop.permute.xlu0 %2906
        %2908 = vrot.lane.b32.xlu0 %v2743, 8
        %v2909 = vpop.permute.xlu0 %2908
        %2910 = vrot.lane.b32.xlu0 %v2755, 8
        %v2911 = vpop.permute.xlu0 %2910
        %2912 = vrot.lane.b32.xlu0 %v2767, 8
        %v2913 = vpop.permute.xlu0 %2912
        %2914 = vrot.lane.b32.xlu0 %v2779, 8
        %v2915 = vpop.permute.xlu0 %2914
        %2916 = vrot.lane.b32.xlu0 %v2791, 8
        %v2917 = vpop.permute.xlu0 %2916
        %2918 = vrot.lane.b32.xlu0 %v2803, 8
        %v2919 = vpop.permute.xlu0 %2918
        %2920 = vrot.lane.b32.xlu0 %v2815, 8
        %v2921 = vpop.permute.xlu0 %2920
        %2922 = vrot.lane.b32.xlu0 %v2827, 8
        %v2923 = vpop.permute.xlu0 %2922
        %2924 = vrot.lane.b32.xlu0 %v2839, 8
        %v2925 = vpop.permute.xlu0 %2924
        %2926 = vrot.lane.b32.xlu0 %v2851, 8
        %v2927 = vpop.permute.xlu0 %2926
        %2928 = vrot.lane.b32.xlu0 %v2863, 8
        %v2929 = vpop.permute.xlu0 %2928
        %2930 = vrot.lane.b32.xlu0 %v2875, 8
        %v2931 = vpop.permute.xlu0 %2930
        %2932 = vrot.lane.b32.xlu0 %v2887, 8
        %v2933 = vpop.permute.xlu0 %2932
        %2934 = vrot.lane.b32.xlu0 %v2899, 8
        %v2935 = vpop.permute.xlu0 %2934
        %v2954 = vunpack.c.l.b16 %v2522
        %v2955 = vunpack.c.l.b16 %v2523
        %v2956 = vunpack.c.l.b16 %v2524
        %v2957 = vunpack.c.l.b16 %v2525
        %v2958 = vunpack.c.l.b16 %v2526
        %v2959 = vunpack.c.l.b16 %v2527
        %v2960 = vunpack.c.l.b16 %v2528
        %v2961 = vunpack.c.l.b16 %v2529
        %v2962 = vunpack.c.l.b16 %v2530
        %v2963 = vunpack.c.l.b16 %v2531
        %v2964 = vunpack.c.l.b16 %v2532
        %v2965 = vunpack.c.l.b16 %v2533
        %v2966 = vunpack.c.l.b16 %v2534
        %v2967 = vunpack.c.l.b16 %v2535
        %v2968 = vunpack.c.l.b16 %v2536
        %v2969 = vunpack.c.l.b16 %v2537
        %v2970 = vunpack.c.l.b16 %v2538
        %v2971 = vunpack.c.l.b16 %v2539
        %v2972 = vpack.c.b16 %v2577, %v2954
        %v2973 = vpack.c.b16 %v2579, %v2955
        %v2974 = vpack.c.b16 %v2581, %v2956
        %v2975 = vpack.c.b16 %v2583, %v2957
        %v2976 = vpack.c.b16 %v2585, %v2958
        %v2977 = vpack.c.b16 %v2587, %v2959
        %v2978 = vpack.c.b16 %v2589, %v2960
        %v2979 = vpack.c.b16 %v2591, %v2961
        %v2980 = vpack.c.b16 %v2593, %v2962
        %v2981 = vpack.c.b16 %v2595, %v2963
        %v2982 = vpack.c.b16 %v2597, %v2964
        %v2983 = vpack.c.b16 %v2599, %v2965
        %v2984 = vpack.c.b16 %v2601, %v2966
        %v2985 = vpack.c.b16 %v2603, %v2967
        %v2986 = vpack.c.b16 %v2605, %v2968
        %v2987 = vpack.c.b16 %v2607, %v2969
        %v2988 = vpack.c.b16 %v2609, %v2970
        %v2989 = vpack.c.b16 %v2611, %v2971
        %v2990 = vrot.slane %v2972, 1
        %v2991 = vrot.slane %v2666, 1
        %v2992 = vsel %vm1404, %v2990, %v2991
        %v2993 = vrot.slane %v2973, 1
        %v2994 = vrot.slane %v2667, 1
        %v2995 = vsel %vm1404, %v2993, %v2994
        %v2996 = vrot.slane %v2974, 1
        %v2997 = vrot.slane %v2668, 1
        %v2998 = vsel %vm1404, %v2996, %v2997
        %v2999 = vrot.slane %v2975, 1
        %v3000 = vrot.slane %v2669, 1
        %v3001 = vsel %vm1404, %v2999, %v3000
        %v3002 = vrot.slane %v2976, 1
        %v3003 = vrot.slane %v2670, 1
        %v3004 = vsel %vm1404, %v3002, %v3003
        %v3005 = vrot.slane %v2977, 1
        %v3006 = vrot.slane %v2671, 1
        %v3007 = vsel %vm1404, %v3005, %v3006
        %v3008 = vrot.slane %v2978, 1
        %v3009 = vrot.slane %v2672, 1
        %v3010 = vsel %vm1404, %v3008, %v3009
        %v3011 = vrot.slane %v2979, 1
        %v3012 = vrot.slane %v2673, 1
        %v3013 = vsel %vm1404, %v3011, %v3012
        %v3014 = vrot.slane %v2980, 1
        %v3015 = vrot.slane %v2674, 1
        %v3016 = vsel %vm1404, %v3014, %v3015
        %v3017 = vrot.slane %v2981, 1
        %v3018 = vrot.slane %v2675, 1
        %v3019 = vsel %vm1404, %v3017, %v3018
        %v3020 = vrot.slane %v2982, 1
        %v3021 = vrot.slane %v2676, 1
        %v3022 = vsel %vm1404, %v3020, %v3021
        %v3023 = vrot.slane %v2983, 1
        %v3024 = vrot.slane %v2677, 1
        %v3025 = vsel %vm1404, %v3023, %v3024
        %v3026 = vrot.slane %v2984, 1
        %v3027 = vrot.slane %v2678, 1
        %v3028 = vsel %vm1404, %v3026, %v3027
        %v3029 = vrot.slane %v2985, 1
        %v3030 = vrot.slane %v2679, 1
        %v3031 = vsel %vm1404, %v3029, %v3030
        %v3032 = vrot.slane %v2986, 1
        %v3033 = vrot.slane %v2680, 1
        %v3034 = vsel %vm1404, %v3032, %v3033
        %v3035 = vrot.slane %v2987, 1
        %v3036 = vrot.slane %v2681, 1
        %v3037 = vsel %vm1404, %v3035, %v3036
        %v3038 = vrot.slane %v2988, 1
        %v3039 = vrot.slane %v2682, 1
        %v3040 = vsel %vm1404, %v3038, %v3039
        %v3041 = vrot.slane %v2989, 1
        %v3042 = vrot.slane %v2683, 1
        %v3043 = vsel %vm1404, %v3041, %v3042
        %3044 = vrot.lane.b32.xlu0 %v2992, 16
        %v3045 = vpop.permute.xlu0 %3044
        %3046 = vrot.lane.b32.xlu0 %v2995, 16
        %v3047 = vpop.permute.xlu0 %3046
        %3048 = vrot.lane.b32.xlu0 %v2998, 16
        %v3049 = vpop.permute.xlu0 %3048
        %3050 = vrot.lane.b32.xlu0 %v3001, 16
        %v3051 = vpop.permute.xlu0 %3050
        %3052 = vrot.lane.b32.xlu0 %v3004, 16
        %v3053 = vpop.permute.xlu0 %3052
        %3054 = vrot.lane.b32.xlu0 %v3007, 16
        %v3055 = vpop.permute.xlu0 %3054
        %3056 = vrot.lane.b32.xlu0 %v3010, 16
        %v3057 = vpop.permute.xlu0 %3056
        %3058 = vrot.lane.b32.xlu0 %v3013, 16
        %v3059 = vpop.permute.xlu0 %3058
        %3060 = vrot.lane.b32.xlu0 %v3016, 16
        %v3061 = vpop.permute.xlu0 %3060
        %3062 = vrot.lane.b32.xlu0 %v3019, 16
        %v3063 = vpop.permute.xlu0 %3062
        %3064 = vrot.lane.b32.xlu0 %v3022, 16
        %v3065 = vpop.permute.xlu0 %3064
        %3066 = vrot.lane.b32.xlu0 %v3025, 16
        %v3067 = vpop.permute.xlu0 %3066
        %3068 = vrot.lane.b32.xlu0 %v3028, 16
        %v3069 = vpop.permute.xlu0 %3068
        %3070 = vrot.lane.b32.xlu0 %v3031, 16
        %v3071 = vpop.permute.xlu0 %3070
        %3072 = vrot.lane.b32.xlu0 %v3034, 16
        %v3073 = vpop.permute.xlu0 %3072
        %3074 = vrot.lane.b32.xlu0 %v3037, 16
        %v3075 = vpop.permute.xlu0 %3074
        %3076 = vrot.lane.b32.xlu0 %v3040, 16
        %v3077 = vpop.permute.xlu0 %3076
        %3078 = vrot.lane.b32.xlu0 %v3043, 16
        %v3079 = vpop.permute.xlu0 %3078
        %v3081 = vsel %vm1532, %v2612, %v2901
        %v3083 = vsel %vm1532, %v2613, %v2903
        %v3085 = vsel %vm1532, %v2614, %v2905
        %v3087 = vsel %vm1532, %v2615, %v2907
        %v3089 = vsel %vm1532, %v2616, %v2909
        %v3091 = vsel %vm1532, %v2617, %v2911
        %v3093 = vsel %vm1532, %v2618, %v2913
        %v3095 = vsel %vm1532, %v2619, %v2915
        %v3097 = vsel %vm1532, %v2620, %v2917
        %v3099 = vsel %vm1532, %v2621, %v2919
        %v3101 = vsel %vm1532, %v2622, %v2921
        %v3103 = vsel %vm1532, %v2623, %v2923
        %v3105 = vsel %vm1532, %v2624, %v2925
        %v3107 = vsel %vm1532, %v2625, %v2927
        %v3109 = vsel %vm1532, %v2626, %v2929
        %v3111 = vsel %vm1532, %v2627, %v2931
        %v3113 = vsel %vm1532, %v2628, %v2933
        %v3115 = vsel %vm1532, %v2629, %v2935
        %vm3116 = vcmask 130048
        %v3118 = vsel %vm3116, %v3081, %v3045
        %v3120 = vsel %vm3116, %v3083, %v3047
        %v3122 = vsel %vm3116, %v3085, %v3049
        %v3124 = vsel %vm3116, %v3087, %v3051
        %v3126 = vsel %vm3116, %v3089, %v3053
        %v3128 = vsel %vm3116, %v3091, %v3055
        %v3130 = vsel %vm3116, %v3093, %v3057
        %v3132 = vsel %vm3116, %v3095, %v3059
        %v3134 = vsel %vm3116, %v3097, %v3061
        %v3136 = vsel %vm3116, %v3099, %v3063
        %v3138 = vsel %vm3116, %v3101, %v3065
        %v3140 = vsel %vm3116, %v3103, %v3067
        %v3142 = vsel %vm3116, %v3105, %v3069
        %v3144 = vsel %vm3116, %v3107, %v3071
        %v3146 = vsel %vm3116, %v3109, %v3073
        %v3148 = vsel %vm3116, %v3111, %v3075
        %v3150 = vsel %vm3116, %v3113, %v3077
        %v3152 = vsel %vm3116, %v3115, %v3079
        %3169 = vrot.lane.b32.xlu0 %v3120, 24
        %v3170 = vpop.permute.xlu0 %3169
        %3171 = vrot.lane.b32.xlu0 %v3122, 24
        %v3172 = vpop.permute.xlu0 %3171
        %3173 = vrot.lane.b32.xlu0 %v3124, 24
        %v3174 = vpop.permute.xlu0 %3173
        %3175 = vrot.lane.b32.xlu0 %v3126, 24
        %v3176 = vpop.permute.xlu0 %3175
        %3177 = vrot.lane.b32.xlu0 %v3128, 24
        %v3178 = vpop.permute.xlu0 %3177
        %3179 = vrot.lane.b32.xlu0 %v3130, 24
        %v3180 = vpop.permute.xlu0 %3179
        %3181 = vrot.lane.b32.xlu0 %v3132, 24
        %v3182 = vpop.permute.xlu0 %3181
        %3183 = vrot.lane.b32.xlu0 %v3134, 24
        %v3184 = vpop.permute.xlu0 %3183
        %3185 = vrot.lane.b32.xlu0 %v3136, 24
        %v3186 = vpop.permute.xlu0 %3185
        %3187 = vrot.lane.b32.xlu0 %v3138, 24
        %v3188 = vpop.permute.xlu0 %3187
        %3189 = vrot.lane.b32.xlu0 %v3140, 24
        %v3190 = vpop.permute.xlu0 %3189
        %3191 = vrot.lane.b32.xlu0 %v3142, 24
        %v3192 = vpop.permute.xlu0 %3191
        %3193 = vrot.lane.b32.xlu0 %v3144, 24
        %v3194 = vpop.permute.xlu0 %3193
        %3195 = vrot.lane.b32.xlu0 %v3146, 24
        %v3196 = vpop.permute.xlu0 %3195
        %3197 = vrot.lane.b32.xlu0 %v3148, 24
        %v3198 = vpop.permute.xlu0 %3197
        %3199 = vrot.lane.b32.xlu0 %v3150, 24
        %v3200 = vpop.permute.xlu0 %3199
        %3202 = vrot.lane.b32.xlu0 %v3122, 48
        %v3203 = vpop.permute.xlu0 %3202
        %3204 = vrot.lane.b32.xlu0 %v3124, 48
        %v3205 = vpop.permute.xlu0 %3204
        %3206 = vrot.lane.b32.xlu0 %v3126, 48
        %v3207 = vpop.permute.xlu0 %3206
        %3208 = vrot.lane.b32.xlu0 %v3128, 48
        %v3209 = vpop.permute.xlu0 %3208
        %3210 = vrot.lane.b32.xlu0 %v3130, 48
        %v3211 = vpop.permute.xlu0 %3210
        %3212 = vrot.lane.b32.xlu0 %v3132, 48
        %v3213 = vpop.permute.xlu0 %3212
        %3214 = vrot.lane.b32.xlu0 %v3134, 48
        %v3215 = vpop.permute.xlu0 %3214
        %3216 = vrot.lane.b32.xlu0 %v3136, 48
        %v3217 = vpop.permute.xlu0 %3216
        %3218 = vrot.lane.b32.xlu0 %v3138, 48
        %v3219 = vpop.permute.xlu0 %3218
        %3220 = vrot.lane.b32.xlu0 %v3140, 48
        %v3221 = vpop.permute.xlu0 %3220
        %3222 = vrot.lane.b32.xlu0 %v3142, 48
        %v3223 = vpop.permute.xlu0 %3222
        %3224 = vrot.lane.b32.xlu0 %v3144, 48
        %v3225 = vpop.permute.xlu0 %3224
        %3226 = vrot.lane.b32.xlu0 %v3146, 48
        %v3227 = vpop.permute.xlu0 %3226
        %3228 = vrot.lane.b32.xlu0 %v3148, 48
        %v3229 = vpop.permute.xlu0 %3228
        %3230 = vrot.lane.b32.xlu0 %v3150, 48
        %v3231 = vpop.permute.xlu0 %3230
        %3232 = vrot.lane.b32.xlu0 %v3152, 48
        %v3233 = vpop.permute.xlu0 %3232
        %v3235 = vsel %vm1683, %v3118, %v3170
        %v3237 = vsel %vm1683, %v3120, %v3172
        %v3239 = vsel %vm1683, %v3122, %v3174
        %v3241 = vsel %vm1683, %v3124, %v3176
        %v3243 = vsel %vm1683, %v3126, %v3178
        %v3245 = vsel %vm1683, %v3128, %v3180
        %v3247 = vsel %vm1683, %v3130, %v3182
        %v3249 = vsel %vm1683, %v3132, %v3184
        %v3251 = vsel %vm1683, %v3134, %v3186
        %v3253 = vsel %vm1683, %v3136, %v3188
        %v3255 = vsel %vm1683, %v3138, %v3190
        %v3257 = vsel %vm1683, %v3140, %v3192
        %v3259 = vsel %vm1683, %v3142, %v3194
        %v3261 = vsel %vm1683, %v3144, %v3196
        %v3263 = vsel %vm1683, %v3146, %v3198
        %v3265 = vsel %vm1683, %v3148, %v3200
        %vm3266 = vcmask 392192
        %v3268 = vsel %vm3266, %v3235, %v3203
        %v3270 = vsel %vm3266, %v3237, %v3205
        %v3272 = vsel %vm3266, %v3239, %v3207
        %v3274 = vsel %vm3266, %v3241, %v3209
        %v3276 = vsel %vm3266, %v3243, %v3211
        %v3278 = vsel %vm3266, %v3245, %v3213
        %v3280 = vsel %vm3266, %v3247, %v3215
        %v3282 = vsel %vm3266, %v3249, %v3217
        %v3284 = vsel %vm3266, %v3251, %v3219
        %v3286 = vsel %vm3266, %v3253, %v3221
        %v3288 = vsel %vm3266, %v3255, %v3223
        %v3290 = vsel %vm3266, %v3257, %v3225
        %v3292 = vsel %vm3266, %v3259, %v3227
        %v3294 = vsel %vm3266, %v3261, %v3229
        %v3296 = vsel %vm3266, %v3263, %v3231
        %v3298 = vsel %vm3266, %v3265, %v3233
        %v3299 = vld [vmem:[%s6] sm:$0xf]
        %v3300 = vld [vmem:[%s6 + $0x4] sm:$0xf]
        %v3301 = vld [vmem:[%s6 + $0x8] sm:$0xf]
        %v3302 = vld [vmem:[%s6 + $0xc] sm:$0xf]
        %v3303 = vld [vmem:[%s6 + $0x10] sm:$0xf]
        %v3304 = vld [vmem:[%s6 + $0x14] sm:$0xf]
        %v3305 = vld [vmem:[%s6 + $0x18] sm:$0xf]
        %v3306 = vld [vmem:[%s6 + $0x1c] sm:$0xf]
        %v3307 = vld [vmem:[%s6 + $0x20] sm:$0xf]
        %v3308 = vld [vmem:[%s7] sm:$0xf]
        %v3310 = vsel %vm1495, %v305, 0
        %v3313 = vsel %vm1495, %v306, 0
        %v3316 = vsel %vm1495, %v307, 0
        %v3319 = vsel %vm1495, %v308, 0
        %v3322 = vsel %vm1495, %v309, 0
        %v3325 = vsel %vm1495, %v310, 0
        %v3328 = vsel %vm1495, %v311, 0
        %v3331 = vsel %vm1495, %v312, 0
        %v3334 = vsel %vm1495, %v313, 0
        %v3337 = vsel %vm1495, %v314, 0
        %v3340 = vsel %vm1495, %v315, 0
        %v3343 = vsel %vm1495, %v316, 0
        %v3346 = vsel %vm1495, %v317, 0
        %v3349 = vsel %vm1495, %v318, 0
        %v3352 = vsel %vm1495, %v319, 0
        %v3355 = vsel %vm1495, %v320, 0
        %v3358 = vsel %vm1495, %v321, 0
        %v3361 = vsel %vm1495, %v322, 0
        %v3364 = vsel %vm1495, %v323, 0
        %v3367 = vsel %vm1495, %v324, 0
        %v3370 = vsel %vm1495, %v325, 0
        %v3373 = vsel %vm1495, %v326, 0
        %v3376 = vsel %vm1495, %v327, 0
        %v3379 = vsel %vm1495, %v328, 0
        %v3382 = vsel %vm1495, %v329, 0
        %v3385 = vsel %vm1495, %v330, 0
        %v3388 = vsel %vm1495, %v331, 0
        %v3391 = vsel %vm1495, %v332, 0
        %v3394 = vsel %vm1495, %v333, 0
        %v3397 = vsel %vm1495, %v334, 0
        %v3400 = vsel %vm1495, %v335, 0
        %v3403 = vsel %vm1495, %v336, 0
        %vm3405 = vcmask 1043456
        %v3407 = vsel %vm3405, %v3308, 0
        %3409 = vmatprep.subr.mxu0 0.0
        %3410 = vmatpush1.msra.mxu0 %v3407
        %3411 = vmatprep.subr.mxu0 0.0
        %3412 = vmatpush1.msra.mxu0 0.0
        %3413 = vmatprep.subr.mxu0 0.0
        %3414 = vmatpush1.msra.mxu0 0.0
        %3415 = vmatprep.subr.mxu0 0.0
        %3416 = vmatpush1.msra.mxu0 0.0
        %3417 = vmatprep.subr.mxu0 0.0
        %3418 = vmatpush1.msra.mxu0 0.0
        %3419 = vmatprep.subr.mxu0 0.0
        %3420 = vmatpush1.msra.mxu0 0.0
        %3421 = vmatprep.subr.mxu0 0.0
        %3422 = vmatpush1.msra.mxu0 0.0
        %3423 = vmatprep.subr.mxu0 0.0
        %3424 = vmatpush1.msra.mxu0 0.0
        %3425 = vmatprep.subr.mxu0 0.0
        %3426 = vmatpush1.msra.mxu0 0.0
        %3427 = vmatprep.subr.mxu0 0.0
        %3428 = vmatpush1.msra.mxu0 0.0
        %3429 = vmatprep.subr.mxu0 0.0
        %3430 = vmatpush1.msra.mxu0 0.0
        %3431 = vmatprep.subr.mxu0 0.0
        %3432 = vmatpush1.msra.mxu0 0.0
        %3433 = vmatprep.subr.mxu0 0.0
        %3434 = vmatpush1.msra.mxu0 0.0
        %3435 = vmatprep.subr.mxu0 0.0
        %3436 = vmatpush1.msra.mxu0 0.0
        %3437 = vmatprep.subr.mxu0 0.0
        %3438 = vmatpush1.msra.mxu0 0.0
        %3439 = vmatprep.subr.mxu0 0.0
        %3440 = vmatpush1.msra.mxu0 0.0
        %3441 = vmatprep.subr.mxu0 0.0
        %3442 = vmatpush1.msra.mxu0 0.0
        %3443 = vmatprep.subr.mxu0 0.0
        %3444 = vmatpush1.msra.mxu0 0.0
        %3445 = vmatprep.subr.mxu0 0.0
        %3446 = vmatpush1.msra.mxu0 0.0
        %3447 = vmatprep.subr.mxu0 0.0
        %3448 = vmatpush1.msra.mxu0 0.0
        %3449 = vmatprep.subr.mxu0 0.0
        %3450 = vmatpush1.msra.mxu0 0.0
        %3451 = vmatprep.subr.mxu0 0.0
        %3452 = vmatpush1.msra.mxu0 0.0
        %3453 = vmatprep.subr.mxu0 0.0
        %3454 = vmatpush1.msra.mxu0 0.0
        %3455 = vmatprep.subr.mxu0 0.0
        %3456 = vmatpush1.msra.mxu0 0.0
        %3457 = vmatprep.subr.mxu0 0.0
        %3458 = vmatpush1.msra.mxu0 0.0
        %3459 = vmatprep.subr.mxu0 0.0
        %3460 = vmatpush1.msra.mxu0 0.0
        %3461 = vmatprep.subr.mxu0 0.0
        %3462 = vmatpush1.msra.mxu0 0.0
        %3463 = vmatprep.subr.mxu0 0.0
        %3464 = vmatpush1.msra.mxu0 0.0
        %3465 = vmatprep.subr.mxu0 0.0
        %3466 = vmatpush1.msra.mxu0 0.0
        %3467 = vmatprep.subr.mxu0 0.0
        %3468 = vmatpush1.msra.mxu0 0.0
        %3469 = vmatprep.subr.mxu0 0.0
        %3470 = vmatpush1.msra.mxu0 0.0
        %3471 = vmatprep.subr.mxu0 0.0
        %3472 = vmatpush1.msra.mxu0 0.0
        %3473 = vmatprep.mubr.f32.mxu0 0.0
        %3474 = vmatmul.mubr.f32.gmra.mrb[0].mxu0 %v3310
        %v3475 = vpop.f32.mrb[0].mxu0
        %v3476 = vadd.f32 0.0, %v3475
        %v3477 = vpop.f32.mrb[0].mxu0
        %3478 = vmatprep.mubr.f32.mxu0 0.0
        %3479 = vmatmul.mubr.f32.gmra.mrb[0].mxu0 %v3313
        %v3480 = vpop.f32.mrb[0].mxu0
        %v3481 = vadd.f32 0.0, %v3480
        %v3482 = vpop.f32.mrb[0].mxu0
        %3483 = vmatprep.mubr.f32.mxu0 0.0
        %3484 = vmatmul.mubr.f32.gmra.mrb[0].mxu0 %v3316
        %v3485 = vpop.f32.mrb[0].mxu0
        %v3486 = vadd.f32 0.0, %v3485
        %v3487 = vpop.f32.mrb[0].mxu0
        %3488 = vmatprep.mubr.f32.mxu0 0.0
        %3489 = vmatmul.mubr.f32.gmra.mrb[0].mxu0 %v3319
        %v3490 = vpop.f32.mrb[0].mxu0
        %v3491 = vadd.f32 0.0, %v3490
        %v3492 = vpop.f32.mrb[0].mxu0
        %3493 = vmatprep.mubr.f32.mxu0 0.0
        %3494 = vmatmul.mubr.f32.gmra.mrb[0].mxu0 %v3322
        %v3495 = vpop.f32.mrb[0].mxu0
        %v3496 = vadd.f32 0.0, %v3495
        %v3497 = vpop.f32.mrb[0].mxu0
        %3498 = vmatprep.mubr.f32.mxu0 0.0
        %3499 = vmatmul.mubr.f32.gmra.mrb[0].mxu0 %v3325
        %v3500 = vpop.f32.mrb[0].mxu0
        %v3501 = vadd.f32 0.0, %v3500
        %v3502 = vpop.f32.mrb[0].mxu0
        %3503 = vmatprep.mubr.f32.mxu0 0.0
        %3504 = vmatmul.mubr.f32.gmra.mrb[0].mxu0 %v3328
        %v3505 = vpop.f32.mrb[0].mxu0
        %v3506 = vadd.f32 0.0, %v3505
        %v3507 = vpop.f32.mrb[0].mxu0
        %3508 = vmatprep.mubr.f32.mxu0 0.0
        %3509 = vmatmul.mubr.f32.gmra.mrb[0].mxu0 %v3331
        %v3510 = vpop.f32.mrb[0].mxu0
        %v3511 = vadd.f32 0.0, %v3510
        %v3512 = vpop.f32.mrb[0].mxu0
        %3513 = vmatprep.mubr.f32.mxu0 0.0
        %3514 = vmatmul.mubr.f32.gmra.mrb[0].mxu0 %v3334
        %v3515 = vpop.f32.mrb[0].mxu0
        %v3516 = vadd.f32 0.0, %v3515
        %v3517 = vpop.f32.mrb[0].mxu0
        %3518 = vmatprep.mubr.f32.mxu0 0.0
        %3519 = vmatmul.mubr.f32.gmra.mrb[0].mxu0 %v3337
        %v3520 = vpop.f32.mrb[0].mxu0
        %v3521 = vadd.f32 0.0, %v3520
        %v3522 = vpop.f32.mrb[0].mxu0
        %3523 = vmatprep.mubr.f32.mxu0 0.0
        %3524 = vmatmul.mubr.f32.gmra.mrb[0].mxu0 %v3340
        %v3525 = vpop.f32.mrb[0].mxu0
        %v3526 = vadd.f32 0.0, %v3525
        %v3527 = vpop.f32.mrb[0].mxu0
        %3528 = vmatprep.mubr.f32.mxu0 0.0
        %3529 = vmatmul.mubr.f32.gmra.mrb[0].mxu0 %v3343
        %v3530 = vpop.f32.mrb[0].mxu0
        %v3531 = vadd.f32 0.0, %v3530
        %v3532 = vpop.f32.mrb[0].mxu0
        %3533 = vmatprep.mubr.f32.mxu0 0.0
        %3534 = vmatmul.mubr.f32.gmra.mrb[0].mxu0 %v3346
        %v3535 = vpop.f32.mrb[0].mxu0
        %v3536 = vadd.f32 0.0, %v3535
        %v3537 = vpop.f32.mrb[0].mxu0
        %3538 = vmatprep.mubr.f32.mxu0 0.0
        %3539 = vmatmul.mubr.f32.gmra.mrb[0].mxu0 %v3349
        %v3540 = vpop.f32.mrb[0].mxu0
        %v3541 = vadd.f32 0.0, %v3540
        %v3542 = vpop.f32.mrb[0].mxu0
        %3543 = vmatprep.mubr.f32.mxu0 0.0
        %3544 = vmatmul.mubr.f32.gmra.mrb[0].mxu0 %v3352
        %v3545 = vpop.f32.mrb[0].mxu0
        %v3546 = vadd.f32 0.0, %v3545
        %v3547 = vpop.f32.mrb[0].mxu0
        %3548 = vmatprep.mubr.f32.mxu0 0.0
        %3549 = vmatmul.mubr.f32.gmra.mrb[0].mxu0 %v3355
        %v3550 = vpop.f32.mrb[0].mxu0
        %v3551 = vadd.f32 0.0, %v3550
        %v3552 = vpop.f32.mrb[0].mxu0
        %3553 = vmatprep.mubr.f32.mxu0 0.0
        %3554 = vmatmul.mubr.f32.gmra.mrb[0].mxu0 %v3358
        %v3555 = vpop.f32.mrb[0].mxu0
        %v3556 = vadd.f32 0.0, %v3555
        %v3557 = vpop.f32.mrb[0].mxu0
        %3558 = vmatprep.mubr.f32.mxu0 0.0
        %3559 = vmatmul.mubr.f32.gmra.mrb[0].mxu0 %v3361
        %v3560 = vpop.f32.mrb[0].mxu0
        %v3561 = vadd.f32 0.0, %v3560
        %v3562 = vpop.f32.mrb[0].mxu0
        %3563 = vmatprep.mubr.f32.mxu0 0.0
        %3564 = vmatmul.mubr.f32.gmra.mrb[0].mxu0 %v3364
        %v3565 = vpop.f32.mrb[0].mxu0
        %v3566 = vadd.f32 0.0, %v3565
        %v3567 = vpop.f32.mrb[0].mxu0
        %3568 = vmatprep.mubr.f32.mxu0 0.0
        %3569 = vmatmul.mubr.f32.gmra.mrb[0].mxu0 %v3367
        %v3570 = vpop.f32.mrb[0].mxu0
        %v3571 = vadd.f32 0.0, %v3570
        %v3572 = vpop.f32.mrb[0].mxu0
        %3573 = vmatprep.mubr.f32.mxu0 0.0
        %3574 = vmatmul.mubr.f32.gmra.mrb[0].mxu0 %v3370
        %v3575 = vpop.f32.mrb[0].mxu0
        %v3576 = vadd.f32 0.0, %v3575
        %v3577 = vpop.f32.mrb[0].mxu0
        %3578 = vmatprep.mubr.f32.mxu0 0.0
        %3579 = vmatmul.mubr.f32.gmra.mrb[0].mxu0 %v3373
        %v3580 = vpop.f32.mrb[0].mxu0
        %v3581 = vadd.f32 0.0, %v3580
        %v3582 = vpop.f32.mrb[0].mxu0
        %3583 = vmatprep.mubr.f32.mxu0 0.0
        %3584 = vmatmul.mubr.f32.gmra.mrb[0].mxu0 %v3376
        %v3585 = vpop.f32.mrb[0].mxu0
        %v3586 = vadd.f32 0.0, %v3585
        %v3587 = vpop.f32.mrb[0].mxu0
        %3588 = vmatprep.mubr.f32.mxu0 0.0
        %3589 = vmatmul.mubr.f32.gmra.mrb[0].mxu0 %v3379
        %v3590 = vpop.f32.mrb[0].mxu0
        %v3591 = vadd.f32 0.0, %v3590
        %v3592 = vpop.f32.mrb[0].mxu0
        %3593 = vmatprep.mubr.f32.mxu0 0.0
        %3594 = vmatmul.mubr.f32.gmra.mrb[0].mxu0 %v3382
        %v3595 = vpop.f32.mrb[0].mxu0
        %v3596 = vadd.f32 0.0, %v3595
        %v3597 = vpop.f32.mrb[0].mxu0
        %3598 = vmatprep.mubr.f32.mxu0 0.0
        %3599 = vmatmul.mubr.f32.gmra.mrb[0].mxu0 %v3385
        %v3600 = vpop.f32.mrb[0].mxu0
        %v3601 = vadd.f32 0.0, %v3600
        %v3602 = vpop.f32.mrb[0].mxu0
        %3603 = vmatprep.mubr.f32.mxu0 0.0
        %3604 = vmatmul.mubr.f32.gmra.mrb[0].mxu0 %v3388
        %v3605 = vpop.f32.mrb[0].mxu0
        %v3606 = vadd.f32 0.0, %v3605
        %v3607 = vpop.f32.mrb[0].mxu0
        %3608 = vmatprep.mubr.f32.mxu0 0.0
        %3609 = vmatmul.mubr.f32.gmra.mrb[0].mxu0 %v3391
        %v3610 = vpop.f32.mrb[0].mxu0
        %v3611 = vadd.f32 0.0, %v3610
        %v3612 = vpop.f32.mrb[0].mxu0
        %3613 = vmatprep.mubr.f32.mxu0 0.0
        %3614 = vmatmul.mubr.f32.gmra.mrb[0].mxu0 %v3394
        %v3615 = vpop.f32.mrb[0].mxu0
        %v3616 = vadd.f32 0.0, %v3615
        %v3617 = vpop.f32.mrb[0].mxu0
        %3618 = vmatprep.mubr.f32.mxu0 0.0
        %3619 = vmatmul.mubr.f32.gmra.mrb[0].mxu0 %v3397
        %v3620 = vpop.f32.mrb[0].mxu0
        %v3621 = vadd.f32 0.0, %v3620
        %v3622 = vpop.f32.mrb[0].mxu0
        %3623 = vmatprep.mubr.f32.mxu0 0.0
        %3624 = vmatmul.mubr.f32.gmra.mrb[0].mxu0 %v3400
        %v3625 = vpop.f32.mrb[0].mxu0
        %v3626 = vadd.f32 0.0, %v3625
        %v3627 = vpop.f32.mrb[0].mxu0
        %3628 = vmatprep.mubr.f32.mxu0 0.0
        %3629 = vmatmul.mubr.f32.gmra.mrb[0].mxu0 %v3403
        %v3630 = vpop.f32.mrb[0].mxu0
        %v3631 = vadd.f32 0.0, %v3630
        %v3632 = vpop.f32.mrb[0].mxu0
        %3633 = vdwg.mxu0
        %v3643 = vunpack.c.l.b16 %v3299
        %v3644 = vunpack.c.l.b16 %v3300
        %v3645 = vunpack.c.l.b16 %v3301
        %v3646 = vunpack.c.l.b16 %v3302
        %v3647 = vunpack.c.l.b16 %v3303
        %v3648 = vunpack.c.l.b16 %v3304
        %v3649 = vunpack.c.l.b16 %v3305
        %v3650 = vunpack.c.l.b16 %v3306
        %v3651 = vunpack.c.l.b16 %v3307
        %v3652 = vpack.c.b16 %v3644, %v3643
        %v3653 = vpack.c.b16 %v3646, %v3645
        %v3654 = vpack.c.b16 %v3648, %v3647
        %v3655 = vpack.c.b16 %v3650, %v3649
        %v3656 = vpack.c.b16 %v3651, %v3651
        %vm3661 = vcmask 588800
        %v3662 = vsel %vm3661, %v3268, 0
        %v3664 = vsel %vm3661, %v3270, 0
        %v3666 = vsel %vm3661, %v3272, 0
        %v3668 = vsel %vm3661, %v3274, 0
        %v3670 = vsel %vm3661, %v3276, 0
        %v3672 = vsel %vm3661, %v3278, 0
        %v3674 = vsel %vm3661, %v3280, 0
        %v3676 = vsel %vm3661, %v3282, 0
        %v3678 = vsel %vm3661, %v3284, 0
        %v3680 = vsel %vm3661, %v3286, 0
        %v3682 = vsel %vm3661, %v3288, 0
        %v3684 = vsel %vm3661, %v3290, 0
        %v3686 = vsel %vm3661, %v3292, 0
        %v3688 = vsel %vm3661, %v3294, 0
        %v3690 = vsel %vm3661, %v3296, 0
        %v3692 = vsel %vm3661, %v3298, 0
        %v3695 = vsel %vm3405, %v3656, 0
        %3697 = vmatprep.subr.bf16.mxu0 0
        %3698 = vmatpush1.bf16.msra.mxu0 %v3652
        %3699 = vmatprep.subr.bf16.mxu0 0
        %3700 = vmatpush1.bf16.msra.mxu0 %v3653
        %3701 = vmatprep.subr.bf16.mxu0 0
        %3702 = vmatpush1.bf16.msra.mxu0 %v3654
        %3703 = vmatprep.subr.bf16.mxu0 0
        %3704 = vmatpush1.bf16.msra.mxu0 %v3655
        %3705 = vmatprep.subr.bf16.mxu0 0
        %3706 = vmatpush1.bf16.msra.mxu0 %v3695
        %3707 = vmatprep.subr.bf16.mxu0 0
        %3708 = vmatpush1.bf16.msra.mxu0 0
        %3709 = vmatprep.subr.bf16.mxu0 0
        %3710 = vmatpush1.bf16.msra.mxu0 0
        %3711 = vmatprep.subr.bf16.mxu0 0
        %3712 = vmatpush1.bf16.msra.mxu0 0
        %3713 = vmatprep.subr.bf16.mxu0 0
        %3714 = vmatpush1.bf16.msra.mxu0 0
        %3715 = vmatprep.subr.bf16.mxu0 0
        %3716 = vmatpush1.bf16.msra.mxu0 0
        %3717 = vmatprep.subr.bf16.mxu0 0
        %3718 = vmatpush1.bf16.msra.mxu0 0
        %3719 = vmatprep.subr.bf16.mxu0 0
        %3720 = vmatpush1.bf16.msra.mxu0 0
        %3721 = vmatprep.subr.bf16.mxu0 0
        %3722 = vmatpush1.bf16.msra.mxu0 0
        %3723 = vmatprep.subr.bf16.mxu0 0
        %3724 = vmatpush1.bf16.msra.mxu0 0
        %3725 = vmatprep.subr.bf16.mxu0 0
        %3726 = vmatpush1.bf16.msra.mxu0 0
        %3727 = vmatprep.subr.bf16.mxu0 0
        %3728 = vmatpush1.bf16.msra.mxu0 0
        %3729 = vmatprep.mubr.bf16.mxu0 0
        %3730 = vmatmul.mubr.bf16.gmra.mrb[0].mxu0 %v3662
        %v3731 = vpop.f32.mrb[0].mxu0
        %v3732 = vadd.f32 %v3476, %v3731
        %v3733 = vpop.f32.mrb[0].mxu0
        %v3734 = vpop.f32.mrb[0].mxu0
        %v3735 = vadd.f32 %v3481, %v3734
        %v3736 = vpop.f32.mrb[0].mxu0
        %3737 = vmatprep.mubr.bf16.mxu0 0
        %3738 = vmatmul.mubr.bf16.gmra.mrb[0].mxu0 %v3664
        %v3739 = vpop.f32.mrb[0].mxu0
        %v3740 = vadd.f32 %v3486, %v3739
        %v3741 = vpop.f32.mrb[0].mxu0
        %v3742 = vpop.f32.mrb[0].mxu0
        %v3743 = vadd.f32 %v3491, %v3742
        %v3744 = vpop.f32.mrb[0].mxu0
        %3745 = vmatprep.mubr.bf16.mxu0 0
        %3746 = vmatmul.mubr.bf16.gmra.mrb[0].mxu0 %v3666
        %v3747 = vpop.f32.mrb[0].mxu0
        %v3748 = vadd.f32 %v3496, %v3747
        %v3749 = vpop.f32.mrb[0].mxu0
        %v3750 = vpop.f32.mrb[0].mxu0
        %v3751 = vadd.f32 %v3501, %v3750
        %v3752 = vpop.f32.mrb[0].mxu0
        %3753 = vmatprep.mubr.bf16.mxu0 0
        %3754 = vmatmul.mubr.bf16.gmra.mrb[0].mxu0 %v3668
        %v3755 = vpop.f32.mrb[0].mxu0
        %v3756 = vadd.f32 %v3506, %v3755
        %v3757 = vpop.f32.mrb[0].mxu0
        %v3758 = vpop.f32.mrb[0].mxu0
        %v3759 = vadd.f32 %v3511, %v3758
        %v3760 = vpop.f32.mrb[0].mxu0
        %3761 = vmatprep.mubr.bf16.mxu0 0
        %3762 = vmatmul.mubr.bf16.gmra.mrb[0].mxu0 %v3670
        %v3763 = vpop.f32.mrb[0].mxu0
        %v3764 = vadd.f32 %v3516, %v3763
        %v3765 = vpop.f32.mrb[0].mxu0
        %v3766 = vpop.f32.mrb[0].mxu0
        %v3767 = vadd.f32 %v3521, %v3766
        %v3768 = vpop.f32.mrb[0].mxu0
        %3769 = vmatprep.mubr.bf16.mxu0 0
        %3770 = vmatmul.mubr.bf16.gmra.mrb[0].mxu0 %v3672
        %v3771 = vpop.f32.mrb[0].mxu0
        %v3772 = vadd.f32 %v3526, %v3771
        %v3773 = vpop.f32.mrb[0].mxu0
        %v3774 = vpop.f32.mrb[0].mxu0
        %v3775 = vadd.f32 %v3531, %v3774
        %v3776 = vpop.f32.mrb[0].mxu0
        %3777 = vmatprep.mubr.bf16.mxu0 0
        %3778 = vmatmul.mubr.bf16.gmra.mrb[0].mxu0 %v3674
        %v3779 = vpop.f32.mrb[0].mxu0
        %v3780 = vadd.f32 %v3536, %v3779
        %v3781 = vpop.f32.mrb[0].mxu0
        %v3782 = vpop.f32.mrb[0].mxu0
        %v3783 = vadd.f32 %v3541, %v3782
        %v3784 = vpop.f32.mrb[0].mxu0
        %3785 = vmatprep.mubr.bf16.mxu0 0
        %3786 = vmatmul.mubr.bf16.gmra.mrb[0].mxu0 %v3676
        %v3787 = vpop.f32.mrb[0].mxu0
        %v3788 = vadd.f32 %v3546, %v3787
        %v3789 = vpop.f32.mrb[0].mxu0
        %v3790 = vpop.f32.mrb[0].mxu0
        %v3791 = vadd.f32 %v3551, %v3790
        %v3792 = vpop.f32.mrb[0].mxu0
        %3793 = vmatprep.mubr.bf16.mxu0 0
        %3794 = vmatmul.mubr.bf16.gmra.mrb[0].mxu0 %v3678
        %v3795 = vpop.f32.mrb[0].mxu0
        %v3796 = vadd.f32 %v3556, %v3795
        %v3797 = vpop.f32.mrb[0].mxu0
        %v3798 = vpop.f32.mrb[0].mxu0
        %v3799 = vadd.f32 %v3561, %v3798
        %v3800 = vpop.f32.mrb[0].mxu0
        %3801 = vmatprep.mubr.bf16.mxu0 0
        %3802 = vmatmul.mubr.bf16.gmra.mrb[0].mxu0 %v3680
        %v3803 = vpop.f32.mrb[0].mxu0
        %v3804 = vadd.f32 %v3566, %v3803
        %v3805 = vpop.f32.mrb[0].mxu0
        %v3806 = vpop.f32.mrb[0].mxu0
        %v3807 = vadd.f32 %v3571, %v3806
        %v3808 = vpop.f32.mrb[0].mxu0
        %3809 = vmatprep.mubr.bf16.mxu0 0
        %3810 = vmatmul.mubr.bf16.gmra.mrb[0].mxu0 %v3682
        %v3811 = vpop.f32.mrb[0].mxu0
        %v3812 = vadd.f32 %v3576, %v3811
        %v3813 = vpop.f32.mrb[0].mxu0
        %v3814 = vpop.f32.mrb[0].mxu0
        %v3815 = vadd.f32 %v3581, %v3814
        %v3816 = vpop.f32.mrb[0].mxu0
        %3817 = vmatprep.mubr.bf16.mxu0 0
        %3818 = vmatmul.mubr.bf16.gmra.mrb[0].mxu0 %v3684
        %v3819 = vpop.f32.mrb[0].mxu0
        %v3820 = vadd.f32 %v3586, %v3819
        %v3821 = vpop.f32.mrb[0].mxu0
        %v3822 = vpop.f32.mrb[0].mxu0
        %v3823 = vadd.f32 %v3591, %v3822
        %v3824 = vpop.f32.mrb[0].mxu0
        %3825 = vmatprep.mubr.bf16.mxu0 0
        %3826 = vmatmul.mubr.bf16.gmra.mrb[0].mxu0 %v3686
        %v3827 = vpop.f32.mrb[0].mxu0
        %v3828 = vadd.f32 %v3596, %v3827
        %v3829 = vpop.f32.mrb[0].mxu0
        %v3830 = vpop.f32.mrb[0].mxu0
        %v3831 = vadd.f32 %v3601, %v3830
        %v3832 = vpop.f32.mrb[0].mxu0
        %3833 = vmatprep.mubr.bf16.mxu0 0
        %3834 = vmatmul.mubr.bf16.gmra.mrb[0].mxu0 %v3688
        %v3835 = vpop.f32.mrb[0].mxu0
        %v3836 = vadd.f32 %v3606, %v3835
        %v3837 = vpop.f32.mrb[0].mxu0
        %v3838 = vpop.f32.mrb[0].mxu0
        %v3839 = vadd.f32 %v3611, %v3838
        %v3840 = vpop.f32.mrb[0].mxu0
        %3841 = vmatprep.mubr.bf16.mxu0 0
        %3842 = vmatmul.mubr.bf16.gmra.mrb[0].mxu0 %v3690
        %v3843 = vpop.f32.mrb[0].mxu0
        %v3844 = vadd.f32 %v3616, %v3843
        %v3845 = vpop.f32.mrb[0].mxu0
        %v3846 = vpop.f32.mrb[0].mxu0
        %v3847 = vadd.f32 %v3621, %v3846
        %v3848 = vpop.f32.mrb[0].mxu0
        %3849 = vmatprep.mubr.bf16.mxu0 0
        %3850 = vmatmul.mubr.bf16.gmra.mrb[0].mxu0 %v3692
        %v3851 = vpop.f32.mrb[0].mxu0
        %v3852 = vadd.f32 %v3626, %v3851
        %v3853 = vpop.f32.mrb[0].mxu0
        %v3854 = vpop.f32.mrb[0].mxu0
        %v3855 = vadd.f32 %v3631, %v3854
        %v3856 = vpop.f32.mrb[0].mxu0
        %3857 = vdwg.mxu0
        %v3858 = vsel %vm1532, %v3732, 0.0
        %v3859 = vsel %vm1532, %v3735, 0.0
        %v3860 = vsel %vm1532, %v3740, 0.0
        %v3861 = vsel %vm1532, %v3743, 0.0
        %v3862 = vsel %vm1532, %v3748, 0.0
        %v3863 = vsel %vm1532, %v3751, 0.0
        %v3864 = vsel %vm1532, %v3756, 0.0
        %v3865 = vsel %vm1532, %v3759, 0.0
        %v3866 = vsel %vm1532, %v3764, 0.0
        %v3867 = vsel %vm1532, %v3767, 0.0
        %v3868 = vsel %vm1532, %v3772, 0.0
        %v3869 = vsel %vm1532, %v3775, 0.0
        %v3870 = vsel %vm1532, %v3780, 0.0
        %v3871 = vsel %vm1532, %v3783, 0.0
        %v3872 = vsel %vm1532, %v3788, 0.0
        %v3873 = vsel %vm1532, %v3791, 0.0
        %v3874 = vsel %vm1532, %v3796, 0.0
        %v3875 = vsel %vm1532, %v3799, 0.0
        %v3876 = vsel %vm1532, %v3804, 0.0
        %v3877 = vsel %vm1532, %v3807, 0.0
        %v3878 = vsel %vm1532, %v3812, 0.0
        %v3879 = vsel %vm1532, %v3815, 0.0
        %v3880 = vsel %vm1532, %v3820, 0.0
        %v3881 = vsel %vm1532, %v3823, 0.0
        %v3882 = vsel %vm1532, %v3828, 0.0
        %v3883 = vsel %vm1532, %v3831, 0.0
        %v3884 = vsel %vm1532, %v3836, 0.0
        %v3885 = vsel %vm1532, %v3839, 0.0
        %v3886 = vsel %vm1532, %v3844, 0.0
        %v3887 = vsel %vm1532, %v3847, 0.0
        %v3888 = vsel %vm1532, %v3852, 0.0
        %v3889 = vsel %vm1532, %v3855, 0.0
        %3890 = vst [vmem:[%s298] sm:$0xff] %v3858
        %3891 = vst [vmem:[%s298 + $0x8] sm:$0xff] %v3859
        %3892 = vst [vmem:[%s298 + $0x10] sm:$0xff] %v3860
        %3893 = vst [vmem:[%s298 + $0x18] sm:$0xff] %v3861
        %3894 = vst [vmem:[%s298 + $0x20] sm:$0xff] %v3862
        %3895 = vst [vmem:[%s298 + $0x28] sm:$0xff] %v3863
        %3896 = vst [vmem:[%s298 + $0x30] sm:$0xff] %v3864
        %3897 = vst [vmem:[%s298 + $0x38] sm:$0xff] %v3865
        %3898 = vst [vmem:[%s298 + $0x40] sm:$0xff] %v3866
        %3899 = vst [vmem:[%s298 + $0x48] sm:$0xff] %v3867
        %3900 = vst [vmem:[%s298 + $0x50] sm:$0xff] %v3868
        %3901 = vst [vmem:[%s298 + $0x58] sm:$0xff] %v3869
        %3902 = vst [vmem:[%s298 + $0x60] sm:$0xff] %v3870
        %3903 = vst [vmem:[%s298 + $0x68] sm:$0xff] %v3871
        %3904 = vst [vmem:[%s298 + $0x70] sm:$0xff] %v3872
        %3905 = vst [vmem:[%s298 + $0x78] sm:$0xff] %v3873
        %3906 = vst [vmem:[%s298 + $0x80] sm:$0xff] %v3874
        %3907 = vst [vmem:[%s298 + $0x88] sm:$0xff] %v3875
        %3908 = vst [vmem:[%s298 + $0x90] sm:$0xff] %v3876
        %3909 = vst [vmem:[%s298 + $0x98] sm:$0xff] %v3877
        %3910 = vst [vmem:[%s298 + $0xa0] sm:$0xff] %v3878
        %3911 = vst [vmem:[%s298 + $0xa8] sm:$0xff] %v3879
        %3912 = vst [vmem:[%s298 + $0xb0] sm:$0xff] %v3880
        %3913 = vst [vmem:[%s298 + $0xb8] sm:$0xff] %v3881
        %3914 = vst [vmem:[%s298 + $0xc0] sm:$0xff] %v3882
        %3915 = vst [vmem:[%s298 + $0xc8] sm:$0xff] %v3883
        %3916 = vst [vmem:[%s298 + $0xd0] sm:$0xff] %v3884
        %3917 = vst [vmem:[%s298 + $0xd8] sm:$0xff] %v3885
        %3918 = vst [vmem:[%s298 + $0xe0] sm:$0xff] %v3886
        %3919 = vst [vmem:[%s298 + $0xe8] sm:$0xff] %v3887
        %3920 = vst [vmem:[%s298 + $0xf0] sm:$0xff] %v3888
        %3921 = vst [vmem:[%s298 + $0xf8] sm:$0xff] %v3889
        %s3922 = sand.u32 %s203, 1
        %s3923 = scalar_lea.sflag [#allocation5], %s3922
        %s3924 = sand.u32 %s203, 1
        %s3925 = smul.addr %s3924, 256
        %s3926 = scalar_lea.vmem [#allocation4], %s3925
        // Predicated region
        $region53: #{tpu_custom_call.1} parent=51 // pred_check
          %p3927 = pneg %p213
        $region54: #{tpu_custom_call.1} parent=51 // pred_check_branch
          %3929 = sbr.rel (%p3927) target = $region56
        $region55: #{tpu_custom_call.1} parent=51 // pred_region
          %s3931 = ssub.s32 4096, 4096
          %3932 = vsyncadd %s3923, %s3931
          %s3933 = smul.addr %s22, 32
          %s3934 = smul.addr %s3933, 128
          %s3935 = scalar_lea.hbm %s8, %s3934
          %s3936 = sshll.u32 %s3926, 4
          %s3937 = int_to_ptr.vmem [resolvable:$true] %s3936
          %3942 = dma.vmem_to_hbm [thread:$0]  %s3937, 4096, %s3935, %s3923, 128, 128, 8
        $region56: #{tpu_custom_call.1} parent=51 // pred_fallthru
          _
      $region52: #{tpu_custom_call.1} parent=5 // pred_fallthru
        _
      %p3943 = scmp.le.s32.totalorder 2, %s17
      // Predicated region
      $region57: #{tpu_custom_call.1} parent=5 // pred_check
        %p3944 = pneg %p3943
      $region58: #{tpu_custom_call.1} parent=5 // pred_check_branch
        %3946 = sbr.rel (%p3944) target = $region60
      $region59: #{tpu_custom_call.1} parent=5 // pred_region
        %s3947 = ssub.s32 %s17, 2
        // Predicated region
        $region61: #{tpu_custom_call.1} parent=59 // pred_check
          %p3948 = pneg %p219
        $region62: #{tpu_custom_call.1} parent=59 // pred_check_branch
          %3950 = sbr.rel (%p3948) target = $region64
        $region63: #{tpu_custom_call.1} parent=59 // pred_region
          %s3951 = sand.u32 %s204, 1
          %s3952 = scalar_lea.sflag [#allocation5], %s3951
          %s3953 = sand.u32 %s204, 1
          %s3954 = smul.addr %s3953, 256
          %s3955 = scalar_lea.vmem [#allocation4], %s3954
          %3956 = dma.done %s3952, 4096
        $region64: #{tpu_custom_call.1} parent=59 // pred_fallthru
          _
      $region60: #{tpu_custom_call.1} parent=5 // pred_fallthru
        _
    $region6: #{tpu_custom_call.1} parent=1 // loop_footer
      %s21 = sadd.s32 1, %s17
    $region7: #{tpu_custom_call.1} parent=1 // loop_footer_branch
      %16 = sbr.rel target = $region3
    $region8: #{tpu_custom_call.1} parent=1 // loop_exit
      _
    %3957 = vsyncpa [#allocation5], 1
    %s3958 = scalar_lea.sflag [#allocation5], 1
    %3959 = vsyncpa %s3958, 1

</llo_original>
